<compile_context>
chip_gen: v7x
topology: tpu7x:2x2x1
jax: 0.10.0
libtpu: 0.0.40
codegen_flags: <defaults>
</compile_context>

<pallas_src>
import functools
import math

import jax
import jax.numpy as jnp
from jax import lax
from jax.experimental import pallas as pl
from jax.experimental.pallas import tpu as pltpu


def _layer_norm(y, gamma, beta, eps):
    mu = jnp.mean(y, axis=-1, keepdims=True)
    var = jnp.mean(jnp.square(y - mu), axis=-1, keepdims=True)
    return (y - mu) * lax.rsqrt(var + eps) * gamma + beta


# -----------------------------------------------------------------------------
# Fused kernel: both cross-attention paths + both FFN blocks for one batch elem.
# -----------------------------------------------------------------------------
def _cmf_kernel(img_ref, lidar_ref,
                # path A: img->lidar attn (q=lidar, kv=img), norm1, ff_lidar, norm4
                wq_a, bq_a, wkv_a, bkv_a, wo_a, bo_a, g1, be1,
                w1_l, c1_l, w2_l, c2_l, g4, be4,
                # path B: lidar->img attn (q=img, kv=lidar_mid), norm2, ff_img, norm3
                wq_b, bq_b, wkv_b, bkv_b, wo_b, bo_b, g2, be2,
                w1_i, c1_i, w2_i, c2_i, g3, be3,
                img_out_ref, lidar_out_ref, *, num_heads, eps):
    img = img_ref[...]          # (Si, D) f32
    lidar = lidar_ref[...]      # (Sl, D) f32
    D = img.shape[-1]
    hd = D // num_heads
    scale = 1.0 / math.sqrt(hd)

    def mha(x, kv, wq_r, bq_r, wkv_r, bkv_r, wo_r, bo_r):
        # Fused, full-width projections; biases added once (not per head).
        qf = jnp.dot(x.astype(jnp.bfloat16), wq_r[...],
                     preferred_element_type=jnp.float32) + bq_r[...]
        q = qf.astype(jnp.bfloat16)                                   # (Sq, D)
        kvf = jnp.dot(kv.astype(jnp.bfloat16), wkv_r[...],
                      preferred_element_type=jnp.float32) + bkv_r[...]
        kvp = kvf.astype(jnp.bfloat16)                                # (Sk, 2D)
        k = kvp[:, :D]
        v = kvp[:, D:]
        # Per-head attention core (softmax in f32); num_heads is a small static
        # constant, so this unrolls.  Only the tiny hd-wide matmuls live here.
        ctx_heads = []
        for h in range(num_heads):
            lo, hi = h * hd, (h + 1) * hd
            s = lax.dot_general(q[:, lo:hi], k[:, lo:hi],
                                (((1,), (1,)), ((), ())),
                                preferred_element_type=jnp.float32) * scale
            s = s - jnp.max(s, axis=-1, keepdims=True)
            p = jnp.exp(s)
            p = p * pl.reciprocal(jnp.sum(p, axis=-1, keepdims=True), approx=True)
            ctx_heads.append(jnp.dot(p.astype(jnp.bfloat16), v[:, lo:hi],
                                     preferred_element_type=jnp.float32))
        ctx = jnp.concatenate(ctx_heads, axis=-1)                     # (Sq, D) f32
        # Single full-width output projection (128-deep contraction).
        return jnp.dot(ctx.astype(jnp.bfloat16), wo_r[...],
                       preferred_element_type=jnp.float32) + bo_r[...]

    def ffn(x, w1_r, c1_r, w2_r, c2_r):
        h1 = jnp.dot(x.astype(jnp.bfloat16), w1_r[...],
                     preferred_element_type=jnp.float32) + c1_r[...]
        h1 = jnp.maximum(h1, 0.0)
        return jnp.dot(h1.astype(jnp.bfloat16), w2_r[...],
                       preferred_element_type=jnp.float32) + c2_r[...]

    # Path A: lidar queries attend to img; lidar_mid stays in registers/VMEM.
    lidar_mid = _layer_norm(
        lidar + mha(lidar, img, wq_a, bq_a, wkv_a, bkv_a, wo_a, bo_a),
        g1[...], be1[...], eps)
    # Path B: img queries attend to lidar_mid (consumed directly, no HBM trip).
    img_mid = _layer_norm(
        img + mha(img, lidar_mid, wq_b, bq_b, wkv_b, bkv_b, wo_b, bo_b),
        g2[...], be2[...], eps)
    # FFN + residual + LayerNorm for both modalities.
    img_out_ref[...] = _layer_norm(
        img_mid + ffn(img_mid, w1_i, c1_i, w2_i, c2_i), g3[...], be3[...], eps)
    lidar_out_ref[...] = _layer_norm(
        lidar_mid + ffn(lidar_mid, w1_l, c1_l, w2_l, c2_l), g4[...], be4[...], eps)


# -----------------------------------------------------------------------------
# Host-side wrapper (single pallas_call)
# -----------------------------------------------------------------------------
def _const_spec(shape):
    nd = len(shape)
    return pl.BlockSpec(shape, lambda b, _nd=nd: (0,) * _nd)


def _seq_spec(S, D):
    return pl.BlockSpec((pl.Squeezed(), S, D), lambda b: (b, 0, 0))


def cross_modal_fusion(img_feats, lidar_feats, params, *, num_heads, eps=1e-5):
    B, Si, D = img_feats.shape
    Sl = lidar_feats.shape[1]
    assert lidar_feats.shape[0] == B and lidar_feats.shape[2] == D
    assert D % num_heads == 0, "embed_dim must be divisible by num_heads"

    def prep_attn(p):
        wq, bq, wk, bk, wv, bv, wo, bo = p
        wkv = jnp.concatenate([wk, wv], axis=1).astype(jnp.bfloat16)   # (D, 2D)
        bkv = jnp.concatenate([bk, bv], axis=1)                        # (1, 2D)
        return [wq.astype(jnp.bfloat16), bq, wkv, bkv,
                wo.astype(jnp.bfloat16), bo]

    def prep_ffn(p):
        w1, c1, w2, c2 = p
        return [w1.astype(jnp.bfloat16), c1, w2.astype(jnp.bfloat16), c2]

    path_a = (prep_attn(params["attn_i2l"]) + list(params["norm1"])
              + prep_ffn(params["ff_lidar"]) + list(params["norm4"]))
    path_b = (prep_attn(params["attn_l2i"]) + list(params["norm2"])
              + prep_ffn(params["ff_img"]) + list(params["norm3"]))
    operands = [img_feats, lidar_feats] + path_a + path_b

    in_specs = [_seq_spec(Si, D), _seq_spec(Sl, D)]
    in_specs += [_const_spec(op.shape) for op in (path_a + path_b)]

    kernel = functools.partial(_cmf_kernel, num_heads=num_heads, eps=eps)
    img_out, lidar_out = pl.pallas_call(
        kernel,
        out_shape=(jax.ShapeDtypeStruct((B, Si, D), jnp.float32),
                   jax.ShapeDtypeStruct((B, Sl, D), jnp.float32)),
        grid=(B,),
        in_specs=in_specs,
        out_specs=(_seq_spec(Si, D), _seq_spec(Sl, D)),
        compiler_params=pltpu.CompilerParams(
            dimension_semantics=("parallel",),
            vmem_limit_bytes=16 * 1024 * 1024),
    )(*operands)
    return img_out, lidar_out


# -----------------------------------------------------------------------------
# Pure-JAX f32 reference (mirrors the PyTorch forward, dropout = identity)
# -----------------------------------------------------------------------------
def _ref_mha(x, kv, wq, bq, wk, bk, wv, bv, wo, bo, num_heads):
    B, Sq, D = x.shape
    Sk = kv.shape[1]
    hd = D // num_heads
    q = (x @ wq + bq).reshape(B, Sq, num_heads, hd).transpose(0, 2, 1, 3)
    k = (kv @ wk + bk).reshape(B, Sk, num_heads, hd).transpose(0, 2, 1, 3)
    v = (kv @ wv + bv).reshape(B, Sk, num_heads, hd).transpose(0, 2, 1, 3)
    s = jnp.einsum("bhqd,bhkd->bhqk", q, k) / math.sqrt(hd)
    p = jax.nn.softmax(s, axis=-1)
    ctx = jnp.einsum("bhqk,bhkd->bhqd", p, v).transpose(0, 2, 1, 3).reshape(B, Sq, D)
    return ctx @ wo + bo


def _ref_ln(y, g, b, eps=1e-5):
    mu = jnp.mean(y, axis=-1, keepdims=True)
    var = jnp.mean((y - mu) ** 2, axis=-1, keepdims=True)
    return (y - mu) / jnp.sqrt(var + eps) * g + b


def cross_modal_fusion_ref(img, lidar, params, *, num_heads):
    a = _ref_mha(lidar, img, *params["attn_i2l"], num_heads)
    lidar = _ref_ln(lidar + a, *params["norm1"])
    a = _ref_mha(img, lidar, *params["attn_l2i"], num_heads)
    img = _ref_ln(img + a, *params["norm2"])
    w1, b1, w2, b2 = params["ff_img"]
    img = _ref_ln(img + (jnp.maximum(img @ w1 + b1, 0.0) @ w2 + b2), *params["norm3"])
    w1, b1, w2, b2 = params["ff_lidar"]
    lidar = _ref_ln(lidar + (jnp.maximum(lidar @ w1 + b1, 0.0) @ w2 + b2), *params["norm4"])
    return img, lidar


def init_params(key, D):
    keys = iter(jax.random.split(key, 40))

    def lin(n_in, n_out, s=0.05):
        return (s * jax.random.normal(next(keys), (n_in, n_out), jnp.float32),
                s * jax.random.normal(next(keys), (1, n_out), jnp.float32))

    def attn():
        wq, bq = lin(D, D); wk, bk = lin(D, D); wv, bv = lin(D, D); wo, bo = lin(D, D)
        return (wq, bq, wk, bk, wv, bv, wo, bo)

    def ff():
        w1, b1 = lin(D, 4 * D); w2, b2 = lin(4 * D, D)
        return (w1, b1, w2, b2)

    def ln():
        return (1.0 + 0.1 * jax.random.normal(next(keys), (1, D), jnp.float32),
                0.1 * jax.random.normal(next(keys), (1, D), jnp.float32))

    return {
        "attn_i2l": attn(), "attn_l2i": attn(),
        "ff_img": ff(), "ff_lidar": ff(),
        "norm1": ln(), "norm2": ln(), "norm3": ln(), "norm4": ln(),
    }


if __name__ == "__main__":
    # Small but lane-dense shapes: D multiple of 128, FFN hidden = 4*D = 512.
    B, S_IMG, S_LIDAR, D, HEADS = 2, 16, 8, 128, 4
    key = jax.random.PRNGKey(0)
    k_img, k_lid, k_p = jax.random.split(key, 3)
    img_feats = jax.random.normal(k_img, (B, S_IMG, D), jnp.float32)
    lidar_feats = jax.random.normal(k_lid, (B, S_LIDAR, D), jnp.float32)
    params = init_params(k_p, D)

    out_img, out_lidar = cross_modal_fusion(img_feats, lidar_feats, params,
                                            num_heads=HEADS)
    out_img = jax.block_until_ready(out_img)
    out_lidar = jax.block_until_ready(out_lidar)

    ref_img, ref_lidar = cross_modal_fusion_ref(img_feats, lidar_feats, params,
                                                num_heads=HEADS)
    # bf16 MXU operands + approx reciprocal vs. pure-f32 reference -> relaxed tol.
    assert jnp.allclose(out_img, ref_img, rtol=3e-2, atol=3e-2), "img mismatch"
    assert jnp.allclose(out_lidar, ref_lidar, rtol=3e-2, atol=3e-2), "lidar mismatch"
    print("KERNEL_OK")
</pallas_src>

<mosaic_0001>
module attributes {stable_mosaic.version = 11 : i64} {
  func.func @_cmf_kernel(%arg0: i32, %arg1: memref<1x16x128xf32, #tpu.memory_space<vmem>>, %arg2: memref<1x8x128xf32, #tpu.memory_space<vmem>>, %arg3: memref<128x128xbf16, #tpu.memory_space<vmem>>, %arg4: memref<1x128xf32, #tpu.memory_space<vmem>>, %arg5: memref<128x256xbf16, #tpu.memory_space<vmem>>, %arg6: memref<1x256xf32, #tpu.memory_space<vmem>>, %arg7: memref<128x128xbf16, #tpu.memory_space<vmem>>, %arg8: memref<1x128xf32, #tpu.memory_space<vmem>>, %arg9: memref<1x128xf32, #tpu.memory_space<vmem>>, %arg10: memref<1x128xf32, #tpu.memory_space<vmem>>, %arg11: memref<128x512xbf16, #tpu.memory_space<vmem>>, %arg12: memref<1x512xf32, #tpu.memory_space<vmem>>, %arg13: memref<512x128xbf16, #tpu.memory_space<vmem>>, %arg14: memref<1x128xf32, #tpu.memory_space<vmem>>, %arg15: memref<1x128xf32, #tpu.memory_space<vmem>>, %arg16: memref<1x128xf32, #tpu.memory_space<vmem>>, %arg17: memref<128x128xbf16, #tpu.memory_space<vmem>>, %arg18: memref<1x128xf32, #tpu.memory_space<vmem>>, %arg19: memref<128x256xbf16, #tpu.memory_space<vmem>>, %arg20: memref<1x256xf32, #tpu.memory_space<vmem>>, %arg21: memref<128x128xbf16, #tpu.memory_space<vmem>>, %arg22: memref<1x128xf32, #tpu.memory_space<vmem>>, %arg23: memref<1x128xf32, #tpu.memory_space<vmem>>, %arg24: memref<1x128xf32, #tpu.memory_space<vmem>>, %arg25: memref<128x512xbf16, #tpu.memory_space<vmem>>, %arg26: memref<1x512xf32, #tpu.memory_space<vmem>>, %arg27: memref<512x128xbf16, #tpu.memory_space<vmem>>, %arg28: memref<1x128xf32, #tpu.memory_space<vmem>>, %arg29: memref<1x128xf32, #tpu.memory_space<vmem>>, %arg30: memref<1x128xf32, #tpu.memory_space<vmem>>, %arg31: memref<1x16x128xf32, #tpu.memory_space<vmem>>, %arg32: memref<1x8x128xf32, #tpu.memory_space<vmem>>) attributes {dimension_semantics = [#tpu.dimension_semantics<parallel>], iteration_bounds = array<i64: 2>, scalar_prefetch = 0 : i64, scratch_operands = 0 : i64, tpu.core_type = #tpu.core_type<tc>, window_params = [{transform_indices = @transform_0, window_bounds = array<i64: 1, 16, 128>}, {transform_indices = @transform_1, window_bounds = array<i64: 1, 8, 128>}, {pipeline_mode = #tpu.pipeline_mode<synchronous>, transform_indices = @transform_2, window_bounds = array<i64: 128, 128>}, {pipeline_mode = #tpu.pipeline_mode<synchronous>, transform_indices = @transform_3, window_bounds = array<i64: 1, 128>}, {pipeline_mode = #tpu.pipeline_mode<synchronous>, transform_indices = @transform_4, window_bounds = array<i64: 128, 256>}, {pipeline_mode = #tpu.pipeline_mode<synchronous>, transform_indices = @transform_5, window_bounds = array<i64: 1, 256>}, {pipeline_mode = #tpu.pipeline_mode<synchronous>, transform_indices = @transform_6, window_bounds = array<i64: 128, 128>}, {pipeline_mode = #tpu.pipeline_mode<synchronous>, transform_indices = @transform_7, window_bounds = array<i64: 1, 128>}, {pipeline_mode = #tpu.pipeline_mode<synchronous>, transform_indices = @transform_8, window_bounds = array<i64: 1, 128>}, {pipeline_mode = #tpu.pipeline_mode<synchronous>, transform_indices = @transform_9, window_bounds = array<i64: 1, 128>}, {pipeline_mode = #tpu.pipeline_mode<synchronous>, transform_indices = @transform_10, window_bounds = array<i64: 128, 512>}, {pipeline_mode = #tpu.pipeline_mode<synchronous>, transform_indices = @transform_11, window_bounds = array<i64: 1, 512>}, {pipeline_mode = #tpu.pipeline_mode<synchronous>, transform_indices = @transform_12, window_bounds = array<i64: 512, 128>}, {pipeline_mode = #tpu.pipeline_mode<synchronous>, transform_indices = @transform_13, window_bounds = array<i64: 1, 128>}, {pipeline_mode = #tpu.pipeline_mode<synchronous>, transform_indices = @transform_14, window_bounds = array<i64: 1, 128>}, {pipeline_mode = #tpu.pipeline_mode<synchronous>, transform_indices = @transform_15, window_bounds = array<i64: 1, 128>}, {pipeline_mode = #tpu.pipeline_mode<synchronous>, transform_indices = @transform_16, window_bounds = array<i64: 128, 128>}, {pipeline_mode = #tpu.pipeline_mode<synchronous>, transform_indices = @transform_17, window_bounds = array<i64: 1, 128>}, {pipeline_mode = #tpu.pipeline_mode<synchronous>, transform_indices = @transform_18, window_bounds = array<i64: 128, 256>}, {pipeline_mode = #tpu.pipeline_mode<synchronous>, transform_indices = @transform_19, window_bounds = array<i64: 1, 256>}, {pipeline_mode = #tpu.pipeline_mode<synchronous>, transform_indices = @transform_20, window_bounds = array<i64: 128, 128>}, {pipeline_mode = #tpu.pipeline_mode<synchronous>, transform_indices = @transform_21, window_bounds = array<i64: 1, 128>}, {pipeline_mode = #tpu.pipeline_mode<synchronous>, transform_indices = @transform_22, window_bounds = array<i64: 1, 128>}, {pipeline_mode = #tpu.pipeline_mode<synchronous>, transform_indices = @transform_23, window_bounds = array<i64: 1, 128>}, {pipeline_mode = #tpu.pipeline_mode<synchronous>, transform_indices = @transform_24, window_bounds = array<i64: 128, 512>}, {pipeline_mode = #tpu.pipeline_mode<synchronous>, transform_indices = @transform_25, window_bounds = array<i64: 1, 512>}, {pipeline_mode = #tpu.pipeline_mode<synchronous>, transform_indices = @transform_26, window_bounds = array<i64: 512, 128>}, {pipeline_mode = #tpu.pipeline_mode<synchronous>, transform_indices = @transform_27, window_bounds = array<i64: 1, 128>}, {pipeline_mode = #tpu.pipeline_mode<synchronous>, transform_indices = @transform_28, window_bounds = array<i64: 1, 128>}, {pipeline_mode = #tpu.pipeline_mode<synchronous>, transform_indices = @transform_29, window_bounds = array<i64: 1, 128>}, {transform_indices = @transform_30, window_bounds = array<i64: 1, 16, 128>}, {transform_indices = @transform_31, window_bounds = array<i64: 1, 8, 128>}]} {
    %c0 = arith.constant 0 : index
    %c0_0 = arith.constant 0 : index
    %c0_1 = arith.constant 0 : index
    %0 = vector.load %arg1[%c0, %c0_0, %c0_1] : memref<1x16x128xf32, #tpu.memory_space<vmem>>, vector<1x16x128xf32>
    %1 = vector.shape_cast %0 : vector<1x16x128xf32> to vector<16x128xf32>
    %c0_2 = arith.constant 0 : index
    %c0_3 = arith.constant 0 : index
    %c0_4 = arith.constant 0 : index
    %2 = vector.load %arg2[%c0_2, %c0_3, %c0_4] : memref<1x8x128xf32, #tpu.memory_space<vmem>>, vector<1x8x128xf32>
    %3 = vector.shape_cast %2 : vector<1x8x128xf32> to vector<8x128xf32>
    %4 = arith.truncf %3 : vector<8x128xf32> to vector<8x128xbf16>
    %c0_5 = arith.constant 0 : index
    %c0_6 = arith.constant 0 : index
    %5 = vector.load %arg3[%c0_5, %c0_6] : memref<128x128xbf16, #tpu.memory_space<vmem>>, vector<128x128xbf16>
    %cst = arith.constant dense<0.000000e+00> : vector<8x128xf32>
    %6 = tpu.matmul %4, %5, %cst {dimension_numbers = #tpu.dot_dimension_numbers<[1], [0], [0], [1], [0, 0, 1, 1], [], []>} : vector<8x128xbf16>, vector<128x128xbf16>, vector<8x128xf32> -> vector<8x128xf32>
    %c0_7 = arith.constant 0 : index
    %c0_8 = arith.constant 0 : index
    %7 = vector.load %arg4[%c0_7, %c0_8] : memref<1x128xf32, #tpu.memory_space<vmem>>, vector<1x128xf32>
    %8 = vector.broadcast %7 : vector<1x128xf32> to vector<8x128xf32>
    %9 = arith.addf %6, %8 : vector<8x128xf32>
    %10 = arith.truncf %9 : vector<8x128xf32> to vector<8x128xbf16>
    %11 = arith.truncf %1 : vector<16x128xf32> to vector<16x128xbf16>
    %c0_9 = arith.constant 0 : index
    %c0_10 = arith.constant 0 : index
    %12 = vector.load %arg5[%c0_9, %c0_10] : memref<128x256xbf16, #tpu.memory_space<vmem>>, vector<128x256xbf16>
    %cst_11 = arith.constant dense<0.000000e+00> : vector<16x256xf32>
    %13 = tpu.matmul %11, %12, %cst_11 {dimension_numbers = #tpu.dot_dimension_numbers<[1], [0], [0], [1], [0, 0, 1, 1], [], []>} : vector<16x128xbf16>, vector<128x256xbf16>, vector<16x256xf32> -> vector<16x256xf32>
    %c0_12 = arith.constant 0 : index
    %c0_13 = arith.constant 0 : index
    %14 = vector.load %arg6[%c0_12, %c0_13] : memref<1x256xf32, #tpu.memory_space<vmem>>, vector<1x256xf32>
    %15 = vector.broadcast %14 : vector<1x256xf32> to vector<16x256xf32>
    %16 = arith.addf %13, %15 : vector<16x256xf32>
    %17 = arith.truncf %16 : vector<16x256xf32> to vector<16x256xbf16>
    %18 = vector.extract_strided_slice %17 {offsets = [0, 0], sizes = [16, 128], strides = [1, 1]} : vector<16x256xbf16> to vector<16x128xbf16>
    %19 = vector.extract_strided_slice %17 {offsets = [0, 128], sizes = [16, 128], strides = [1, 1]} : vector<16x256xbf16> to vector<16x128xbf16>
    %20 = vector.extract_strided_slice %10 {offsets = [0, 0], sizes = [8, 32], strides = [1, 1]} : vector<8x128xbf16> to vector<8x32xbf16>
    %21 = vector.extract_strided_slice %18 {offsets = [0, 0], sizes = [16, 32], strides = [1, 1]} : vector<16x128xbf16> to vector<16x32xbf16>
    %cst_14 = arith.constant dense<0.000000e+00> : vector<8x16xf32>
    %22 = tpu.matmul %20, %21, %cst_14 {dimension_numbers = #tpu.dot_dimension_numbers<[1], [1], [0], [0], [0, 0, 1, 0], [], []>} : vector<8x32xbf16>, vector<16x32xbf16>, vector<8x16xf32> -> vector<8x16xf32>
    %cst_15 = arith.constant 0.176776692 : f32
    %23 = vector.broadcast %cst_15 : f32 to vector<8x16xf32>
    %24 = arith.mulf %22, %23 : vector<8x16xf32>
    %cst_16 = arith.constant dense<0xFF800000> : vector<8xf32>
    %25 = vector.multi_reduction <maximumf>, %24, %cst_16 [1] : vector<8x16xf32> to vector<8xf32>
    %26 = vector.shape_cast %25 : vector<8xf32> to vector<8x1xf32>
    %27 = vector.broadcast %26 : vector<8x1xf32> to vector<8x16xf32>
    %28 = arith.subf %24, %27 : vector<8x16xf32>
    %29 = math.exp %28 : vector<8x16xf32>
    %cst_17 = arith.constant dense<0.000000e+00> : vector<8xf32>
    %30 = vector.multi_reduction <add>, %29, %cst_17 [1] : vector<8x16xf32> to vector<8xf32>
    %31 = vector.shape_cast %30 : vector<8xf32> to vector<8x1xf32>
    %32 = tpu.reciprocal %31 {approx = true} : vector<8x1xf32> -> vector<8x1xf32>
    %33 = vector.broadcast %32 : vector<8x1xf32> to vector<8x16xf32>
    %34 = arith.mulf %29, %33 : vector<8x16xf32>
    %35 = arith.truncf %34 : vector<8x16xf32> to vector<8x16xbf16>
    %36 = vector.extract_strided_slice %19 {offsets = [0, 0], sizes = [16, 32], strides = [1, 1]} : vector<16x128xbf16> to vector<16x32xbf16>
    %cst_18 = arith.constant dense<0.000000e+00> : vector<8x32xf32>
    %37 = tpu.matmul %35, %36, %cst_18 {dimension_numbers = #tpu.dot_dimension_numbers<[1], [0], [0], [1], [0, 0, 1, 1], [], []>} : vector<8x16xbf16>, vector<16x32xbf16>, vector<8x32xf32> -> vector<8x32xf32>
    %38 = vector.extract_strided_slice %10 {offsets = [0, 32], sizes = [8, 32], strides = [1, 1]} : vector<8x128xbf16> to vector<8x32xbf16>
    %39 = vector.extract_strided_slice %18 {offsets = [0, 32], sizes = [16, 32], strides = [1, 1]} : vector<16x128xbf16> to vector<16x32xbf16>
    %cst_19 = arith.constant dense<0.000000e+00> : vector<8x16xf32>
    %40 = tpu.matmul %38, %39, %cst_19 {dimension_numbers = #tpu.dot_dimension_numbers<[1], [1], [0], [0], [0, 0, 1, 0], [], []>} : vector<8x32xbf16>, vector<16x32xbf16>, vector<8x16xf32> -> vector<8x16xf32>
    %cst_20 = arith.constant 0.176776692 : f32
    %41 = vector.broadcast %cst_20 : f32 to vector<8x16xf32>
    %42 = arith.mulf %40, %41 : vector<8x16xf32>
    %cst_21 = arith.constant dense<0xFF800000> : vector<8xf32>
    %43 = vector.multi_reduction <maximumf>, %42, %cst_21 [1] : vector<8x16xf32> to vector<8xf32>
    %44 = vector.shape_cast %43 : vector<8xf32> to vector<8x1xf32>
    %45 = vector.broadcast %44 : vector<8x1xf32> to vector<8x16xf32>
    %46 = arith.subf %42, %45 : vector<8x16xf32>
    %47 = math.exp %46 : vector<8x16xf32>
    %cst_22 = arith.constant dense<0.000000e+00> : vector<8xf32>
    %48 = vector.multi_reduction <add>, %47, %cst_22 [1] : vector<8x16xf32> to vector<8xf32>
    %49 = vector.shape_cast %48 : vector<8xf32> to vector<8x1xf32>
    %50 = tpu.reciprocal %49 {approx = true} : vector<8x1xf32> -> vector<8x1xf32>
    %51 = vector.broadcast %50 : vector<8x1xf32> to vector<8x16xf32>
    %52 = arith.mulf %47, %51 : vector<8x16xf32>
    %53 = arith.truncf %52 : vector<8x16xf32> to vector<8x16xbf16>
    %54 = vector.extract_strided_slice %19 {offsets = [0, 32], sizes = [16, 32], strides = [1, 1]} : vector<16x128xbf16> to vector<16x32xbf16>
    %cst_23 = arith.constant dense<0.000000e+00> : vector<8x32xf32>
    %55 = tpu.matmul %53, %54, %cst_23 {dimension_numbers = #tpu.dot_dimension_numbers<[1], [0], [0], [1], [0, 0, 1, 1], [], []>} : vector<8x16xbf16>, vector<16x32xbf16>, vector<8x32xf32> -> vector<8x32xf32>
    %56 = vector.extract_strided_slice %10 {offsets = [0, 64], sizes = [8, 32], strides = [1, 1]} : vector<8x128xbf16> to vector<8x32xbf16>
    %57 = vector.extract_strided_slice %18 {offsets = [0, 64], sizes = [16, 32], strides = [1, 1]} : vector<16x128xbf16> to vector<16x32xbf16>
    %cst_24 = arith.constant dense<0.000000e+00> : vector<8x16xf32>
    %58 = tpu.matmul %56, %57, %cst_24 {dimension_numbers = #tpu.dot_dimension_numbers<[1], [1], [0], [0], [0, 0, 1, 0], [], []>} : vector<8x32xbf16>, vector<16x32xbf16>, vector<8x16xf32> -> vector<8x16xf32>
    %cst_25 = arith.constant 0.176776692 : f32
    %59 = vector.broadcast %cst_25 : f32 to vector<8x16xf32>
    %60 = arith.mulf %58, %59 : vector<8x16xf32>
    %cst_26 = arith.constant dense<0xFF800000> : vector<8xf32>
    %61 = vector.multi_reduction <maximumf>, %60, %cst_26 [1] : vector<8x16xf32> to vector<8xf32>
    %62 = vector.shape_cast %61 : vector<8xf32> to vector<8x1xf32>
    %63 = vector.broadcast %62 : vector<8x1xf32> to vector<8x16xf32>
    %64 = arith.subf %60, %63 : vector<8x16xf32>
    %65 = math.exp %64 : vector<8x16xf32>
    %cst_27 = arith.constant dense<0.000000e+00> : vector<8xf32>
    %66 = vector.multi_reduction <add>, %65, %cst_27 [1] : vector<8x16xf32> to vector<8xf32>
    %67 = vector.shape_cast %66 : vector<8xf32> to vector<8x1xf32>
    %68 = tpu.reciprocal %67 {approx = true} : vector<8x1xf32> -> vector<8x1xf32>
    %69 = vector.broadcast %68 : vector<8x1xf32> to vector<8x16xf32>
    %70 = arith.mulf %65, %69 : vector<8x16xf32>
    %71 = arith.truncf %70 : vector<8x16xf32> to vector<8x16xbf16>
    %72 = vector.extract_strided_slice %19 {offsets = [0, 64], sizes = [16, 32], strides = [1, 1]} : vector<16x128xbf16> to vector<16x32xbf16>
    %cst_28 = arith.constant dense<0.000000e+00> : vector<8x32xf32>
    %73 = tpu.matmul %71, %72, %cst_28 {dimension_numbers = #tpu.dot_dimension_numbers<[1], [0], [0], [1], [0, 0, 1, 1], [], []>} : vector<8x16xbf16>, vector<16x32xbf16>, vector<8x32xf32> -> vector<8x32xf32>
    %74 = vector.extract_strided_slice %10 {offsets = [0, 96], sizes = [8, 32], strides = [1, 1]} : vector<8x128xbf16> to vector<8x32xbf16>
    %75 = vector.extract_strided_slice %18 {offsets = [0, 96], sizes = [16, 32], strides = [1, 1]} : vector<16x128xbf16> to vector<16x32xbf16>
    %cst_29 = arith.constant dense<0.000000e+00> : vector<8x16xf32>
    %76 = tpu.matmul %74, %75, %cst_29 {dimension_numbers = #tpu.dot_dimension_numbers<[1], [1], [0], [0], [0, 0, 1, 0], [], []>} : vector<8x32xbf16>, vector<16x32xbf16>, vector<8x16xf32> -> vector<8x16xf32>
    %cst_30 = arith.constant 0.176776692 : f32
    %77 = vector.broadcast %cst_30 : f32 to vector<8x16xf32>
    %78 = arith.mulf %76, %77 : vector<8x16xf32>
    %cst_31 = arith.constant dense<0xFF800000> : vector<8xf32>
    %79 = vector.multi_reduction <maximumf>, %78, %cst_31 [1] : vector<8x16xf32> to vector<8xf32>
    %80 = vector.shape_cast %79 : vector<8xf32> to vector<8x1xf32>
    %81 = vector.broadcast %80 : vector<8x1xf32> to vector<8x16xf32>
    %82 = arith.subf %78, %81 : vector<8x16xf32>
    %83 = math.exp %82 : vector<8x16xf32>
    %cst_32 = arith.constant dense<0.000000e+00> : vector<8xf32>
    %84 = vector.multi_reduction <add>, %83, %cst_32 [1] : vector<8x16xf32> to vector<8xf32>
    %85 = vector.shape_cast %84 : vector<8xf32> to vector<8x1xf32>
    %86 = tpu.reciprocal %85 {approx = true} : vector<8x1xf32> -> vector<8x1xf32>
    %87 = vector.broadcast %86 : vector<8x1xf32> to vector<8x16xf32>
    %88 = arith.mulf %83, %87 : vector<8x16xf32>
    %89 = arith.truncf %88 : vector<8x16xf32> to vector<8x16xbf16>
    %90 = vector.extract_strided_slice %19 {offsets = [0, 96], sizes = [16, 32], strides = [1, 1]} : vector<16x128xbf16> to vector<16x32xbf16>
    %cst_33 = arith.constant dense<0.000000e+00> : vector<8x32xf32>
    %91 = tpu.matmul %89, %90, %cst_33 {dimension_numbers = #tpu.dot_dimension_numbers<[1], [0], [0], [1], [0, 0, 1, 1], [], []>} : vector<8x16xbf16>, vector<16x32xbf16>, vector<8x32xf32> -> vector<8x32xf32>
    %92 = tpu.concatenate %37, %55, %73, %91 in 1 : vector<8x32xf32>, vector<8x32xf32>, vector<8x32xf32>, vector<8x32xf32> -> vector<8x128xf32>
    %93 = arith.truncf %92 : vector<8x128xf32> to vector<8x128xbf16>
    %c0_34 = arith.constant 0 : index
    %c0_35 = arith.constant 0 : index
    %94 = vector.load %arg7[%c0_34, %c0_35] : memref<128x128xbf16, #tpu.memory_space<vmem>>, vector<128x128xbf16>
    %cst_36 = arith.constant dense<0.000000e+00> : vector<8x128xf32>
    %95 = tpu.matmul %93, %94, %cst_36 {dimension_numbers = #tpu.dot_dimension_numbers<[1], [0], [0], [1], [0, 0, 1, 1], [], []>} : vector<8x128xbf16>, vector<128x128xbf16>, vector<8x128xf32> -> vector<8x128xf32>
    %c0_37 = arith.constant 0 : index
    %c0_38 = arith.constant 0 : index
    %96 = vector.load %arg8[%c0_37, %c0_38] : memref<1x128xf32, #tpu.memory_space<vmem>>, vector<1x128xf32>
    %97 = vector.broadcast %96 : vector<1x128xf32> to vector<8x128xf32>
    %98 = arith.addf %95, %97 : vector<8x128xf32>
    %99 = arith.addf %3, %98 : vector<8x128xf32>
    %c0_39 = arith.constant 0 : index
    %c0_40 = arith.constant 0 : index
    %100 = vector.load %arg9[%c0_39, %c0_40] : memref<1x128xf32, #tpu.memory_space<vmem>>, vector<1x128xf32>
    %c0_41 = arith.constant 0 : index
    %c0_42 = arith.constant 0 : index
    %101 = vector.load %arg10[%c0_41, %c0_42] : memref<1x128xf32, #tpu.memory_space<vmem>>, vector<1x128xf32>
    %cst_43 = arith.constant dense<0.000000e+00> : vector<8xf32>
    %102 = vector.multi_reduction <add>, %99, %cst_43 [1] : vector<8x128xf32> to vector<8xf32>
    %103 = vector.shape_cast %102 : vector<8xf32> to vector<8x1xf32>
    %cst_44 = arith.constant 1.280000e+02 : f32
    %104 = vector.broadcast %cst_44 : f32 to vector<8x1xf32>
    %105 = arith.divf %103, %104 : vector<8x1xf32>
    %106 = vector.broadcast %105 : vector<8x1xf32> to vector<8x128xf32>
    %107 = arith.subf %99, %106 : vector<8x128xf32>
    %108 = arith.mulf %107, %107 : vector<8x128xf32>
    %cst_45 = arith.constant dense<0.000000e+00> : vector<8xf32>
    %109 = vector.multi_reduction <add>, %108, %cst_45 [1] : vector<8x128xf32> to vector<8xf32>
    %110 = vector.shape_cast %109 : vector<8xf32> to vector<8x1xf32>
    %cst_46 = arith.constant 1.280000e+02 : f32
    %111 = vector.broadcast %cst_46 : f32 to vector<8x1xf32>
    %112 = arith.divf %110, %111 : vector<8x1xf32>
    %113 = vector.broadcast %105 : vector<8x1xf32> to vector<8x128xf32>
    %114 = arith.subf %99, %113 : vector<8x128xf32>
    %cst_47 = arith.constant 9.99999974E-6 : f32
    %115 = vector.broadcast %cst_47 : f32 to vector<8x1xf32>
    %116 = arith.addf %112, %115 : vector<8x1xf32>
    %117 = math.rsqrt %116 : vector<8x1xf32>
    %118 = vector.broadcast %117 : vector<8x1xf32> to vector<8x128xf32>
    %119 = arith.mulf %114, %118 : vector<8x128xf32>
    %120 = vector.broadcast %100 : vector<1x128xf32> to vector<8x128xf32>
    %121 = arith.mulf %119, %120 : vector<8x128xf32>
    %122 = vector.broadcast %101 : vector<1x128xf32> to vector<8x128xf32>
    %123 = arith.addf %121, %122 : vector<8x128xf32>
    %124 = arith.truncf %1 : vector<16x128xf32> to vector<16x128xbf16>
    %c0_48 = arith.constant 0 : index
    %c0_49 = arith.constant 0 : index
    %125 = vector.load %arg17[%c0_48, %c0_49] : memref<128x128xbf16, #tpu.memory_space<vmem>>, vector<128x128xbf16>
    %cst_50 = arith.constant dense<0.000000e+00> : vector<16x128xf32>
    %126 = tpu.matmul %124, %125, %cst_50 {dimension_numbers = #tpu.dot_dimension_numbers<[1], [0], [0], [1], [0, 0, 1, 1], [], []>} : vector<16x128xbf16>, vector<128x128xbf16>, vector<16x128xf32> -> vector<16x128xf32>
    %c0_51 = arith.constant 0 : index
    %c0_52 = arith.constant 0 : index
    %127 = vector.load %arg18[%c0_51, %c0_52] : memref<1x128xf32, #tpu.memory_space<vmem>>, vector<1x128xf32>
    %128 = vector.broadcast %127 : vector<1x128xf32> to vector<16x128xf32>
    %129 = arith.addf %126, %128 : vector<16x128xf32>
    %130 = arith.truncf %129 : vector<16x128xf32> to vector<16x128xbf16>
    %131 = arith.truncf %123 : vector<8x128xf32> to vector<8x128xbf16>
    %c0_53 = arith.constant 0 : index
    %c0_54 = arith.constant 0 : index
    %132 = vector.load %arg19[%c0_53, %c0_54] : memref<128x256xbf16, #tpu.memory_space<vmem>>, vector<128x256xbf16>
    %cst_55 = arith.constant dense<0.000000e+00> : vector<8x256xf32>
    %133 = tpu.matmul %131, %132, %cst_55 {dimension_numbers = #tpu.dot_dimension_numbers<[1], [0], [0], [1], [0, 0, 1, 1], [], []>} : vector<8x128xbf16>, vector<128x256xbf16>, vector<8x256xf32> -> vector<8x256xf32>
    %c0_56 = arith.constant 0 : index
    %c0_57 = arith.constant 0 : index
    %134 = vector.load %arg20[%c0_56, %c0_57] : memref<1x256xf32, #tpu.memory_space<vmem>>, vector<1x256xf32>
    %135 = vector.broadcast %134 : vector<1x256xf32> to vector<8x256xf32>
    %136 = arith.addf %133, %135 : vector<8x256xf32>
    %137 = arith.truncf %136 : vector<8x256xf32> to vector<8x256xbf16>
    %138 = vector.extract_strided_slice %137 {offsets = [0, 0], sizes = [8, 128], strides = [1, 1]} : vector<8x256xbf16> to vector<8x128xbf16>
    %139 = vector.extract_strided_slice %137 {offsets = [0, 128], sizes = [8, 128], strides = [1, 1]} : vector<8x256xbf16> to vector<8x128xbf16>
    %140 = vector.extract_strided_slice %130 {offsets = [0, 0], sizes = [16, 32], strides = [1, 1]} : vector<16x128xbf16> to vector<16x32xbf16>
    %141 = vector.extract_strided_slice %138 {offsets = [0, 0], sizes = [8, 32], strides = [1, 1]} : vector<8x128xbf16> to vector<8x32xbf16>
    %cst_58 = arith.constant dense<0.000000e+00> : vector<16x8xf32>
    %142 = tpu.matmul %140, %141, %cst_58 {dimension_numbers = #tpu.dot_dimension_numbers<[1], [1], [0], [0], [0, 0, 1, 0], [], []>} : vector<16x32xbf16>, vector<8x32xbf16>, vector<16x8xf32> -> vector<16x8xf32>
    %cst_59 = arith.constant 0.176776692 : f32
    %143 = vector.broadcast %cst_59 : f32 to vector<16x8xf32>
    %144 = arith.mulf %142, %143 : vector<16x8xf32>
    %cst_60 = arith.constant dense<0xFF800000> : vector<16xf32>
    %145 = vector.multi_reduction <maximumf>, %144, %cst_60 [1] : vector<16x8xf32> to vector<16xf32>
    %146 = vector.shape_cast %145 : vector<16xf32> to vector<16x1xf32>
    %147 = vector.broadcast %146 : vector<16x1xf32> to vector<16x8xf32>
    %148 = arith.subf %144, %147 : vector<16x8xf32>
    %149 = math.exp %148 : vector<16x8xf32>
    %cst_61 = arith.constant dense<0.000000e+00> : vector<16xf32>
    %150 = vector.multi_reduction <add>, %149, %cst_61 [1] : vector<16x8xf32> to vector<16xf32>
    %151 = vector.shape_cast %150 : vector<16xf32> to vector<16x1xf32>
    %152 = tpu.reciprocal %151 {approx = true} : vector<16x1xf32> -> vector<16x1xf32>
    %153 = vector.broadcast %152 : vector<16x1xf32> to vector<16x8xf32>
    %154 = arith.mulf %149, %153 : vector<16x8xf32>
    %155 = arith.truncf %154 : vector<16x8xf32> to vector<16x8xbf16>
    %156 = vector.extract_strided_slice %139 {offsets = [0, 0], sizes = [8, 32], strides = [1, 1]} : vector<8x128xbf16> to vector<8x32xbf16>
    %cst_62 = arith.constant dense<0.000000e+00> : vector<16x32xf32>
    %157 = tpu.matmul %155, %156, %cst_62 {dimension_numbers = #tpu.dot_dimension_numbers<[1], [0], [0], [1], [0, 0, 1, 1], [], []>} : vector<16x8xbf16>, vector<8x32xbf16>, vector<16x32xf32> -> vector<16x32xf32>
    %158 = vector.extract_strided_slice %130 {offsets = [0, 32], sizes = [16, 32], strides = [1, 1]} : vector<16x128xbf16> to vector<16x32xbf16>
    %159 = vector.extract_strided_slice %138 {offsets = [0, 32], sizes = [8, 32], strides = [1, 1]} : vector<8x128xbf16> to vector<8x32xbf16>
    %cst_63 = arith.constant dense<0.000000e+00> : vector<16x8xf32>
    %160 = tpu.matmul %158, %159, %cst_63 {dimension_numbers = #tpu.dot_dimension_numbers<[1], [1], [0], [0], [0, 0, 1, 0], [], []>} : vector<16x32xbf16>, vector<8x32xbf16>, vector<16x8xf32> -> vector<16x8xf32>
    %cst_64 = arith.constant 0.176776692 : f32
    %161 = vector.broadcast %cst_64 : f32 to vector<16x8xf32>
    %162 = arith.mulf %160, %161 : vector<16x8xf32>
    %cst_65 = arith.constant dense<0xFF800000> : vector<16xf32>
    %163 = vector.multi_reduction <maximumf>, %162, %cst_65 [1] : vector<16x8xf32> to vector<16xf32>
    %164 = vector.shape_cast %163 : vector<16xf32> to vector<16x1xf32>
    %165 = vector.broadcast %164 : vector<16x1xf32> to vector<16x8xf32>
    %166 = arith.subf %162, %165 : vector<16x8xf32>
    %167 = math.exp %166 : vector<16x8xf32>
    %cst_66 = arith.constant dense<0.000000e+00> : vector<16xf32>
    %168 = vector.multi_reduction <add>, %167, %cst_66 [1] : vector<16x8xf32> to vector<16xf32>
    %169 = vector.shape_cast %168 : vector<16xf32> to vector<16x1xf32>
    %170 = tpu.reciprocal %169 {approx = true} : vector<16x1xf32> -> vector<16x1xf32>
    %171 = vector.broadcast %170 : vector<16x1xf32> to vector<16x8xf32>
    %172 = arith.mulf %167, %171 : vector<16x8xf32>
    %173 = arith.truncf %172 : vector<16x8xf32> to vector<16x8xbf16>
    %174 = vector.extract_strided_slice %139 {offsets = [0, 32], sizes = [8, 32], strides = [1, 1]} : vector<8x128xbf16> to vector<8x32xbf16>
    %cst_67 = arith.constant dense<0.000000e+00> : vector<16x32xf32>
    %175 = tpu.matmul %173, %174, %cst_67 {dimension_numbers = #tpu.dot_dimension_numbers<[1], [0], [0], [1], [0, 0, 1, 1], [], []>} : vector<16x8xbf16>, vector<8x32xbf16>, vector<16x32xf32> -> vector<16x32xf32>
    %176 = vector.extract_strided_slice %130 {offsets = [0, 64], sizes = [16, 32], strides = [1, 1]} : vector<16x128xbf16> to vector<16x32xbf16>
    %177 = vector.extract_strided_slice %138 {offsets = [0, 64], sizes = [8, 32], strides = [1, 1]} : vector<8x128xbf16> to vector<8x32xbf16>
    %cst_68 = arith.constant dense<0.000000e+00> : vector<16x8xf32>
    %178 = tpu.matmul %176, %177, %cst_68 {dimension_numbers = #tpu.dot_dimension_numbers<[1], [1], [0], [0], [0, 0, 1, 0], [], []>} : vector<16x32xbf16>, vector<8x32xbf16>, vector<16x8xf32> -> vector<16x8xf32>
    %cst_69 = arith.constant 0.176776692 : f32
    %179 = vector.broadcast %cst_69 : f32 to vector<16x8xf32>
    %180 = arith.mulf %178, %179 : vector<16x8xf32>
    %cst_70 = arith.constant dense<0xFF800000> : vector<16xf32>
    %181 = vector.multi_reduction <maximumf>, %180, %cst_70 [1] : vector<16x8xf32> to vector<16xf32>
    %182 = vector.shape_cast %181 : vector<16xf32> to vector<16x1xf32>
    %183 = vector.broadcast %182 : vector<16x1xf32> to vector<16x8xf32>
    %184 = arith.subf %180, %183 : vector<16x8xf32>
    %185 = math.exp %184 : vector<16x8xf32>
    %cst_71 = arith.constant dense<0.000000e+00> : vector<16xf32>
    %186 = vector.multi_reduction <add>, %185, %cst_71 [1] : vector<16x8xf32> to vector<16xf32>
    %187 = vector.shape_cast %186 : vector<16xf32> to vector<16x1xf32>
    %188 = tpu.reciprocal %187 {approx = true} : vector<16x1xf32> -> vector<16x1xf32>
    %189 = vector.broadcast %188 : vector<16x1xf32> to vector<16x8xf32>
    %190 = arith.mulf %185, %189 : vector<16x8xf32>
    %191 = arith.truncf %190 : vector<16x8xf32> to vector<16x8xbf16>
    %192 = vector.extract_strided_slice %139 {offsets = [0, 64], sizes = [8, 32], strides = [1, 1]} : vector<8x128xbf16> to vector<8x32xbf16>
    %cst_72 = arith.constant dense<0.000000e+00> : vector<16x32xf32>
    %193 = tpu.matmul %191, %192, %cst_72 {dimension_numbers = #tpu.dot_dimension_numbers<[1], [0], [0], [1], [0, 0, 1, 1], [], []>} : vector<16x8xbf16>, vector<8x32xbf16>, vector<16x32xf32> -> vector<16x32xf32>
    %194 = vector.extract_strided_slice %130 {offsets = [0, 96], sizes = [16, 32], strides = [1, 1]} : vector<16x128xbf16> to vector<16x32xbf16>
    %195 = vector.extract_strided_slice %138 {offsets = [0, 96], sizes = [8, 32], strides = [1, 1]} : vector<8x128xbf16> to vector<8x32xbf16>
    %cst_73 = arith.constant dense<0.000000e+00> : vector<16x8xf32>
    %196 = tpu.matmul %194, %195, %cst_73 {dimension_numbers = #tpu.dot_dimension_numbers<[1], [1], [0], [0], [0, 0, 1, 0], [], []>} : vector<16x32xbf16>, vector<8x32xbf16>, vector<16x8xf32> -> vector<16x8xf32>
    %cst_74 = arith.constant 0.176776692 : f32
    %197 = vector.broadcast %cst_74 : f32 to vector<16x8xf32>
    %198 = arith.mulf %196, %197 : vector<16x8xf32>
    %cst_75 = arith.constant dense<0xFF800000> : vector<16xf32>
    %199 = vector.multi_reduction <maximumf>, %198, %cst_75 [1] : vector<16x8xf32> to vector<16xf32>
    %200 = vector.shape_cast %199 : vector<16xf32> to vector<16x1xf32>
    %201 = vector.broadcast %200 : vector<16x1xf32> to vector<16x8xf32>
    %202 = arith.subf %198, %201 : vector<16x8xf32>
    %203 = math.exp %202 : vector<16x8xf32>
    %cst_76 = arith.constant dense<0.000000e+00> : vector<16xf32>
    %204 = vector.multi_reduction <add>, %203, %cst_76 [1] : vector<16x8xf32> to vector<16xf32>
    %205 = vector.shape_cast %204 : vector<16xf32> to vector<16x1xf32>
    %206 = tpu.reciprocal %205 {approx = true} : vector<16x1xf32> -> vector<16x1xf32>
    %207 = vector.broadcast %206 : vector<16x1xf32> to vector<16x8xf32>
    %208 = arith.mulf %203, %207 : vector<16x8xf32>
    %209 = arith.truncf %208 : vector<16x8xf32> to vector<16x8xbf16>
    %210 = vector.extract_strided_slice %139 {offsets = [0, 96], sizes = [8, 32], strides = [1, 1]} : vector<8x128xbf16> to vector<8x32xbf16>
    %cst_77 = arith.constant dense<0.000000e+00> : vector<16x32xf32>
    %211 = tpu.matmul %209, %210, %cst_77 {dimension_numbers = #tpu.dot_dimension_numbers<[1], [0], [0], [1], [0, 0, 1, 1], [], []>} : vector<16x8xbf16>, vector<8x32xbf16>, vector<16x32xf32> -> vector<16x32xf32>
    %212 = tpu.concatenate %157, %175, %193, %211 in 1 : vector<16x32xf32>, vector<16x32xf32>, vector<16x32xf32>, vector<16x32xf32> -> vector<16x128xf32>
    %213 = arith.truncf %212 : vector<16x128xf32> to vector<16x128xbf16>
    %c0_78 = arith.constant 0 : index
    %c0_79 = arith.constant 0 : index
    %214 = vector.load %arg21[%c0_78, %c0_79] : memref<128x128xbf16, #tpu.memory_space<vmem>>, vector<128x128xbf16>
    %cst_80 = arith.constant dense<0.000000e+00> : vector<16x128xf32>
    %215 = tpu.matmul %213, %214, %cst_80 {dimension_numbers = #tpu.dot_dimension_numbers<[1], [0], [0], [1], [0, 0, 1, 1], [], []>} : vector<16x128xbf16>, vector<128x128xbf16>, vector<16x128xf32> -> vector<16x128xf32>
    %c0_81 = arith.constant 0 : index
    %c0_82 = arith.constant 0 : index
    %216 = vector.load %arg22[%c0_81, %c0_82] : memref<1x128xf32, #tpu.memory_space<vmem>>, vector<1x128xf32>
    %217 = vector.broadcast %216 : vector<1x128xf32> to vector<16x128xf32>
    %218 = arith.addf %215, %217 : vector<16x128xf32>
    %219 = arith.addf %1, %218 : vector<16x128xf32>
    %c0_83 = arith.constant 0 : index
    %c0_84 = arith.constant 0 : index
    %220 = vector.load %arg23[%c0_83, %c0_84] : memref<1x128xf32, #tpu.memory_space<vmem>>, vector<1x128xf32>
    %c0_85 = arith.constant 0 : index
    %c0_86 = arith.constant 0 : index
    %221 = vector.load %arg24[%c0_85, %c0_86] : memref<1x128xf32, #tpu.memory_space<vmem>>, vector<1x128xf32>
    %cst_87 = arith.constant dense<0.000000e+00> : vector<16xf32>
    %222 = vector.multi_reduction <add>, %219, %cst_87 [1] : vector<16x128xf32> to vector<16xf32>
    %223 = vector.shape_cast %222 : vector<16xf32> to vector<16x1xf32>
    %cst_88 = arith.constant 1.280000e+02 : f32
    %224 = vector.broadcast %cst_88 : f32 to vector<16x1xf32>
    %225 = arith.divf %223, %224 : vector<16x1xf32>
    %226 = vector.broadcast %225 : vector<16x1xf32> to vector<16x128xf32>
    %227 = arith.subf %219, %226 : vector<16x128xf32>
    %228 = arith.mulf %227, %227 : vector<16x128xf32>
    %cst_89 = arith.constant dense<0.000000e+00> : vector<16xf32>
    %229 = vector.multi_reduction <add>, %228, %cst_89 [1] : vector<16x128xf32> to vector<16xf32>
    %230 = vector.shape_cast %229 : vector<16xf32> to vector<16x1xf32>
    %cst_90 = arith.constant 1.280000e+02 : f32
    %231 = vector.broadcast %cst_90 : f32 to vector<16x1xf32>
    %232 = arith.divf %230, %231 : vector<16x1xf32>
    %233 = vector.broadcast %225 : vector<16x1xf32> to vector<16x128xf32>
    %234 = arith.subf %219, %233 : vector<16x128xf32>
    %cst_91 = arith.constant 9.99999974E-6 : f32
    %235 = vector.broadcast %cst_91 : f32 to vector<16x1xf32>
    %236 = arith.addf %232, %235 : vector<16x1xf32>
    %237 = math.rsqrt %236 : vector<16x1xf32>
    %238 = vector.broadcast %237 : vector<16x1xf32> to vector<16x128xf32>
    %239 = arith.mulf %234, %238 : vector<16x128xf32>
    %240 = vector.broadcast %220 : vector<1x128xf32> to vector<16x128xf32>
    %241 = arith.mulf %239, %240 : vector<16x128xf32>
    %242 = vector.broadcast %221 : vector<1x128xf32> to vector<16x128xf32>
    %243 = arith.addf %241, %242 : vector<16x128xf32>
    %244 = arith.truncf %243 : vector<16x128xf32> to vector<16x128xbf16>
    %c0_92 = arith.constant 0 : index
    %c0_93 = arith.constant 0 : index
    %245 = vector.load %arg25[%c0_92, %c0_93] : memref<128x512xbf16, #tpu.memory_space<vmem>>, vector<128x512xbf16>
    %cst_94 = arith.constant dense<0.000000e+00> : vector<16x512xf32>
    %246 = tpu.matmul %244, %245, %cst_94 {dimension_numbers = #tpu.dot_dimension_numbers<[1], [0], [0], [1], [0, 0, 1, 1], [], []>} : vector<16x128xbf16>, vector<128x512xbf16>, vector<16x512xf32> -> vector<16x512xf32>
    %c0_95 = arith.constant 0 : index
    %c0_96 = arith.constant 0 : index
    %247 = vector.load %arg26[%c0_95, %c0_96] : memref<1x512xf32, #tpu.memory_space<vmem>>, vector<1x512xf32>
    %248 = vector.broadcast %247 : vector<1x512xf32> to vector<16x512xf32>
    %249 = arith.addf %246, %248 : vector<16x512xf32>
    %cst_97 = arith.constant 0.000000e+00 : f32
    %250 = vector.broadcast %cst_97 : f32 to vector<16x512xf32>
    %251 = arith.maximumf %249, %250 : vector<16x512xf32>
    %252 = arith.truncf %251 : vector<16x512xf32> to vector<16x512xbf16>
    %c0_98 = arith.constant 0 : index
    %c0_99 = arith.constant 0 : index
    %253 = vector.load %arg27[%c0_98, %c0_99] : memref<512x128xbf16, #tpu.memory_space<vmem>>, vector<512x128xbf16>
    %cst_100 = arith.constant dense<0.000000e+00> : vector<16x128xf32>
    %254 = tpu.matmul %252, %253, %cst_100 {dimension_numbers = #tpu.dot_dimension_numbers<[1], [0], [0], [1], [0, 0, 1, 1], [], []>} : vector<16x512xbf16>, vector<512x128xbf16>, vector<16x128xf32> -> vector<16x128xf32>
    %c0_101 = arith.constant 0 : index
    %c0_102 = arith.constant 0 : index
    %255 = vector.load %arg28[%c0_101, %c0_102] : memref<1x128xf32, #tpu.memory_space<vmem>>, vector<1x128xf32>
    %256 = vector.broadcast %255 : vector<1x128xf32> to vector<16x128xf32>
    %257 = arith.addf %254, %256 : vector<16x128xf32>
    %258 = arith.addf %243, %257 : vector<16x128xf32>
    %c0_103 = arith.constant 0 : index
    %c0_104 = arith.constant 0 : index
    %259 = vector.load %arg29[%c0_103, %c0_104] : memref<1x128xf32, #tpu.memory_space<vmem>>, vector<1x128xf32>
    %c0_105 = arith.constant 0 : index
    %c0_106 = arith.constant 0 : index
    %260 = vector.load %arg30[%c0_105, %c0_106] : memref<1x128xf32, #tpu.memory_space<vmem>>, vector<1x128xf32>
    %cst_107 = arith.constant dense<0.000000e+00> : vector<16xf32>
    %261 = vector.multi_reduction <add>, %258, %cst_107 [1] : vector<16x128xf32> to vector<16xf32>
    %262 = vector.shape_cast %261 : vector<16xf32> to vector<16x1xf32>
    %cst_108 = arith.constant 1.280000e+02 : f32
    %263 = vector.broadcast %cst_108 : f32 to vector<16x1xf32>
    %264 = arith.divf %262, %263 : vector<16x1xf32>
    %265 = vector.broadcast %264 : vector<16x1xf32> to vector<16x128xf32>
    %266 = arith.subf %258, %265 : vector<16x128xf32>
    %267 = arith.mulf %266, %266 : vector<16x128xf32>
    %cst_109 = arith.constant dense<0.000000e+00> : vector<16xf32>
    %268 = vector.multi_reduction <add>, %267, %cst_109 [1] : vector<16x128xf32> to vector<16xf32>
    %269 = vector.shape_cast %268 : vector<16xf32> to vector<16x1xf32>
    %cst_110 = arith.constant 1.280000e+02 : f32
    %270 = vector.broadcast %cst_110 : f32 to vector<16x1xf32>
    %271 = arith.divf %269, %270 : vector<16x1xf32>
    %272 = vector.broadcast %264 : vector<16x1xf32> to vector<16x128xf32>
    %273 = arith.subf %258, %272 : vector<16x128xf32>
    %cst_111 = arith.constant 9.99999974E-6 : f32
    %274 = vector.broadcast %cst_111 : f32 to vector<16x1xf32>
    %275 = arith.addf %271, %274 : vector<16x1xf32>
    %276 = math.rsqrt %275 : vector<16x1xf32>
    %277 = vector.broadcast %276 : vector<16x1xf32> to vector<16x128xf32>
    %278 = arith.mulf %273, %277 : vector<16x128xf32>
    %279 = vector.broadcast %259 : vector<1x128xf32> to vector<16x128xf32>
    %280 = arith.mulf %278, %279 : vector<16x128xf32>
    %281 = vector.broadcast %260 : vector<1x128xf32> to vector<16x128xf32>
    %282 = arith.addf %280, %281 : vector<16x128xf32>
    %c0_112 = arith.constant 0 : index
    %c0_113 = arith.constant 0 : index
    %c0_114 = arith.constant 0 : index
    %283 = vector.load %arg31[%c0_112, %c0_113, %c0_114] : memref<1x16x128xf32, #tpu.memory_space<vmem>>, vector<1x16x128xf32>
    %284 = vector.shape_cast %283 : vector<1x16x128xf32> to vector<16x128xf32>
    %285 = vector.shape_cast %282 : vector<16x128xf32> to vector<1x16x128xf32>
    tpu.vector_store %arg31[%c0_112, %c0_113, %c0_114], %285 {strides = array<i32>} : memref<1x16x128xf32, #tpu.memory_space<vmem>>, vector<1x16x128xf32>,
    %286 = arith.truncf %123 : vector<8x128xf32> to vector<8x128xbf16>
    %c0_115 = arith.constant 0 : index
    %c0_116 = arith.constant 0 : index
    %287 = vector.load %arg11[%c0_115, %c0_116] : memref<128x512xbf16, #tpu.memory_space<vmem>>, vector<128x512xbf16>
    %cst_117 = arith.constant dense<0.000000e+00> : vector<8x512xf32>
    %288 = tpu.matmul %286, %287, %cst_117 {dimension_numbers = #tpu.dot_dimension_numbers<[1], [0], [0], [1], [0, 0, 1, 1], [], []>} : vector<8x128xbf16>, vector<128x512xbf16>, vector<8x512xf32> -> vector<8x512xf32>
    %c0_118 = arith.constant 0 : index
    %c0_119 = arith.constant 0 : index
    %289 = vector.load %arg12[%c0_118, %c0_119] : memref<1x512xf32, #tpu.memory_space<vmem>>, vector<1x512xf32>
    %290 = vector.broadcast %289 : vector<1x512xf32> to vector<8x512xf32>
    %291 = arith.addf %288, %290 : vector<8x512xf32>
    %cst_120 = arith.constant 0.000000e+00 : f32
    %292 = vector.broadcast %cst_120 : f32 to vector<8x512xf32>
    %293 = arith.maximumf %291, %292 : vector<8x512xf32>
    %294 = arith.truncf %293 : vector<8x512xf32> to vector<8x512xbf16>
    %c0_121 = arith.constant 0 : index
    %c0_122 = arith.constant 0 : index
    %295 = vector.load %arg13[%c0_121, %c0_122] : memref<512x128xbf16, #tpu.memory_space<vmem>>, vector<512x128xbf16>
    %cst_123 = arith.constant dense<0.000000e+00> : vector<8x128xf32>
    %296 = tpu.matmul %294, %295, %cst_123 {dimension_numbers = #tpu.dot_dimension_numbers<[1], [0], [0], [1], [0, 0, 1, 1], [], []>} : vector<8x512xbf16>, vector<512x128xbf16>, vector<8x128xf32> -> vector<8x128xf32>
    %c0_124 = arith.constant 0 : index
    %c0_125 = arith.constant 0 : index
    %297 = vector.load %arg14[%c0_124, %c0_125] : memref<1x128xf32, #tpu.memory_space<vmem>>, vector<1x128xf32>
    %298 = vector.broadcast %297 : vector<1x128xf32> to vector<8x128xf32>
    %299 = arith.addf %296, %298 : vector<8x128xf32>
    %300 = arith.addf %123, %299 : vector<8x128xf32>
    %c0_126 = arith.constant 0 : index
    %c0_127 = arith.constant 0 : index
    %301 = vector.load %arg15[%c0_126, %c0_127] : memref<1x128xf32, #tpu.memory_space<vmem>>, vector<1x128xf32>
    %c0_128 = arith.constant 0 : index
    %c0_129 = arith.constant 0 : index
    %302 = vector.load %arg16[%c0_128, %c0_129] : memref<1x128xf32, #tpu.memory_space<vmem>>, vector<1x128xf32>
    %cst_130 = arith.constant dense<0.000000e+00> : vector<8xf32>
    %303 = vector.multi_reduction <add>, %300, %cst_130 [1] : vector<8x128xf32> to vector<8xf32>
    %304 = vector.shape_cast %303 : vector<8xf32> to vector<8x1xf32>
    %cst_131 = arith.constant 1.280000e+02 : f32
    %305 = vector.broadcast %cst_131 : f32 to vector<8x1xf32>
    %306 = arith.divf %304, %305 : vector<8x1xf32>
    %307 = vector.broadcast %306 : vector<8x1xf32> to vector<8x128xf32>
    %308 = arith.subf %300, %307 : vector<8x128xf32>
    %309 = arith.mulf %308, %308 : vector<8x128xf32>
    %cst_132 = arith.constant dense<0.000000e+00> : vector<8xf32>
    %310 = vector.multi_reduction <add>, %309, %cst_132 [1] : vector<8x128xf32> to vector<8xf32>
    %311 = vector.shape_cast %310 : vector<8xf32> to vector<8x1xf32>
    %cst_133 = arith.constant 1.280000e+02 : f32
    %312 = vector.broadcast %cst_133 : f32 to vector<8x1xf32>
    %313 = arith.divf %311, %312 : vector<8x1xf32>
    %314 = vector.broadcast %306 : vector<8x1xf32> to vector<8x128xf32>
    %315 = arith.subf %300, %314 : vector<8x128xf32>
    %cst_134 = arith.constant 9.99999974E-6 : f32
    %316 = vector.broadcast %cst_134 : f32 to vector<8x1xf32>
    %317 = arith.addf %313, %316 : vector<8x1xf32>
    %318 = math.rsqrt %317 : vector<8x1xf32>
    %319 = vector.broadcast %318 : vector<8x1xf32> to vector<8x128xf32>
    %320 = arith.mulf %315, %319 : vector<8x128xf32>
    %321 = vector.broadcast %301 : vector<1x128xf32> to vector<8x128xf32>
    %322 = arith.mulf %320, %321 : vector<8x128xf32>
    %323 = vector.broadcast %302 : vector<1x128xf32> to vector<8x128xf32>
    %324 = arith.addf %322, %323 : vector<8x128xf32>
    %c0_135 = arith.constant 0 : index
    %c0_136 = arith.constant 0 : index
    %c0_137 = arith.constant 0 : index
    %325 = vector.load %arg32[%c0_135, %c0_136, %c0_137] : memref<1x8x128xf32, #tpu.memory_space<vmem>>, vector<1x8x128xf32>
    %326 = vector.shape_cast %325 : vector<1x8x128xf32> to vector<8x128xf32>
    %327 = vector.shape_cast %324 : vector<8x128xf32> to vector<1x8x128xf32>
    tpu.vector_store %arg32[%c0_135, %c0_136, %c0_137], %327 {strides = array<i32>} : memref<1x8x128xf32, #tpu.memory_space<vmem>>, vector<1x8x128xf32>,
    return
  }
  func.func @transform_0(%arg0: i32) -> (i32, i32, i32) {
    %c0_i32 = arith.constant 0 : i32
    %c0_i32_0 = arith.constant 0 : i32
    %c0_i32_1 = arith.constant 0 : i32
    return %arg0, %c0_i32, %c0_i32_0 : i32, i32, i32
  }
  func.func @transform_1(%arg0: i32) -> (i32, i32, i32) {
    %c0_i32 = arith.constant 0 : i32
    %c0_i32_0 = arith.constant 0 : i32
    %c0_i32_1 = arith.constant 0 : i32
    return %arg0, %c0_i32, %c0_i32_0 : i32, i32, i32
  }
  func.func @transform_2(%arg0: i32) -> (i32, i32) {
    %c0_i32 = arith.constant 0 : i32
    %c0_i32_0 = arith.constant 0 : i32
    %c0_i32_1 = arith.constant 0 : i32
    return %c0_i32, %c0_i32_0 : i32, i32
  }
  func.func @transform_3(%arg0: i32) -> (i32, i32) {
    %c0_i32 = arith.constant 0 : i32
    %c0_i32_0 = arith.constant 0 : i32
    %c0_i32_1 = arith.constant 0 : i32
    return %c0_i32, %c0_i32_0 : i32, i32
  }
  func.func @transform_4(%arg0: i32) -> (i32, i32) {
    %c0_i32 = arith.constant 0 : i32
    %c0_i32_0 = arith.constant 0 : i32
    %c0_i32_1 = arith.constant 0 : i32
    return %c0_i32, %c0_i32_0 : i32, i32
  }
  func.func @transform_5(%arg0: i32) -> (i32, i32) {
    %c0_i32 = arith.constant 0 : i32
    %c0_i32_0 = arith.constant 0 : i32
    %c0_i32_1 = arith.constant 0 : i32
    return %c0_i32, %c0_i32_0 : i32, i32
  }
  func.func @transform_6(%arg0: i32) -> (i32, i32) {
    %c0_i32 = arith.constant 0 : i32
    %c0_i32_0 = arith.constant 0 : i32
    %c0_i32_1 = arith.constant 0 : i32
    return %c0_i32, %c0_i32_0 : i32, i32
  }
  func.func @transform_7(%arg0: i32) -> (i32, i32) {
    %c0_i32 = arith.constant 0 : i32
    %c0_i32_0 = arith.constant 0 : i32
    %c0_i32_1 = arith.constant 0 : i32
    return %c0_i32, %c0_i32_0 : i32, i32
  }
  func.func @transform_8(%arg0: i32) -> (i32, i32) {
    %c0_i32 = arith.constant 0 : i32
    %c0_i32_0 = arith.constant 0 : i32
    %c0_i32_1 = arith.constant 0 : i32
    return %c0_i32, %c0_i32_0 : i32, i32
  }
  func.func @transform_9(%arg0: i32) -> (i32, i32) {
    %c0_i32 = arith.constant 0 : i32
    %c0_i32_0 = arith.constant 0 : i32
    %c0_i32_1 = arith.constant 0 : i32
    return %c0_i32, %c0_i32_0 : i32, i32
  }
  func.func @transform_10(%arg0: i32) -> (i32, i32) {
    %c0_i32 = arith.constant 0 : i32
    %c0_i32_0 = arith.constant 0 : i32
    %c0_i32_1 = arith.constant 0 : i32
    return %c0_i32, %c0_i32_0 : i32, i32
  }
  func.func @transform_11(%arg0: i32) -> (i32, i32) {
    %c0_i32 = arith.constant 0 : i32
    %c0_i32_0 = arith.constant 0 : i32
    %c0_i32_1 = arith.constant 0 : i32
    return %c0_i32, %c0_i32_0 : i32, i32
  }
  func.func @transform_12(%arg0: i32) -> (i32, i32) {
    %c0_i32 = arith.constant 0 : i32
    %c0_i32_0 = arith.constant 0 : i32
    %c0_i32_1 = arith.constant 0 : i32
    return %c0_i32, %c0_i32_0 : i32, i32
  }
  func.func @transform_13(%arg0: i32) -> (i32, i32) {
    %c0_i32 = arith.constant 0 : i32
    %c0_i32_0 = arith.constant 0 : i32
    %c0_i32_1 = arith.constant 0 : i32
    return %c0_i32, %c0_i32_0 : i32, i32
  }
  func.func @transform_14(%arg0: i32) -> (i32, i32) {
    %c0_i32 = arith.constant 0 : i32
    %c0_i32_0 = arith.constant 0 : i32
    %c0_i32_1 = arith.constant 0 : i32
    return %c0_i32, %c0_i32_0 : i32, i32
  }
  func.func @transform_15(%arg0: i32) -> (i32, i32) {
    %c0_i32 = arith.constant 0 : i32
    %c0_i32_0 = arith.constant 0 : i32
    %c0_i32_1 = arith.constant 0 : i32
    return %c0_i32, %c0_i32_0 : i32, i32
  }
  func.func @transform_16(%arg0: i32) -> (i32, i32) {
    %c0_i32 = arith.constant 0 : i32
    %c0_i32_0 = arith.constant 0 : i32
    %c0_i32_1 = arith.constant 0 : i32
    return %c0_i32, %c0_i32_0 : i32, i32
  }
  func.func @transform_17(%arg0: i32) -> (i32, i32) {
    %c0_i32 = arith.constant 0 : i32
    %c0_i32_0 = arith.constant 0 : i32
    %c0_i32_1 = arith.constant 0 : i32
    return %c0_i32, %c0_i32_0 : i32, i32
  }
  func.func @transform_18(%arg0: i32) -> (i32, i32) {
    %c0_i32 = arith.constant 0 : i32
    %c0_i32_0 = arith.constant 0 : i32
    %c0_i32_1 = arith.constant 0 : i32
    return %c0_i32, %c0_i32_0 : i32, i32
  }
  func.func @transform_19(%arg0: i32) -> (i32, i32) {
    %c0_i32 = arith.constant 0 : i32
    %c0_i32_0 = arith.constant 0 : i32
    %c0_i32_1 = arith.constant 0 : i32
    return %c0_i32, %c0_i32_0 : i32, i32
  }
  func.func @transform_20(%arg0: i32) -> (i32, i32) {
    %c0_i32 = arith.constant 0 : i32
    %c0_i32_0 = arith.constant 0 : i32
    %c0_i32_1 = arith.constant 0 : i32
    return %c0_i32, %c0_i32_0 : i32, i32
  }
  func.func @transform_21(%arg0: i32) -> (i32, i32) {
    %c0_i32 = arith.constant 0 : i32
    %c0_i32_0 = arith.constant 0 : i32
    %c0_i32_1 = arith.constant 0 : i32
    return %c0_i32, %c0_i32_0 : i32, i32
  }
  func.func @transform_22(%arg0: i32) -> (i32, i32) {
    %c0_i32 = arith.constant 0 : i32
    %c0_i32_0 = arith.constant 0 : i32
    %c0_i32_1 = arith.constant 0 : i32
    return %c0_i32, %c0_i32_0 : i32, i32
  }
  func.func @transform_23(%arg0: i32) -> (i32, i32) {
    %c0_i32 = arith.constant 0 : i32
    %c0_i32_0 = arith.constant 0 : i32
    %c0_i32_1 = arith.constant 0 : i32
    return %c0_i32, %c0_i32_0 : i32, i32
  }
  func.func @transform_24(%arg0: i32) -> (i32, i32) {
    %c0_i32 = arith.constant 0 : i32
    %c0_i32_0 = arith.constant 0 : i32
    %c0_i32_1 = arith.constant 0 : i32
    return %c0_i32, %c0_i32_0 : i32, i32
  }
  func.func @transform_25(%arg0: i32) -> (i32, i32) {
    %c0_i32 = arith.constant 0 : i32
    %c0_i32_0 = arith.constant 0 : i32
    %c0_i32_1 = arith.constant 0 : i32
    return %c0_i32, %c0_i32_0 : i32, i32
  }
  func.func @transform_26(%arg0: i32) -> (i32, i32) {
    %c0_i32 = arith.constant 0 : i32
    %c0_i32_0 = arith.constant 0 : i32
    %c0_i32_1 = arith.constant 0 : i32
    return %c0_i32, %c0_i32_0 : i32, i32
  }
  func.func @transform_27(%arg0: i32) -> (i32, i32) {
    %c0_i32 = arith.constant 0 : i32
    %c0_i32_0 = arith.constant 0 : i32
    %c0_i32_1 = arith.constant 0 : i32
    return %c0_i32, %c0_i32_0 : i32, i32
  }
  func.func @transform_28(%arg0: i32) -> (i32, i32) {
    %c0_i32 = arith.constant 0 : i32
    %c0_i32_0 = arith.constant 0 : i32
    %c0_i32_1 = arith.constant 0 : i32
    return %c0_i32, %c0_i32_0 : i32, i32
  }
  func.func @transform_29(%arg0: i32) -> (i32, i32) {
    %c0_i32 = arith.constant 0 : i32
    %c0_i32_0 = arith.constant 0 : i32
    %c0_i32_1 = arith.constant 0 : i32
    return %c0_i32, %c0_i32_0 : i32, i32
  }
  func.func @transform_30(%arg0: i32) -> (i32, i32, i32) {
    %c0_i32 = arith.constant 0 : i32
    %c0_i32_0 = arith.constant 0 : i32
    %c0_i32_1 = arith.constant 0 : i32
    return %arg0, %c0_i32, %c0_i32_0 : i32, i32, i32
  }
  func.func @transform_31(%arg0: i32) -> (i32, i32, i32) {
    %c0_i32 = arith.constant 0 : i32
    %c0_i32_0 = arith.constant 0 : i32
    %c0_i32_1 = arith.constant 0 : i32
    return %arg0, %c0_i32, %c0_i32_0 : i32, i32, i32
  }
}

</mosaic_0001>

<llo_original>
// kernel: tpu_custom_call.1
$region0: #{tpu_custom_call.1}
  #allocation0 [shape = 'u32[]', space=smem, size = 0x4, offset = 0x4, fixed_abs, tag = 'smem constant byte address 0x4 - core index']
  #allocation1 [shape = 'u32[144,128]{1,0:T(1,128)}', space=vmem, size = 0x12000, scoped, tag = 'internal scratch']
  %s0 = inlined_call_operand.smem [shape: u32[32], index: -1, kind: input, shape index: {}]
  %s1 = sld [smem:[%s0]]
  %s2 = scalar_lea.smem %s0, 1
  %s3 = sld [smem:[%s2]]
  %s4 = scalar_lea.smem %s0, 2
  %s5 = sld [smem:[%s4]]
  %s6 = scalar_lea.smem %s0, 3
  %s7 = sld [smem:[%s6]]
  %s8 = scalar_lea.smem %s0, 4
  %s9 = sld [smem:[%s8]]
  %s10 = scalar_lea.smem %s0, 5
  %s11 = sld [smem:[%s10]]
  %s12 = scalar_lea.smem %s0, 6
  %s13 = sld [smem:[%s12]]
  %s14 = scalar_lea.smem %s0, 7
  %s15 = sld [smem:[%s14]]
  %s16 = scalar_lea.smem %s0, 8
  %s17 = sld [smem:[%s16]]
  %s18 = scalar_lea.smem %s0, 9
  %s19 = sld [smem:[%s18]]
  %s20 = scalar_lea.smem %s0, 10
  %s21 = sld [smem:[%s20]]
  %s22 = scalar_lea.smem %s0, 11
  %s23 = sld [smem:[%s22]]
  %s24 = scalar_lea.smem %s0, 12
  %s25 = sld [smem:[%s24]]
  %s26 = scalar_lea.smem %s0, 13
  %s27 = sld [smem:[%s26]]
  %s28 = scalar_lea.smem %s0, 14
  %s29 = sld [smem:[%s28]]
  %s30 = scalar_lea.smem %s0, 15
  %s31 = sld [smem:[%s30]]
  %s32 = scalar_lea.smem %s0, 16
  %s33 = sld [smem:[%s32]]
  %s34 = scalar_lea.smem %s0, 17
  %s35 = sld [smem:[%s34]]
  %s36 = scalar_lea.smem %s0, 18
  %s37 = sld [smem:[%s36]]
  %s38 = scalar_lea.smem %s0, 19
  %s39 = sld [smem:[%s38]]
  %s40 = scalar_lea.smem %s0, 20
  %s41 = sld [smem:[%s40]]
  %s42 = scalar_lea.smem %s0, 21
  %s43 = sld [smem:[%s42]]
  %s44 = scalar_lea.smem %s0, 22
  %s45 = sld [smem:[%s44]]
  %s46 = scalar_lea.smem %s0, 23
  %s47 = sld [smem:[%s46]]
  %s48 = scalar_lea.smem %s0, 24
  %s49 = sld [smem:[%s48]]
  %s50 = scalar_lea.smem %s0, 25
  %s51 = sld [smem:[%s50]]
  %s52 = scalar_lea.smem %s0, 26
  %s53 = sld [smem:[%s52]]
  %s54 = scalar_lea.smem %s0, 27
  %s55 = sld [smem:[%s54]]
  %s56 = scalar_lea.smem %s0, 28
  %s57 = sld [smem:[%s56]]
  %s58 = scalar_lea.smem %s0, 29
  %s59 = sld [smem:[%s58]]
  %s60 = scalar_lea.smem %s0, 30
  %s61 = sld [smem:[%s60]]
  %s62 = scalar_lea.smem %s0, 31
  %s63 = sld [smem:[%s62]]
  %64 = xla_tuple %s61, %s63
  %s65 = sld [smem:[#allocation0]]
  $region237: #{tpu_custom_call.1} parent=0
    _
  %s67 = ssub.s32 1, %s65
  %s68 = scalar_select 0, %s67, %s65
  $region1: #{tpu_custom_call.1} parent=0
    #allocation2 [shape = 'u8[16384]{0}', space=vmem, size = 0x4000, scoped, tag = 'input window, operand 0']
    #allocation3 [shape = 's32[2]{0}', space=sflag, size = 0x8, scoped, tag = 'scoped memory for tpu_custom_call.1']
    #allocation4 [shape = 's32[2]{0}', space=sflag, size = 0x8, scoped, tag = 'scoped memory for tpu_custom_call.1']
    #allocation5 [shape = 'u8[8192]{0}', space=vmem, size = 0x2000, scoped, tag = 'input window, operand 1']
    #allocation6 [shape = 's32[2]{0}', space=sflag, size = 0x8, scoped, tag = 'scoped memory for tpu_custom_call.1']
    #allocation7 [shape = 'u8[32768]{0}', space=vmem, size = 0x8000, scoped, tag = 'input window, operand 2, single buffered']
    #allocation8 [shape = 'u8[65536]{0}', space=vmem, size = 0x10000, scoped, tag = 'input window, operand 4, single buffered']
    #allocation9 [shape = 's32[1]{0}', space=sflag, size = 0x4, scoped, tag = 'scoped memory for tpu_custom_call.1']
    #allocation10 [shape = 'u8[32768]{0}', space=vmem, size = 0x8000, scoped, tag = 'input window, operand 6, single buffered']
    #allocation11 [shape = 'u8[512]{0}', space=vmem, size = 0x400, scoped, tag = 'input window, operand 7, single buffered']
    #allocation12 [shape = 's32[1]{0}', space=sflag, size = 0x4, scoped, tag = 'scoped memory for tpu_custom_call.1']
    #allocation13 [shape = 'u8[512]{0}', space=vmem, size = 0x400, scoped, tag = 'input window, operand 8, single buffered']
    #allocation14 [shape = 'u8[512]{0}', space=vmem, size = 0x400, scoped, tag = 'input window, operand 9, single buffered']
    #allocation15 [shape = 's32[1]{0}', space=sflag, size = 0x4, scoped, tag = 'scoped memory for tpu_custom_call.1']
    #allocation16 [shape = 'u8[131072]{0}', space=vmem, size = 0x20000, scoped, tag = 'input window, operand 10, single buffered']
    #allocation17 [shape = 'u8[131072]{0}', space=vmem, size = 0x20000, scoped, tag = 'input window, operand 12, single buffered']
    #allocation18 [shape = 's32[1]{0}', space=sflag, size = 0x4, scoped, tag = 'scoped memory for tpu_custom_call.1']
    #allocation19 [shape = 'u8[512]{0}', space=vmem, size = 0x400, scoped, tag = 'input window, operand 13, single buffered']
    #allocation20 [shape = 'u8[512]{0}', space=vmem, size = 0x400, scoped, tag = 'input window, operand 14, single buffered']
    #allocation21 [shape = 's32[1]{0}', space=sflag, size = 0x4, scoped, tag = 'scoped memory for tpu_custom_call.1']
    #allocation22 [shape = 'u8[512]{0}', space=vmem, size = 0x400, scoped, tag = 'input window, operand 15, single buffered']
    #allocation23 [shape = 'u8[32768]{0}', space=vmem, size = 0x8000, scoped, tag = 'input window, operand 16, single buffered']
    #allocation24 [shape = 's32[1]{0}', space=sflag, size = 0x4, scoped, tag = 'scoped memory for tpu_custom_call.1']
    #allocation25 [shape = 'u8[512]{0}', space=vmem, size = 0x400, scoped, tag = 'input window, operand 17, single buffered']
    #allocation26 [shape = 'u8[65536]{0}', space=vmem, size = 0x10000, scoped, tag = 'input window, operand 18, single buffered']
    #allocation27 [shape = 's32[1]{0}', space=sflag, size = 0x4, scoped, tag = 'scoped memory for tpu_custom_call.1']
    #allocation28 [shape = 'u8[1024]{0}', space=vmem, size = 0x400, scoped, tag = 'input window, operand 19, single buffered']
    #allocation29 [shape = 'u8[131072]{0}', space=vmem, size = 0x20000, scoped, tag = 'input window, operand 24, single buffered']
    #allocation30 [shape = 's32[1]{0}', space=sflag, size = 0x4, scoped, tag = 'scoped memory for tpu_custom_call.1']
    #allocation31 [shape = 'u8[131072]{0}', space=vmem, size = 0x20000, scoped, tag = 'input window, operand 26, single buffered']
    #allocation32 [shape = 'u8[16384]{0}', space=vmem, size = 0x4000, scoped, tag = 'output window, operand 0']
    #allocation33 [shape = 'u8[8192]{0}', space=vmem, size = 0x2000, scoped, tag = 'output window, operand 1']
    #allocation34 [shape = 's32[2]{0}', space=sflag, size = 0x8, scoped, tag = 'scoped memory for tpu_custom_call.1']
    %69 = vsyncpa [#allocation3], 0
    %s70 = scalar_lea.sflag [#allocation3], 1
    %71 = vsyncpa %s70, 0
    %72 = vsyncpa [#allocation6], 0
    %s73 = scalar_lea.sflag [#allocation6], 1
    %74 = vsyncpa %s73, 0
    %75 = vsyncpa [#allocation9], 0
    %76 = vsyncpa [#allocation12], 0
    %77 = vsyncpa [#allocation15], 0
    %78 = vsyncpa [#allocation18], 0
    %79 = vsyncpa [#allocation21], 0
    %80 = vsyncpa [#allocation24], 0
    %81 = vsyncpa [#allocation27], 0
    %82 = vsyncpa [#allocation30], 0
    %83 = vsyncpa [#allocation4], 0
    %s84 = scalar_lea.sflag [#allocation4], 1
    %85 = vsyncpa %s84, 0
    %86 = vsyncpa [#allocation34], 0
    %s87 = scalar_lea.sflag [#allocation34], 1
    %88 = vsyncpa %s87, 0
    loop: start=0, step=1, limit=4
    $region2: #{tpu_custom_call.1} parent=1 // loop_pre_header
      _
    $region3: #{tpu_custom_call.1} parent=1 // loop_header
      %s90 = sphi 0, %s94
      %p91 = scmp.ge.s32.totalorder %s90, 4
      %s100 = sphi 0, %s102
      %s103 = sphi 0, %s100
      %s104 = sphi 0, %s103
      %s120 = sphi 0, %s104
      %s126 = sphi 0, %s128
      %s129 = sphi 0, %s126
      %s130 = sphi 0, %s129
      %s146 = sphi 0, %s130
      %s150 = sphi 0, %s150
      %s152 = sphi 0, %s150
      %s153 = sphi 0, %s152
      %s167 = sphi 0, %s153
      %s171 = sphi 0, %s171
      %s173 = sphi 0, %s171
      %s174 = sphi 0, %s173
      %s188 = sphi 0, %s174
      %s192 = sphi 0, %s192
      %s194 = sphi 0, %s192
      %s195 = sphi 0, %s194
      %s209 = sphi 0, %s195
      %s213 = sphi 0, %s213
      %s215 = sphi 0, %s213
      %s216 = sphi 0, %s215
      %s230 = sphi 0, %s216
      %s234 = sphi 0, %s234
      %s236 = sphi 0, %s234
      %s237 = sphi 0, %s236
      %s251 = sphi 0, %s237
      %s255 = sphi 0, %s255
      %s257 = sphi 0, %s255
      %s258 = sphi 0, %s257
      %s272 = sphi 0, %s258
      %s276 = sphi 0, %s276
      %s278 = sphi 0, %s276
      %s279 = sphi 0, %s278
      %s293 = sphi 0, %s279
      %s297 = sphi 0, %s297
      %s299 = sphi 0, %s297
      %s300 = sphi 0, %s299
      %s314 = sphi 0, %s300
      %s318 = sphi 0, %s318
      %s320 = sphi 0, %s318
      %s321 = sphi 0, %s320
      %s335 = sphi 0, %s321
      %s339 = sphi 0, %s339
      %s341 = sphi 0, %s339
      %s342 = sphi 0, %s341
      %s356 = sphi 0, %s342
      %s360 = sphi 0, %s360
      %s362 = sphi 0, %s360
      %s363 = sphi 0, %s362
      %s377 = sphi 0, %s363
      %s381 = sphi 0, %s381
      %s383 = sphi 0, %s381
      %s384 = sphi 0, %s383
      %s398 = sphi 0, %s384
      %s402 = sphi 0, %s402
      %s404 = sphi 0, %s402
      %s405 = sphi 0, %s404
      %s419 = sphi 0, %s405
      %s423 = sphi 0, %s423
      %s425 = sphi 0, %s423
      %s426 = sphi 0, %s425
      %s440 = sphi 0, %s426
      %s444 = sphi 0, %s444
      %s446 = sphi 0, %s444
      %s447 = sphi 0, %s446
      %s461 = sphi 0, %s447
      %s465 = sphi 0, %s465
      %s467 = sphi 0, %s465
      %s468 = sphi 0, %s467
      %s482 = sphi 0, %s468
      %s486 = sphi 0, %s486
      %s488 = sphi 0, %s486
      %s489 = sphi 0, %s488
      %s503 = sphi 0, %s489
      %s507 = sphi 0, %s507
      %s509 = sphi 0, %s507
      %s510 = sphi 0, %s509
      %s524 = sphi 0, %s510
      %s528 = sphi 0, %s528
      %s530 = sphi 0, %s528
      %s531 = sphi 0, %s530
      %s545 = sphi 0, %s531
      %s549 = sphi 0, %s549
      %s551 = sphi 0, %s549
      %s552 = sphi 0, %s551
      %s566 = sphi 0, %s552
      %s570 = sphi 0, %s570
      %s572 = sphi 0, %s570
      %s573 = sphi 0, %s572
      %s587 = sphi 0, %s573
      %s591 = sphi 0, %s591
      %s593 = sphi 0, %s591
      %s594 = sphi 0, %s593
      %s608 = sphi 0, %s594
      %s612 = sphi 0, %s612
      %s614 = sphi 0, %s612
      %s615 = sphi 0, %s614
      %s629 = sphi 0, %s615
      %s633 = sphi 0, %s633
      %s635 = sphi 0, %s633
      %s636 = sphi 0, %s635
      %s650 = sphi 0, %s636
      %s654 = sphi 0, %s654
      %s656 = sphi 0, %s654
      %s657 = sphi 0, %s656
      %s671 = sphi 0, %s657
      %s675 = sphi 0, %s675
      %s677 = sphi 0, %s675
      %s678 = sphi 0, %s677
      %s692 = sphi 0, %s678
      %s696 = sphi 0, %s696
      %s698 = sphi 0, %s696
      %s699 = sphi 0, %s698
      %s713 = sphi 0, %s699
      %s717 = sphi 0, %s717
      %s719 = sphi 0, %s717
      %s720 = sphi 0, %s719
      %s734 = sphi 0, %s720
      %s740 = sphi 0, %s742
      %s743 = sphi 0, %s740
      %s744 = sphi 0, %s743
      %s760 = sphi 0, %s744
      %s766 = sphi 0, %s768
      %s769 = sphi 0, %s766
      %s770 = sphi 0, %s769
      %s786 = sphi 0, %s770
    $region4: #{tpu_custom_call.1} parent=1 // loop_header_branch
      %93 = sbr.rel (%p91) target = $region8
    $region5: #{tpu_custom_call.1} parent=1 // loop_body
      %s95 = ssub.s32 %s90, 1
      %s96 = ssub.s32 %s90, 2
      %s97 = sadd.s32 %s90, 1
      %s98 = ssub.s32 %s90, %s97
      %p99 = scmp.eq.s32.totalorder %s98, 0
      %s101 = sadd.s32 %s100, 1
      %s102 = scalar_select %p99, %s100, %s101
      %p105 = pneg %p99
      %p106 = scmp.eq.s32.totalorder %s90, 1
      %p107 = por %p105, %p106
      %p108 = scmp.ne.s32.totalorder %s100, %s103
      %p109 = scmp.eq.s32.totalorder %s90, 0
      %p110 = por %p108, %p109
      %p111 = scmp.ne.s32.totalorder %s100, %s103
      %p112 = scmp.eq.s32.totalorder %s95, 1
      %p113 = por %p111, %p112
      %p114 = scmp.ne.s32.totalorder %s103, %s104
      %p115 = scmp.eq.s32.totalorder %s95, 0
      %p116 = por %p114, %p115
      %p117 = scmp.ne.s32.totalorder %s103, %s104
      %p118 = scmp.eq.s32.totalorder %s96, 1
      %p119 = por %p117, %p118
      %p121 = scmp.ne.s32.totalorder %s104, %s120
      %p122 = scmp.eq.s32.totalorder %s96, 0
      %p123 = por %p121, %p122
      %s124 = ssub.s32 %s90, %s97
      %p125 = scmp.eq.s32.totalorder %s124, 0
      %s127 = sadd.s32 %s126, 1
      %s128 = scalar_select %p125, %s126, %s127
      %p131 = pneg %p125
      %p132 = scmp.eq.s32.totalorder %s90, 1
      %p133 = por %p131, %p132
      %p134 = scmp.ne.s32.totalorder %s126, %s129
      %p135 = scmp.eq.s32.totalorder %s90, 0
      %p136 = por %p134, %p135
      %p137 = scmp.ne.s32.totalorder %s126, %s129
      %p138 = scmp.eq.s32.totalorder %s95, 1
      %p139 = por %p137, %p138
      %p140 = scmp.ne.s32.totalorder %s129, %s130
      %p141 = scmp.eq.s32.totalorder %s95, 0
      %p142 = por %p140, %p141
      %p143 = scmp.ne.s32.totalorder %s129, %s130
      %p144 = scmp.eq.s32.totalorder %s96, 1
      %p145 = por %p143, %p144
      %p147 = scmp.ne.s32.totalorder %s130, %s146
      %p148 = scmp.eq.s32.totalorder %s96, 0
      %p149 = por %p147, %p148
      %s151 = sadd.s32 %s150, 1
      %p154 = scmp.eq.s32.totalorder %s90, 1
      %p155 = scmp.ne.s32.totalorder %s150, %s152
      %p156 = scmp.eq.s32.totalorder %s90, 0
      %p157 = por %p155, %p156
      %p158 = scmp.ne.s32.totalorder %s150, %s152
      %p159 = scmp.eq.s32.totalorder %s95, 1
      %p160 = por %p158, %p159
      %p161 = scmp.ne.s32.totalorder %s152, %s153
      %p162 = scmp.eq.s32.totalorder %s95, 0
      %p163 = por %p161, %p162
      %p164 = scmp.ne.s32.totalorder %s152, %s153
      %p165 = scmp.eq.s32.totalorder %s96, 1
      %p166 = por %p164, %p165
      %p168 = scmp.ne.s32.totalorder %s153, %s167
      %p169 = scmp.eq.s32.totalorder %s96, 0
      %p170 = por %p168, %p169
      %s172 = sadd.s32 %s171, 1
      %p175 = scmp.eq.s32.totalorder %s90, 1
      %p176 = scmp.ne.s32.totalorder %s171, %s173
      %p177 = scmp.eq.s32.totalorder %s90, 0
      %p178 = por %p176, %p177
      %p179 = scmp.ne.s32.totalorder %s171, %s173
      %p180 = scmp.eq.s32.totalorder %s95, 1
      %p181 = por %p179, %p180
      %p182 = scmp.ne.s32.totalorder %s173, %s174
      %p183 = scmp.eq.s32.totalorder %s95, 0
      %p184 = por %p182, %p183
      %p185 = scmp.ne.s32.totalorder %s173, %s174
      %p186 = scmp.eq.s32.totalorder %s96, 1
      %p187 = por %p185, %p186
      %p189 = scmp.ne.s32.totalorder %s174, %s188
      %p190 = scmp.eq.s32.totalorder %s96, 0
      %p191 = por %p189, %p190
      %s193 = sadd.s32 %s192, 1
      %p196 = scmp.eq.s32.totalorder %s90, 1
      %p197 = scmp.ne.s32.totalorder %s192, %s194
      %p198 = scmp.eq.s32.totalorder %s90, 0
      %p199 = por %p197, %p198
      %p200 = scmp.ne.s32.totalorder %s192, %s194
      %p201 = scmp.eq.s32.totalorder %s95, 1
      %p202 = por %p200, %p201
      %p203 = scmp.ne.s32.totalorder %s194, %s195
      %p204 = scmp.eq.s32.totalorder %s95, 0
      %p205 = por %p203, %p204
      %p206 = scmp.ne.s32.totalorder %s194, %s195
      %p207 = scmp.eq.s32.totalorder %s96, 1
      %p208 = por %p206, %p207
      %p210 = scmp.ne.s32.totalorder %s195, %s209
      %p211 = scmp.eq.s32.totalorder %s96, 0
      %p212 = por %p210, %p211
      %s214 = sadd.s32 %s213, 1
      %p217 = scmp.eq.s32.totalorder %s90, 1
      %p218 = scmp.ne.s32.totalorder %s213, %s215
      %p219 = scmp.eq.s32.totalorder %s90, 0
      %p220 = por %p218, %p219
      %p221 = scmp.ne.s32.totalorder %s213, %s215
      %p222 = scmp.eq.s32.totalorder %s95, 1
      %p223 = por %p221, %p222
      %p224 = scmp.ne.s32.totalorder %s215, %s216
      %p225 = scmp.eq.s32.totalorder %s95, 0
      %p226 = por %p224, %p225
      %p227 = scmp.ne.s32.totalorder %s215, %s216
      %p228 = scmp.eq.s32.totalorder %s96, 1
      %p229 = por %p227, %p228
      %p231 = scmp.ne.s32.totalorder %s216, %s230
      %p232 = scmp.eq.s32.totalorder %s96, 0
      %p233 = por %p231, %p232
      %s235 = sadd.s32 %s234, 1
      %p238 = scmp.eq.s32.totalorder %s90, 1
      %p239 = scmp.ne.s32.totalorder %s234, %s236
      %p240 = scmp.eq.s32.totalorder %s90, 0
      %p241 = por %p239, %p240
      %p242 = scmp.ne.s32.totalorder %s234, %s236
      %p243 = scmp.eq.s32.totalorder %s95, 1
      %p244 = por %p242, %p243
      %p245 = scmp.ne.s32.totalorder %s236, %s237
      %p246 = scmp.eq.s32.totalorder %s95, 0
      %p247 = por %p245, %p246
      %p248 = scmp.ne.s32.totalorder %s236, %s237
      %p249 = scmp.eq.s32.totalorder %s96, 1
      %p250 = por %p248, %p249
      %p252 = scmp.ne.s32.totalorder %s237, %s251
      %p253 = scmp.eq.s32.totalorder %s96, 0
      %p254 = por %p252, %p253
      %s256 = sadd.s32 %s255, 1
      %p259 = scmp.eq.s32.totalorder %s90, 1
      %p260 = scmp.ne.s32.totalorder %s255, %s257
      %p261 = scmp.eq.s32.totalorder %s90, 0
      %p262 = por %p260, %p261
      %p263 = scmp.ne.s32.totalorder %s255, %s257
      %p264 = scmp.eq.s32.totalorder %s95, 1
      %p265 = por %p263, %p264
      %p266 = scmp.ne.s32.totalorder %s257, %s258
      %p267 = scmp.eq.s32.totalorder %s95, 0
      %p268 = por %p266, %p267
      %p269 = scmp.ne.s32.totalorder %s257, %s258
      %p270 = scmp.eq.s32.totalorder %s96, 1
      %p271 = por %p269, %p270
      %p273 = scmp.ne.s32.totalorder %s258, %s272
      %p274 = scmp.eq.s32.totalorder %s96, 0
      %p275 = por %p273, %p274
      %s277 = sadd.s32 %s276, 1
      %p280 = scmp.eq.s32.totalorder %s90, 1
      %p281 = scmp.ne.s32.totalorder %s276, %s278
      %p282 = scmp.eq.s32.totalorder %s90, 0
      %p283 = por %p281, %p282
      %p284 = scmp.ne.s32.totalorder %s276, %s278
      %p285 = scmp.eq.s32.totalorder %s95, 1
      %p286 = por %p284, %p285
      %p287 = scmp.ne.s32.totalorder %s278, %s279
      %p288 = scmp.eq.s32.totalorder %s95, 0
      %p289 = por %p287, %p288
      %p290 = scmp.ne.s32.totalorder %s278, %s279
      %p291 = scmp.eq.s32.totalorder %s96, 1
      %p292 = por %p290, %p291
      %p294 = scmp.ne.s32.totalorder %s279, %s293
      %p295 = scmp.eq.s32.totalorder %s96, 0
      %p296 = por %p294, %p295
      %s298 = sadd.s32 %s297, 1
      %p301 = scmp.eq.s32.totalorder %s90, 1
      %p302 = scmp.ne.s32.totalorder %s297, %s299
      %p303 = scmp.eq.s32.totalorder %s90, 0
      %p304 = por %p302, %p303
      %p305 = scmp.ne.s32.totalorder %s297, %s299
      %p306 = scmp.eq.s32.totalorder %s95, 1
      %p307 = por %p305, %p306
      %p308 = scmp.ne.s32.totalorder %s299, %s300
      %p309 = scmp.eq.s32.totalorder %s95, 0
      %p310 = por %p308, %p309
      %p311 = scmp.ne.s32.totalorder %s299, %s300
      %p312 = scmp.eq.s32.totalorder %s96, 1
      %p313 = por %p311, %p312
      %p315 = scmp.ne.s32.totalorder %s300, %s314
      %p316 = scmp.eq.s32.totalorder %s96, 0
      %p317 = por %p315, %p316
      %s319 = sadd.s32 %s318, 1
      %p322 = scmp.eq.s32.totalorder %s90, 1
      %p323 = scmp.ne.s32.totalorder %s318, %s320
      %p324 = scmp.eq.s32.totalorder %s90, 0
      %p325 = por %p323, %p324
      %p326 = scmp.ne.s32.totalorder %s318, %s320
      %p327 = scmp.eq.s32.totalorder %s95, 1
      %p328 = por %p326, %p327
      %p329 = scmp.ne.s32.totalorder %s320, %s321
      %p330 = scmp.eq.s32.totalorder %s95, 0
      %p331 = por %p329, %p330
      %p332 = scmp.ne.s32.totalorder %s320, %s321
      %p333 = scmp.eq.s32.totalorder %s96, 1
      %p334 = por %p332, %p333
      %p336 = scmp.ne.s32.totalorder %s321, %s335
      %p337 = scmp.eq.s32.totalorder %s96, 0
      %p338 = por %p336, %p337
      %s340 = sadd.s32 %s339, 1
      %p343 = scmp.eq.s32.totalorder %s90, 1
      %p344 = scmp.ne.s32.totalorder %s339, %s341
      %p345 = scmp.eq.s32.totalorder %s90, 0
      %p346 = por %p344, %p345
      %p347 = scmp.ne.s32.totalorder %s339, %s341
      %p348 = scmp.eq.s32.totalorder %s95, 1
      %p349 = por %p347, %p348
      %p350 = scmp.ne.s32.totalorder %s341, %s342
      %p351 = scmp.eq.s32.totalorder %s95, 0
      %p352 = por %p350, %p351
      %p353 = scmp.ne.s32.totalorder %s341, %s342
      %p354 = scmp.eq.s32.totalorder %s96, 1
      %p355 = por %p353, %p354
      %p357 = scmp.ne.s32.totalorder %s342, %s356
      %p358 = scmp.eq.s32.totalorder %s96, 0
      %p359 = por %p357, %p358
      %s361 = sadd.s32 %s360, 1
      %p364 = scmp.eq.s32.totalorder %s90, 1
      %p365 = scmp.ne.s32.totalorder %s360, %s362
      %p366 = scmp.eq.s32.totalorder %s90, 0
      %p367 = por %p365, %p366
      %p368 = scmp.ne.s32.totalorder %s360, %s362
      %p369 = scmp.eq.s32.totalorder %s95, 1
      %p370 = por %p368, %p369
      %p371 = scmp.ne.s32.totalorder %s362, %s363
      %p372 = scmp.eq.s32.totalorder %s95, 0
      %p373 = por %p371, %p372
      %p374 = scmp.ne.s32.totalorder %s362, %s363
      %p375 = scmp.eq.s32.totalorder %s96, 1
      %p376 = por %p374, %p375
      %p378 = scmp.ne.s32.totalorder %s363, %s377
      %p379 = scmp.eq.s32.totalorder %s96, 0
      %p380 = por %p378, %p379
      %s382 = sadd.s32 %s381, 1
      %p385 = scmp.eq.s32.totalorder %s90, 1
      %p386 = scmp.ne.s32.totalorder %s381, %s383
      %p387 = scmp.eq.s32.totalorder %s90, 0
      %p388 = por %p386, %p387
      %p389 = scmp.ne.s32.totalorder %s381, %s383
      %p390 = scmp.eq.s32.totalorder %s95, 1
      %p391 = por %p389, %p390
      %p392 = scmp.ne.s32.totalorder %s383, %s384
      %p393 = scmp.eq.s32.totalorder %s95, 0
      %p394 = por %p392, %p393
      %p395 = scmp.ne.s32.totalorder %s383, %s384
      %p396 = scmp.eq.s32.totalorder %s96, 1
      %p397 = por %p395, %p396
      %p399 = scmp.ne.s32.totalorder %s384, %s398
      %p400 = scmp.eq.s32.totalorder %s96, 0
      %p401 = por %p399, %p400
      %s403 = sadd.s32 %s402, 1
      %p406 = scmp.eq.s32.totalorder %s90, 1
      %p407 = scmp.ne.s32.totalorder %s402, %s404
      %p408 = scmp.eq.s32.totalorder %s90, 0
      %p409 = por %p407, %p408
      %p410 = scmp.ne.s32.totalorder %s402, %s404
      %p411 = scmp.eq.s32.totalorder %s95, 1
      %p412 = por %p410, %p411
      %p413 = scmp.ne.s32.totalorder %s404, %s405
      %p414 = scmp.eq.s32.totalorder %s95, 0
      %p415 = por %p413, %p414
      %p416 = scmp.ne.s32.totalorder %s404, %s405
      %p417 = scmp.eq.s32.totalorder %s96, 1
      %p418 = por %p416, %p417
      %p420 = scmp.ne.s32.totalorder %s405, %s419
      %p421 = scmp.eq.s32.totalorder %s96, 0
      %p422 = por %p420, %p421
      %s424 = sadd.s32 %s423, 1
      %p427 = scmp.eq.s32.totalorder %s90, 1
      %p428 = scmp.ne.s32.totalorder %s423, %s425
      %p429 = scmp.eq.s32.totalorder %s90, 0
      %p430 = por %p428, %p429
      %p431 = scmp.ne.s32.totalorder %s423, %s425
      %p432 = scmp.eq.s32.totalorder %s95, 1
      %p433 = por %p431, %p432
      %p434 = scmp.ne.s32.totalorder %s425, %s426
      %p435 = scmp.eq.s32.totalorder %s95, 0
      %p436 = por %p434, %p435
      %p437 = scmp.ne.s32.totalorder %s425, %s426
      %p438 = scmp.eq.s32.totalorder %s96, 1
      %p439 = por %p437, %p438
      %p441 = scmp.ne.s32.totalorder %s426, %s440
      %p442 = scmp.eq.s32.totalorder %s96, 0
      %p443 = por %p441, %p442
      %s445 = sadd.s32 %s444, 1
      %p448 = scmp.eq.s32.totalorder %s90, 1
      %p449 = scmp.ne.s32.totalorder %s444, %s446
      %p450 = scmp.eq.s32.totalorder %s90, 0
      %p451 = por %p449, %p450
      %p452 = scmp.ne.s32.totalorder %s444, %s446
      %p453 = scmp.eq.s32.totalorder %s95, 1
      %p454 = por %p452, %p453
      %p455 = scmp.ne.s32.totalorder %s446, %s447
      %p456 = scmp.eq.s32.totalorder %s95, 0
      %p457 = por %p455, %p456
      %p458 = scmp.ne.s32.totalorder %s446, %s447
      %p459 = scmp.eq.s32.totalorder %s96, 1
      %p460 = por %p458, %p459
      %p462 = scmp.ne.s32.totalorder %s447, %s461
      %p463 = scmp.eq.s32.totalorder %s96, 0
      %p464 = por %p462, %p463
      %s466 = sadd.s32 %s465, 1
      %p469 = scmp.eq.s32.totalorder %s90, 1
      %p470 = scmp.ne.s32.totalorder %s465, %s467
      %p471 = scmp.eq.s32.totalorder %s90, 0
      %p472 = por %p470, %p471
      %p473 = scmp.ne.s32.totalorder %s465, %s467
      %p474 = scmp.eq.s32.totalorder %s95, 1
      %p475 = por %p473, %p474
      %p476 = scmp.ne.s32.totalorder %s467, %s468
      %p477 = scmp.eq.s32.totalorder %s95, 0
      %p478 = por %p476, %p477
      %p479 = scmp.ne.s32.totalorder %s467, %s468
      %p480 = scmp.eq.s32.totalorder %s96, 1
      %p481 = por %p479, %p480
      %p483 = scmp.ne.s32.totalorder %s468, %s482
      %p484 = scmp.eq.s32.totalorder %s96, 0
      %p485 = por %p483, %p484
      %s487 = sadd.s32 %s486, 1
      %p490 = scmp.eq.s32.totalorder %s90, 1
      %p491 = scmp.ne.s32.totalorder %s486, %s488
      %p492 = scmp.eq.s32.totalorder %s90, 0
      %p493 = por %p491, %p492
      %p494 = scmp.ne.s32.totalorder %s486, %s488
      %p495 = scmp.eq.s32.totalorder %s95, 1
      %p496 = por %p494, %p495
      %p497 = scmp.ne.s32.totalorder %s488, %s489
      %p498 = scmp.eq.s32.totalorder %s95, 0
      %p499 = por %p497, %p498
      %p500 = scmp.ne.s32.totalorder %s488, %s489
      %p501 = scmp.eq.s32.totalorder %s96, 1
      %p502 = por %p500, %p501
      %p504 = scmp.ne.s32.totalorder %s489, %s503
      %p505 = scmp.eq.s32.totalorder %s96, 0
      %p506 = por %p504, %p505
      %s508 = sadd.s32 %s507, 1
      %p511 = scmp.eq.s32.totalorder %s90, 1
      %p512 = scmp.ne.s32.totalorder %s507, %s509
      %p513 = scmp.eq.s32.totalorder %s90, 0
      %p514 = por %p512, %p513
      %p515 = scmp.ne.s32.totalorder %s507, %s509
      %p516 = scmp.eq.s32.totalorder %s95, 1
      %p517 = por %p515, %p516
      %p518 = scmp.ne.s32.totalorder %s509, %s510
      %p519 = scmp.eq.s32.totalorder %s95, 0
      %p520 = por %p518, %p519
      %p521 = scmp.ne.s32.totalorder %s509, %s510
      %p522 = scmp.eq.s32.totalorder %s96, 1
      %p523 = por %p521, %p522
      %p525 = scmp.ne.s32.totalorder %s510, %s524
      %p526 = scmp.eq.s32.totalorder %s96, 0
      %p527 = por %p525, %p526
      %s529 = sadd.s32 %s528, 1
      %p532 = scmp.eq.s32.totalorder %s90, 1
      %p533 = scmp.ne.s32.totalorder %s528, %s530
      %p534 = scmp.eq.s32.totalorder %s90, 0
      %p535 = por %p533, %p534
      %p536 = scmp.ne.s32.totalorder %s528, %s530
      %p537 = scmp.eq.s32.totalorder %s95, 1
      %p538 = por %p536, %p537
      %p539 = scmp.ne.s32.totalorder %s530, %s531
      %p540 = scmp.eq.s32.totalorder %s95, 0
      %p541 = por %p539, %p540
      %p542 = scmp.ne.s32.totalorder %s530, %s531
      %p543 = scmp.eq.s32.totalorder %s96, 1
      %p544 = por %p542, %p543
      %p546 = scmp.ne.s32.totalorder %s531, %s545
      %p547 = scmp.eq.s32.totalorder %s96, 0
      %p548 = por %p546, %p547
      %s550 = sadd.s32 %s549, 1
      %p553 = scmp.eq.s32.totalorder %s90, 1
      %p554 = scmp.ne.s32.totalorder %s549, %s551
      %p555 = scmp.eq.s32.totalorder %s90, 0
      %p556 = por %p554, %p555
      %p557 = scmp.ne.s32.totalorder %s549, %s551
      %p558 = scmp.eq.s32.totalorder %s95, 1
      %p559 = por %p557, %p558
      %p560 = scmp.ne.s32.totalorder %s551, %s552
      %p561 = scmp.eq.s32.totalorder %s95, 0
      %p562 = por %p560, %p561
      %p563 = scmp.ne.s32.totalorder %s551, %s552
      %p564 = scmp.eq.s32.totalorder %s96, 1
      %p565 = por %p563, %p564
      %p567 = scmp.ne.s32.totalorder %s552, %s566
      %p568 = scmp.eq.s32.totalorder %s96, 0
      %p569 = por %p567, %p568
      %s571 = sadd.s32 %s570, 1
      %p574 = scmp.eq.s32.totalorder %s90, 1
      %p575 = scmp.ne.s32.totalorder %s570, %s572
      %p576 = scmp.eq.s32.totalorder %s90, 0
      %p577 = por %p575, %p576
      %p578 = scmp.ne.s32.totalorder %s570, %s572
      %p579 = scmp.eq.s32.totalorder %s95, 1
      %p580 = por %p578, %p579
      %p581 = scmp.ne.s32.totalorder %s572, %s573
      %p582 = scmp.eq.s32.totalorder %s95, 0
      %p583 = por %p581, %p582
      %p584 = scmp.ne.s32.totalorder %s572, %s573
      %p585 = scmp.eq.s32.totalorder %s96, 1
      %p586 = por %p584, %p585
      %p588 = scmp.ne.s32.totalorder %s573, %s587
      %p589 = scmp.eq.s32.totalorder %s96, 0
      %p590 = por %p588, %p589
      %s592 = sadd.s32 %s591, 1
      %p595 = scmp.eq.s32.totalorder %s90, 1
      %p596 = scmp.ne.s32.totalorder %s591, %s593
      %p597 = scmp.eq.s32.totalorder %s90, 0
      %p598 = por %p596, %p597
      %p599 = scmp.ne.s32.totalorder %s591, %s593
      %p600 = scmp.eq.s32.totalorder %s95, 1
      %p601 = por %p599, %p600
      %p602 = scmp.ne.s32.totalorder %s593, %s594
      %p603 = scmp.eq.s32.totalorder %s95, 0
      %p604 = por %p602, %p603
      %p605 = scmp.ne.s32.totalorder %s593, %s594
      %p606 = scmp.eq.s32.totalorder %s96, 1
      %p607 = por %p605, %p606
      %p609 = scmp.ne.s32.totalorder %s594, %s608
      %p610 = scmp.eq.s32.totalorder %s96, 0
      %p611 = por %p609, %p610
      %s613 = sadd.s32 %s612, 1
      %p616 = scmp.eq.s32.totalorder %s90, 1
      %p617 = scmp.ne.s32.totalorder %s612, %s614
      %p618 = scmp.eq.s32.totalorder %s90, 0
      %p619 = por %p617, %p618
      %p620 = scmp.ne.s32.totalorder %s612, %s614
      %p621 = scmp.eq.s32.totalorder %s95, 1
      %p622 = por %p620, %p621
      %p623 = scmp.ne.s32.totalorder %s614, %s615
      %p624 = scmp.eq.s32.totalorder %s95, 0
      %p625 = por %p623, %p624
      %p626 = scmp.ne.s32.totalorder %s614, %s615
      %p627 = scmp.eq.s32.totalorder %s96, 1
      %p628 = por %p626, %p627
      %p630 = scmp.ne.s32.totalorder %s615, %s629
      %p631 = scmp.eq.s32.totalorder %s96, 0
      %p632 = por %p630, %p631
      %s634 = sadd.s32 %s633, 1
      %p637 = scmp.eq.s32.totalorder %s90, 1
      %p638 = scmp.ne.s32.totalorder %s633, %s635
      %p639 = scmp.eq.s32.totalorder %s90, 0
      %p640 = por %p638, %p639
      %p641 = scmp.ne.s32.totalorder %s633, %s635
      %p642 = scmp.eq.s32.totalorder %s95, 1
      %p643 = por %p641, %p642
      %p644 = scmp.ne.s32.totalorder %s635, %s636
      %p645 = scmp.eq.s32.totalorder %s95, 0
      %p646 = por %p644, %p645
      %p647 = scmp.ne.s32.totalorder %s635, %s636
      %p648 = scmp.eq.s32.totalorder %s96, 1
      %p649 = por %p647, %p648
      %p651 = scmp.ne.s32.totalorder %s636, %s650
      %p652 = scmp.eq.s32.totalorder %s96, 0
      %p653 = por %p651, %p652
      %s655 = sadd.s32 %s654, 1
      %p658 = scmp.eq.s32.totalorder %s90, 1
      %p659 = scmp.ne.s32.totalorder %s654, %s656
      %p660 = scmp.eq.s32.totalorder %s90, 0
      %p661 = por %p659, %p660
      %p662 = scmp.ne.s32.totalorder %s654, %s656
      %p663 = scmp.eq.s32.totalorder %s95, 1
      %p664 = por %p662, %p663
      %p665 = scmp.ne.s32.totalorder %s656, %s657
      %p666 = scmp.eq.s32.totalorder %s95, 0
      %p667 = por %p665, %p666
      %p668 = scmp.ne.s32.totalorder %s656, %s657
      %p669 = scmp.eq.s32.totalorder %s96, 1
      %p670 = por %p668, %p669
      %p672 = scmp.ne.s32.totalorder %s657, %s671
      %p673 = scmp.eq.s32.totalorder %s96, 0
      %p674 = por %p672, %p673
      %s676 = sadd.s32 %s675, 1
      %p679 = scmp.eq.s32.totalorder %s90, 1
      %p680 = scmp.ne.s32.totalorder %s675, %s677
      %p681 = scmp.eq.s32.totalorder %s90, 0
      %p682 = por %p680, %p681
      %p683 = scmp.ne.s32.totalorder %s675, %s677
      %p684 = scmp.eq.s32.totalorder %s95, 1
      %p685 = por %p683, %p684
      %p686 = scmp.ne.s32.totalorder %s677, %s678
      %p687 = scmp.eq.s32.totalorder %s95, 0
      %p688 = por %p686, %p687
      %p689 = scmp.ne.s32.totalorder %s677, %s678
      %p690 = scmp.eq.s32.totalorder %s96, 1
      %p691 = por %p689, %p690
      %p693 = scmp.ne.s32.totalorder %s678, %s692
      %p694 = scmp.eq.s32.totalorder %s96, 0
      %p695 = por %p693, %p694
      %s697 = sadd.s32 %s696, 1
      %p700 = scmp.eq.s32.totalorder %s90, 1
      %p701 = scmp.ne.s32.totalorder %s696, %s698
      %p702 = scmp.eq.s32.totalorder %s90, 0
      %p703 = por %p701, %p702
      %p704 = scmp.ne.s32.totalorder %s696, %s698
      %p705 = scmp.eq.s32.totalorder %s95, 1
      %p706 = por %p704, %p705
      %p707 = scmp.ne.s32.totalorder %s698, %s699
      %p708 = scmp.eq.s32.totalorder %s95, 0
      %p709 = por %p707, %p708
      %p710 = scmp.ne.s32.totalorder %s698, %s699
      %p711 = scmp.eq.s32.totalorder %s96, 1
      %p712 = por %p710, %p711
      %p714 = scmp.ne.s32.totalorder %s699, %s713
      %p715 = scmp.eq.s32.totalorder %s96, 0
      %p716 = por %p714, %p715
      %s718 = sadd.s32 %s717, 1
      %p721 = scmp.eq.s32.totalorder %s90, 1
      %p722 = scmp.ne.s32.totalorder %s717, %s719
      %p723 = scmp.eq.s32.totalorder %s90, 0
      %p724 = por %p722, %p723
      %p725 = scmp.ne.s32.totalorder %s717, %s719
      %p726 = scmp.eq.s32.totalorder %s95, 1
      %p727 = por %p725, %p726
      %p728 = scmp.ne.s32.totalorder %s719, %s720
      %p729 = scmp.eq.s32.totalorder %s95, 0
      %p730 = por %p728, %p729
      %p731 = scmp.ne.s32.totalorder %s719, %s720
      %p732 = scmp.eq.s32.totalorder %s96, 1
      %p733 = por %p731, %p732
      %p735 = scmp.ne.s32.totalorder %s720, %s734
      %p736 = scmp.eq.s32.totalorder %s96, 0
      %p737 = por %p735, %p736
      %s738 = ssub.s32 %s90, %s97
      %p739 = scmp.eq.s32.totalorder %s738, 0
      %s741 = sadd.s32 %s740, 1
      %s742 = scalar_select %p739, %s740, %s741
      %p745 = pneg %p739
      %p746 = scmp.eq.s32.totalorder %s90, 1
      %p747 = por %p745, %p746
      %p748 = scmp.ne.s32.totalorder %s740, %s743
      %p749 = scmp.eq.s32.totalorder %s90, 0
      %p750 = por %p748, %p749
      %p751 = scmp.ne.s32.totalorder %s740, %s743
      %p752 = scmp.eq.s32.totalorder %s95, 1
      %p753 = por %p751, %p752
      %p754 = scmp.ne.s32.totalorder %s743, %s744
      %p755 = scmp.eq.s32.totalorder %s95, 0
      %p756 = por %p754, %p755
      %p757 = scmp.ne.s32.totalorder %s743, %s744
      %p758 = scmp.eq.s32.totalorder %s96, 1
      %p759 = por %p757, %p758
      %p761 = scmp.ne.s32.totalorder %s744, %s760
      %p762 = scmp.eq.s32.totalorder %s96, 0
      %p763 = por %p761, %p762
      %s764 = ssub.s32 %s90, %s97
      %p765 = scmp.eq.s32.totalorder %s764, 0
      %s767 = sadd.s32 %s766, 1
      %s768 = scalar_select %p765, %s766, %s767
      %p771 = pneg %p765
      %p772 = scmp.eq.s32.totalorder %s90, 1
      %p773 = por %p771, %p772
      %p774 = scmp.ne.s32.totalorder %s766, %s769
      %p775 = scmp.eq.s32.totalorder %s90, 0
      %p776 = por %p774, %p775
      %p777 = scmp.ne.s32.totalorder %s766, %s769
      %p778 = scmp.eq.s32.totalorder %s95, 1
      %p779 = por %p777, %p778
      %p780 = scmp.ne.s32.totalorder %s769, %s770
      %p781 = scmp.eq.s32.totalorder %s95, 0
      %p782 = por %p780, %p781
      %p783 = scmp.ne.s32.totalorder %s769, %s770
      %p784 = scmp.eq.s32.totalorder %s96, 1
      %p785 = por %p783, %p784
      %p787 = scmp.ne.s32.totalorder %s770, %s786
      %p788 = scmp.eq.s32.totalorder %s96, 0
      %p789 = por %p787, %p788
      %p790 = scmp.le.s32.totalorder 1, %s90
      %p791 = scmp.lt.s32.totalorder %s90, 3
      %p792 = pnand %p790, %p791
      %p793 = pneg %p792
      // Predicated region
      $region9: #{tpu_custom_call.1} parent=5 // pred_check
        _
      $region10: #{tpu_custom_call.1} parent=5 // pred_check_branch
        %795 = sbr.rel (%p792) target = $region12
      $region11: #{tpu_custom_call.1} parent=5 // pred_region
        %s796 = ssub.s32 %s90, 1
        // Predicated region
        $region13: #{tpu_custom_call.1} parent=11 // pred_check
          %p797 = pneg %p163
        $region14: #{tpu_custom_call.1} parent=11 // pred_check_branch
          %799 = sbr.rel (%p797) target = $region16
        $region15: #{tpu_custom_call.1} parent=11 // pred_region
          %s801 = ssub.s32 1024, 1024
          %802 = vsyncadd [#allocation6], %s801
          %s803 = sshll.u32 [#allocation7], 4
          %s804 = int_to_ptr.vmem [resolvable:$true] %s803
          %809 = dma.hbm_to_vmem [thread:$0]  %s5, 1024, %s804, [#allocation6], 64, 64, 4
        $region16: #{tpu_custom_call.1} parent=11 // pred_fallthru
          _
        // Predicated region
        $region17: #{tpu_custom_call.1} parent=11 // pred_check
          %p810 = pneg %p184
        $region18: #{tpu_custom_call.1} parent=11 // pred_check_branch
          %812 = sbr.rel (%p810) target = $region20
        $region19: #{tpu_custom_call.1} parent=11 // pred_region
          _
        $region20: #{tpu_custom_call.1} parent=11 // pred_fallthru
          _
        // Predicated region
        $region21: #{tpu_custom_call.1} parent=11 // pred_check
          %p813 = pneg %p205
        $region22: #{tpu_custom_call.1} parent=11 // pred_check_branch
          %815 = sbr.rel (%p813) target = $region24
        $region23: #{tpu_custom_call.1} parent=11 // pred_region
          %s817 = ssub.s32 2048, 2048
          %818 = vsyncadd [#allocation9], %s817
          %s819 = sshll.u32 [#allocation8], 4
          %s820 = int_to_ptr.vmem [resolvable:$true] %s819
          %825 = dma.hbm_to_vmem [thread:$0]  %s9, 2048, %s820, [#allocation9], 128, 128, 8
        $region24: #{tpu_custom_call.1} parent=11 // pred_fallthru
          _
        // Predicated region
        $region25: #{tpu_custom_call.1} parent=11 // pred_check
          %p826 = pneg %p226
        $region26: #{tpu_custom_call.1} parent=11 // pred_check_branch
          %828 = sbr.rel (%p826) target = $region28
        $region27: #{tpu_custom_call.1} parent=11 // pred_region
          _
        $region28: #{tpu_custom_call.1} parent=11 // pred_fallthru
          _
        // Predicated region
        $region29: #{tpu_custom_call.1} parent=11 // pred_check
          %p829 = pneg %p247
        $region30: #{tpu_custom_call.1} parent=11 // pred_check_branch
          %831 = sbr.rel (%p829) target = $region32
        $region31: #{tpu_custom_call.1} parent=11 // pred_region
          %s833 = ssub.s32 1024, 1024
          %834 = vsyncadd [#allocation9], %s833
          %s835 = sshll.u32 [#allocation10], 4
          %s836 = int_to_ptr.vmem [resolvable:$true] %s835
          %841 = dma.hbm_to_vmem [thread:$0]  %s13, 1024, %s836, [#allocation9], 64, 64, 4
        $region32: #{tpu_custom_call.1} parent=11 // pred_fallthru
          _
        // Predicated region
        $region33: #{tpu_custom_call.1} parent=11 // pred_check
          %p842 = pneg %p268
        $region34: #{tpu_custom_call.1} parent=11 // pred_check_branch
          %844 = sbr.rel (%p842) target = $region36
        $region35: #{tpu_custom_call.1} parent=11 // pred_region
          %s846 = ssub.s32 16, 16
          %847 = vsyncadd [#allocation12], %s846
          %s849 = sshll.u32 [#allocation11], 4
          %s850 = int_to_ptr.vmem [resolvable:$true] %s849
          %852 = dma.hbm_to_vmem [thread:$0]  %s15, 16, %s850, [#allocation12]
        $region36: #{tpu_custom_call.1} parent=11 // pred_fallthru
          _
        // Predicated region
        $region37: #{tpu_custom_call.1} parent=11 // pred_check
          %p853 = pneg %p289
        $region38: #{tpu_custom_call.1} parent=11 // pred_check_branch
          %855 = sbr.rel (%p853) target = $region40
        $region39: #{tpu_custom_call.1} parent=11 // pred_region
          %s857 = ssub.s32 16, 16
          %858 = vsyncadd [#allocation12], %s857
          %s860 = sshll.u32 [#allocation13], 4
          %s861 = int_to_ptr.vmem [resolvable:$true] %s860
          %863 = dma.hbm_to_vmem [thread:$0]  %s17, 16, %s861, [#allocation12]
        $region40: #{tpu_custom_call.1} parent=11 // pred_fallthru
          _
        // Predicated region
        $region41: #{tpu_custom_call.1} parent=11 // pred_check
          %p864 = pneg %p310
        $region42: #{tpu_custom_call.1} parent=11 // pred_check_branch
          %866 = sbr.rel (%p864) target = $region44
        $region43: #{tpu_custom_call.1} parent=11 // pred_region
          %s868 = ssub.s32 16, 16
          %869 = vsyncadd [#allocation15], %s868
          %s871 = sshll.u32 [#allocation14], 4
          %s872 = int_to_ptr.vmem [resolvable:$true] %s871
          %874 = dma.hbm_to_vmem [thread:$0]  %s19, 16, %s872, [#allocation15]
        $region44: #{tpu_custom_call.1} parent=11 // pred_fallthru
          _
        // Predicated region
        $region45: #{tpu_custom_call.1} parent=11 // pred_check
          %p875 = pneg %p331
        $region46: #{tpu_custom_call.1} parent=11 // pred_check_branch
          %877 = sbr.rel (%p875) target = $region48
        $region47: #{tpu_custom_call.1} parent=11 // pred_region
          %s879 = ssub.s32 4096, 4096
          %880 = vsyncadd [#allocation15], %s879
          %s881 = sshll.u32 [#allocation16], 4
          %s882 = int_to_ptr.vmem [resolvable:$true] %s881
          %887 = dma.hbm_to_vmem [thread:$0]  %s21, 4096, %s882, [#allocation15], 256, 256, 16
        $region48: #{tpu_custom_call.1} parent=11 // pred_fallthru
          _
        // Predicated region
        $region49: #{tpu_custom_call.1} parent=11 // pred_check
          %p888 = pneg %p352
        $region50: #{tpu_custom_call.1} parent=11 // pred_check_branch
          %890 = sbr.rel (%p888) target = $region52
        $region51: #{tpu_custom_call.1} parent=11 // pred_region
          _
        $region52: #{tpu_custom_call.1} parent=11 // pred_fallthru
          _
        // Predicated region
        $region53: #{tpu_custom_call.1} parent=11 // pred_check
          %p891 = pneg %p373
        $region54: #{tpu_custom_call.1} parent=11 // pred_check_branch
          %893 = sbr.rel (%p891) target = $region56
        $region55: #{tpu_custom_call.1} parent=11 // pred_region
          %s895 = ssub.s32 4096, 4096
          %896 = vsyncadd [#allocation18], %s895
          %s897 = sshll.u32 [#allocation17], 4
          %s898 = int_to_ptr.vmem [resolvable:$true] %s897
          %903 = dma.hbm_to_vmem [thread:$0]  %s25, 4096, %s898, [#allocation18], 64, 64, 4
        $region56: #{tpu_custom_call.1} parent=11 // pred_fallthru
          _
        // Predicated region
        $region57: #{tpu_custom_call.1} parent=11 // pred_check
          %p904 = pneg %p394
        $region58: #{tpu_custom_call.1} parent=11 // pred_check_branch
          %906 = sbr.rel (%p904) target = $region60
        $region59: #{tpu_custom_call.1} parent=11 // pred_region
          %s908 = ssub.s32 16, 16
          %909 = vsyncadd [#allocation18], %s908
          %s911 = sshll.u32 [#allocation19], 4
          %s912 = int_to_ptr.vmem [resolvable:$true] %s911
          %914 = dma.hbm_to_vmem [thread:$0]  %s27, 16, %s912, [#allocation18]
        $region60: #{tpu_custom_call.1} parent=11 // pred_fallthru
          _
        // Predicated region
        $region61: #{tpu_custom_call.1} parent=11 // pred_check
          %p915 = pneg %p415
        $region62: #{tpu_custom_call.1} parent=11 // pred_check_branch
          %917 = sbr.rel (%p915) target = $region64
        $region63: #{tpu_custom_call.1} parent=11 // pred_region
          %s919 = ssub.s32 16, 16
          %920 = vsyncadd [#allocation21], %s919
          %s922 = sshll.u32 [#allocation20], 4
          %s923 = int_to_ptr.vmem [resolvable:$true] %s922
          %925 = dma.hbm_to_vmem [thread:$0]  %s29, 16, %s923, [#allocation21]
        $region64: #{tpu_custom_call.1} parent=11 // pred_fallthru
          _
        // Predicated region
        $region65: #{tpu_custom_call.1} parent=11 // pred_check
          %p926 = pneg %p436
        $region66: #{tpu_custom_call.1} parent=11 // pred_check_branch
          %928 = sbr.rel (%p926) target = $region68
        $region67: #{tpu_custom_call.1} parent=11 // pred_region
          %s930 = ssub.s32 16, 16
          %931 = vsyncadd [#allocation21], %s930
          %s933 = sshll.u32 [#allocation22], 4
          %s934 = int_to_ptr.vmem [resolvable:$true] %s933
          %936 = dma.hbm_to_vmem [thread:$0]  %s31, 16, %s934, [#allocation21]
        $region68: #{tpu_custom_call.1} parent=11 // pred_fallthru
          _
        // Predicated region
        $region69: #{tpu_custom_call.1} parent=11 // pred_check
          %p937 = pneg %p457
        $region70: #{tpu_custom_call.1} parent=11 // pred_check_branch
          %939 = sbr.rel (%p937) target = $region72
        $region71: #{tpu_custom_call.1} parent=11 // pred_region
          %s941 = ssub.s32 1024, 1024
          %942 = vsyncadd [#allocation24], %s941
          %s943 = sshll.u32 [#allocation23], 4
          %s944 = int_to_ptr.vmem [resolvable:$true] %s943
          %949 = dma.hbm_to_vmem [thread:$0]  %s33, 1024, %s944, [#allocation24], 64, 64, 4
        $region72: #{tpu_custom_call.1} parent=11 // pred_fallthru
          _
        // Predicated region
        $region73: #{tpu_custom_call.1} parent=11 // pred_check
          %p950 = pneg %p478
        $region74: #{tpu_custom_call.1} parent=11 // pred_check_branch
          %952 = sbr.rel (%p950) target = $region76
        $region75: #{tpu_custom_call.1} parent=11 // pred_region
          %s954 = ssub.s32 16, 16
          %955 = vsyncadd [#allocation24], %s954
          %s957 = sshll.u32 [#allocation25], 4
          %s958 = int_to_ptr.vmem [resolvable:$true] %s957
          %960 = dma.hbm_to_vmem [thread:$0]  %s35, 16, %s958, [#allocation24]
        $region76: #{tpu_custom_call.1} parent=11 // pred_fallthru
          _
        // Predicated region
        $region77: #{tpu_custom_call.1} parent=11 // pred_check
          %p961 = pneg %p499
        $region78: #{tpu_custom_call.1} parent=11 // pred_check_branch
          %963 = sbr.rel (%p961) target = $region80
        $region79: #{tpu_custom_call.1} parent=11 // pred_region
          %s965 = ssub.s32 2048, 2048
          %966 = vsyncadd [#allocation27], %s965
          %s967 = sshll.u32 [#allocation26], 4
          %s968 = int_to_ptr.vmem [resolvable:$true] %s967
          %973 = dma.hbm_to_vmem [thread:$0]  %s37, 2048, %s968, [#allocation27], 128, 128, 8
        $region80: #{tpu_custom_call.1} parent=11 // pred_fallthru
          _
        // Predicated region
        $region81: #{tpu_custom_call.1} parent=11 // pred_check
          %p974 = pneg %p520
        $region82: #{tpu_custom_call.1} parent=11 // pred_check_branch
          %976 = sbr.rel (%p974) target = $region84
        $region83: #{tpu_custom_call.1} parent=11 // pred_region
          %s978 = ssub.s32 32, 32
          %979 = vsyncadd [#allocation27], %s978
          %s981 = sshll.u32 [#allocation28], 4
          %s982 = int_to_ptr.vmem [resolvable:$true] %s981
          %984 = dma.hbm_to_vmem [thread:$0]  %s39, 32, %s982, [#allocation27]
        $region84: #{tpu_custom_call.1} parent=11 // pred_fallthru
          _
        // Predicated region
        $region85: #{tpu_custom_call.1} parent=11 // pred_check
          %p985 = pneg %p541
        $region86: #{tpu_custom_call.1} parent=11 // pred_check_branch
          %987 = sbr.rel (%p985) target = $region88
        $region87: #{tpu_custom_call.1} parent=11 // pred_region
          _
        $region88: #{tpu_custom_call.1} parent=11 // pred_fallthru
          _
        // Predicated region
        $region89: #{tpu_custom_call.1} parent=11 // pred_check
          %p988 = pneg %p562
        $region90: #{tpu_custom_call.1} parent=11 // pred_check_branch
          %990 = sbr.rel (%p988) target = $region92
        $region91: #{tpu_custom_call.1} parent=11 // pred_region
          _
        $region92: #{tpu_custom_call.1} parent=11 // pred_fallthru
          _
        // Predicated region
        $region93: #{tpu_custom_call.1} parent=11 // pred_check
          %p991 = pneg %p583
        $region94: #{tpu_custom_call.1} parent=11 // pred_check_branch
          %993 = sbr.rel (%p991) target = $region96
        $region95: #{tpu_custom_call.1} parent=11 // pred_region
          _
        $region96: #{tpu_custom_call.1} parent=11 // pred_fallthru
          _
        // Predicated region
        $region97: #{tpu_custom_call.1} parent=11 // pred_check
          %p994 = pneg %p604
        $region98: #{tpu_custom_call.1} parent=11 // pred_check_branch
          %996 = sbr.rel (%p994) target = $region100
        $region99: #{tpu_custom_call.1} parent=11 // pred_region
          _
        $region100: #{tpu_custom_call.1} parent=11 // pred_fallthru
          _
        // Predicated region
        $region101: #{tpu_custom_call.1} parent=11 // pred_check
          %p997 = pneg %p625
        $region102: #{tpu_custom_call.1} parent=11 // pred_check_branch
          %999 = sbr.rel (%p997) target = $region104
        $region103: #{tpu_custom_call.1} parent=11 // pred_region
          %s1001 = ssub.s32 4096, 4096
          %1002 = vsyncadd [#allocation30], %s1001
          %s1003 = sshll.u32 [#allocation29], 4
          %s1004 = int_to_ptr.vmem [resolvable:$true] %s1003
          %1009 = dma.hbm_to_vmem [thread:$0]  %s49, 4096, %s1004, [#allocation30], 256, 256, 16
        $region104: #{tpu_custom_call.1} parent=11 // pred_fallthru
          _
        // Predicated region
        $region105: #{tpu_custom_call.1} parent=11 // pred_check
          %p1010 = pneg %p646
        $region106: #{tpu_custom_call.1} parent=11 // pred_check_branch
          %1012 = sbr.rel (%p1010) target = $region108
        $region107: #{tpu_custom_call.1} parent=11 // pred_region
          _
        $region108: #{tpu_custom_call.1} parent=11 // pred_fallthru
          _
        // Predicated region
        $region109: #{tpu_custom_call.1} parent=11 // pred_check
          %p1013 = pneg %p667
        $region110: #{tpu_custom_call.1} parent=11 // pred_check_branch
          %1015 = sbr.rel (%p1013) target = $region112
        $region111: #{tpu_custom_call.1} parent=11 // pred_region
          %s1017 = ssub.s32 4096, 4096
          %1018 = vsyncadd [#allocation30], %s1017
          %s1019 = sshll.u32 [#allocation31], 4
          %s1020 = int_to_ptr.vmem [resolvable:$true] %s1019
          %1025 = dma.hbm_to_vmem [thread:$0]  %s53, 4096, %s1020, [#allocation30], 64, 64, 4
        $region112: #{tpu_custom_call.1} parent=11 // pred_fallthru
          _
        // Predicated region
        $region113: #{tpu_custom_call.1} parent=11 // pred_check
          %p1026 = pneg %p688
        $region114: #{tpu_custom_call.1} parent=11 // pred_check_branch
          %1028 = sbr.rel (%p1026) target = $region116
        $region115: #{tpu_custom_call.1} parent=11 // pred_region
          _
        $region116: #{tpu_custom_call.1} parent=11 // pred_fallthru
          _
        // Predicated region
        $region117: #{tpu_custom_call.1} parent=11 // pred_check
          %p1029 = pneg %p709
        $region118: #{tpu_custom_call.1} parent=11 // pred_check_branch
          %1031 = sbr.rel (%p1029) target = $region120
        $region119: #{tpu_custom_call.1} parent=11 // pred_region
          _
        $region120: #{tpu_custom_call.1} parent=11 // pred_fallthru
          _
        // Predicated region
        $region121: #{tpu_custom_call.1} parent=11 // pred_check
          %p1032 = pneg %p730
        $region122: #{tpu_custom_call.1} parent=11 // pred_check_branch
          %1034 = sbr.rel (%p1032) target = $region124
        $region123: #{tpu_custom_call.1} parent=11 // pred_region
          _
        $region124: #{tpu_custom_call.1} parent=11 // pred_fallthru
          _
      $region12: #{tpu_custom_call.1} parent=5 // pred_fallthru
        _
      %p1035 = scmp.lt.s32.totalorder %s90, 2
      // Predicated region
      $region125: #{tpu_custom_call.1} parent=5 // pred_check
        %p1036 = pneg %p1035
      $region126: #{tpu_custom_call.1} parent=5 // pred_check_branch
        %1038 = sbr.rel (%p1036) target = $region128
      $region127: #{tpu_custom_call.1} parent=5 // pred_region
        // Predicated region
        $region129: #{tpu_custom_call.1} parent=127 // pred_check
          %p1039 = pneg %p110
        $region130: #{tpu_custom_call.1} parent=127 // pred_check_branch
          %1041 = sbr.rel (%p1039) target = $region132
        $region131: #{tpu_custom_call.1} parent=127 // pred_region
          %s1042 = sand.u32 %s100, 1
          %s1043 = scalar_lea.sflag [#allocation3], %s1042
          %s1044 = sand.u32 %s100, 1
          %s1045 = smul.addr %s1044, 16
          %s1046 = scalar_lea.vmem [#allocation2], %s1045
          %s1048 = ssub.s32 256, 256
          %1049 = vsyncadd %s1043, %s1048
          %s1050 = smul.addr %s90, 2
          %s1051 = smul.addr %s1050, 128
          %s1052 = scalar_lea.hbm %s1, %s1051
          %s1053 = sshll.u32 %s1046, 4
          %s1054 = int_to_ptr.vmem [resolvable:$true] %s1053
          %1059 = dma.hbm_to_vmem [thread:$0]  %s1052, 256, %s1054, %s1043, 128, 128, 8
        $region132: #{tpu_custom_call.1} parent=127 // pred_fallthru
          _
        // Predicated region
        $region133: #{tpu_custom_call.1} parent=127 // pred_check
          %p1060 = pneg %p136
        $region134: #{tpu_custom_call.1} parent=127 // pred_check_branch
          %1062 = sbr.rel (%p1060) target = $region136
        $region135: #{tpu_custom_call.1} parent=127 // pred_region
          %s1063 = sand.u32 %s90, 1
          %s1064 = scalar_lea.sflag [#allocation6], %s1063
          %s1065 = sand.u32 %s126, 1
          %s1066 = smul.addr %s1065, 8
          %s1067 = scalar_lea.vmem [#allocation5], %s1066
          %s1069 = ssub.s32 128, 128
          %1070 = vsyncadd %s1064, %s1069
          %s1071 = smul.addr %s90, 128
          %s1072 = scalar_lea.hbm %s3, %s1071
          %s1074 = sshll.u32 %s1067, 4
          %s1075 = int_to_ptr.vmem [resolvable:$true] %s1074
          %1077 = dma.hbm_to_vmem [thread:$0]  %s1072, 128, %s1075, %s1064
        $region136: #{tpu_custom_call.1} parent=127 // pred_fallthru
          _
      $region128: #{tpu_custom_call.1} parent=5 // pred_fallthru
        _
      %p1078 = scmp.le.s32.totalorder 1, %s90
      %p1079 = scmp.lt.s32.totalorder %s90, 3
      %p1080 = pnand %p1078, %p1079
      %p1081 = pneg %p1080
      // Predicated region
      $region137: #{tpu_custom_call.1} parent=5 // pred_check
        _
      $region138: #{tpu_custom_call.1} parent=5 // pred_check_branch
        %1083 = sbr.rel (%p1080) target = $region140
      $region139: #{tpu_custom_call.1} parent=5 // pred_region
        %s1084 = ssub.s32 %s90, 1
        %s1085 = sand.u32 %s103, 1
        %s1086 = scalar_lea.sflag [#allocation3], %s1085
        %s1087 = sand.u32 %s103, 1
        %s1088 = smul.addr %s1087, 16
        %s1089 = scalar_lea.vmem [#allocation2], %s1088
        // Predicated region
        $region141: #{tpu_custom_call.1} parent=139 // pred_check
          %p1090 = pneg %p116
        $region142: #{tpu_custom_call.1} parent=139 // pred_check_branch
          %1092 = sbr.rel (%p1090) target = $region144
        $region143: #{tpu_custom_call.1} parent=139 // pred_region
          %1093 = dma.done %s1086, 256
        $region144: #{tpu_custom_call.1} parent=139 // pred_fallthru
          _
        %s1094 = sand.u32 %s95, 1
        %s1095 = scalar_lea.sflag [#allocation6], %s1094
        %s1096 = sand.u32 %s129, 1
        %s1097 = smul.addr %s1096, 8
        %s1098 = scalar_lea.vmem [#allocation5], %s1097
        // Predicated region
        $region145: #{tpu_custom_call.1} parent=139 // pred_check
          %p1099 = pneg %p142
        $region146: #{tpu_custom_call.1} parent=139 // pred_check_branch
          %1101 = sbr.rel (%p1099) target = $region148
        $region147: #{tpu_custom_call.1} parent=139 // pred_region
          %1102 = dma.done %s1095, 128
        $region148: #{tpu_custom_call.1} parent=139 // pred_fallthru
          _
        // Predicated region
        $region149: #{tpu_custom_call.1} parent=139 // pred_check
          %p1103 = pneg %p163
        $region150: #{tpu_custom_call.1} parent=139 // pred_check_branch
          %1105 = sbr.rel (%p1103) target = $region152
        $region151: #{tpu_custom_call.1} parent=139 // pred_region
          %1106 = dma.done [#allocation6], 1024
        $region152: #{tpu_custom_call.1} parent=139 // pred_fallthru
          _
        // Predicated region
        $region153: #{tpu_custom_call.1} parent=139 // pred_check
          %p1107 = pneg %p205
        $region154: #{tpu_custom_call.1} parent=139 // pred_check_branch
          %1109 = sbr.rel (%p1107) target = $region156
        $region155: #{tpu_custom_call.1} parent=139 // pred_region
          %1110 = dma.done [#allocation9], 2048
        $region156: #{tpu_custom_call.1} parent=139 // pred_fallthru
          _
        // Predicated region
        $region157: #{tpu_custom_call.1} parent=139 // pred_check
          %p1111 = pneg %p247
        $region158: #{tpu_custom_call.1} parent=139 // pred_check_branch
          %1113 = sbr.rel (%p1111) target = $region160
        $region159: #{tpu_custom_call.1} parent=139 // pred_region
          %1114 = dma.done [#allocation9], 1024
        $region160: #{tpu_custom_call.1} parent=139 // pred_fallthru
          _
        // Predicated region
        $region161: #{tpu_custom_call.1} parent=139 // pred_check
          %p1115 = pneg %p268
        $region162: #{tpu_custom_call.1} parent=139 // pred_check_branch
          %1117 = sbr.rel (%p1115) target = $region164
        $region163: #{tpu_custom_call.1} parent=139 // pred_region
          %1118 = dma.done [#allocation12], 16
        $region164: #{tpu_custom_call.1} parent=139 // pred_fallthru
          _
        // Predicated region
        $region165: #{tpu_custom_call.1} parent=139 // pred_check
          %p1119 = pneg %p289
        $region166: #{tpu_custom_call.1} parent=139 // pred_check_branch
          %1121 = sbr.rel (%p1119) target = $region168
        $region167: #{tpu_custom_call.1} parent=139 // pred_region
          %1122 = dma.done [#allocation12], 16
        $region168: #{tpu_custom_call.1} parent=139 // pred_fallthru
          _
        // Predicated region
        $region169: #{tpu_custom_call.1} parent=139 // pred_check
          %p1123 = pneg %p310
        $region170: #{tpu_custom_call.1} parent=139 // pred_check_branch
          %1125 = sbr.rel (%p1123) target = $region172
        $region171: #{tpu_custom_call.1} parent=139 // pred_region
          %1126 = dma.done [#allocation15], 16
        $region172: #{tpu_custom_call.1} parent=139 // pred_fallthru
          _
        // Predicated region
        $region173: #{tpu_custom_call.1} parent=139 // pred_check
          %p1127 = pneg %p331
        $region174: #{tpu_custom_call.1} parent=139 // pred_check_branch
          %1129 = sbr.rel (%p1127) target = $region176
        $region175: #{tpu_custom_call.1} parent=139 // pred_region
          %1130 = dma.done [#allocation15], 4096
        $region176: #{tpu_custom_call.1} parent=139 // pred_fallthru
          _
        // Predicated region
        $region177: #{tpu_custom_call.1} parent=139 // pred_check
          %p1131 = pneg %p373
        $region178: #{tpu_custom_call.1} parent=139 // pred_check_branch
          %1133 = sbr.rel (%p1131) target = $region180
        $region179: #{tpu_custom_call.1} parent=139 // pred_region
          %1134 = dma.done [#allocation18], 4096
        $region180: #{tpu_custom_call.1} parent=139 // pred_fallthru
          _
        // Predicated region
        $region181: #{tpu_custom_call.1} parent=139 // pred_check
          %p1135 = pneg %p394
        $region182: #{tpu_custom_call.1} parent=139 // pred_check_branch
          %1137 = sbr.rel (%p1135) target = $region184
        $region183: #{tpu_custom_call.1} parent=139 // pred_region
          %1138 = dma.done [#allocation18], 16
        $region184: #{tpu_custom_call.1} parent=139 // pred_fallthru
          _
        // Predicated region
        $region185: #{tpu_custom_call.1} parent=139 // pred_check
          %p1139 = pneg %p415
        $region186: #{tpu_custom_call.1} parent=139 // pred_check_branch
          %1141 = sbr.rel (%p1139) target = $region188
        $region187: #{tpu_custom_call.1} parent=139 // pred_region
          %1142 = dma.done [#allocation21], 16
        $region188: #{tpu_custom_call.1} parent=139 // pred_fallthru
          _
        // Predicated region
        $region189: #{tpu_custom_call.1} parent=139 // pred_check
          %p1143 = pneg %p436
        $region190: #{tpu_custom_call.1} parent=139 // pred_check_branch
          %1145 = sbr.rel (%p1143) target = $region192
        $region191: #{tpu_custom_call.1} parent=139 // pred_region
          %1146 = dma.done [#allocation21], 16
        $region192: #{tpu_custom_call.1} parent=139 // pred_fallthru
          _
        // Predicated region
        $region193: #{tpu_custom_call.1} parent=139 // pred_check
          %p1147 = pneg %p457
        $region194: #{tpu_custom_call.1} parent=139 // pred_check_branch
          %1149 = sbr.rel (%p1147) target = $region196
        $region195: #{tpu_custom_call.1} parent=139 // pred_region
          %1150 = dma.done [#allocation24], 1024
        $region196: #{tpu_custom_call.1} parent=139 // pred_fallthru
          _
        // Predicated region
        $region197: #{tpu_custom_call.1} parent=139 // pred_check
          %p1151 = pneg %p478
        $region198: #{tpu_custom_call.1} parent=139 // pred_check_branch
          %1153 = sbr.rel (%p1151) target = $region200
        $region199: #{tpu_custom_call.1} parent=139 // pred_region
          %1154 = dma.done [#allocation24], 16
        $region200: #{tpu_custom_call.1} parent=139 // pred_fallthru
          _
        // Predicated region
        $region201: #{tpu_custom_call.1} parent=139 // pred_check
          %p1155 = pneg %p499
        $region202: #{tpu_custom_call.1} parent=139 // pred_check_branch
          %1157 = sbr.rel (%p1155) target = $region204
        $region203: #{tpu_custom_call.1} parent=139 // pred_region
          %1158 = dma.done [#allocation27], 2048
        $region204: #{tpu_custom_call.1} parent=139 // pred_fallthru
          _
        // Predicated region
        $region205: #{tpu_custom_call.1} parent=139 // pred_check
          %p1159 = pneg %p520
        $region206: #{tpu_custom_call.1} parent=139 // pred_check_branch
          %1161 = sbr.rel (%p1159) target = $region208
        $region207: #{tpu_custom_call.1} parent=139 // pred_region
          %1162 = dma.done [#allocation27], 32
        $region208: #{tpu_custom_call.1} parent=139 // pred_fallthru
          _
        // Predicated region
        $region209: #{tpu_custom_call.1} parent=139 // pred_check
          %p1163 = pneg %p625
        $region210: #{tpu_custom_call.1} parent=139 // pred_check_branch
          %1165 = sbr.rel (%p1163) target = $region212
        $region211: #{tpu_custom_call.1} parent=139 // pred_region
          %1166 = dma.done [#allocation30], 4096
        $region212: #{tpu_custom_call.1} parent=139 // pred_fallthru
          _
        // Predicated region
        $region213: #{tpu_custom_call.1} parent=139 // pred_check
          %p1167 = pneg %p667
        $region214: #{tpu_custom_call.1} parent=139 // pred_check_branch
          %1169 = sbr.rel (%p1167) target = $region216
        $region215: #{tpu_custom_call.1} parent=139 // pred_region
          %1170 = dma.done [#allocation30], 4096
        $region216: #{tpu_custom_call.1} parent=139 // pred_fallthru
          _
        %s1171 = sand.u32 %s103, 1
        %s1172 = scalar_lea.sflag [#allocation3], %s1171
        %s1173 = sand.u32 %s103, 1
        %s1174 = smul.addr %s1173, 16
        %s1175 = scalar_lea.vmem [#allocation2], %s1174
        %p1176 = pneg %p116
        %p1177 = pneg %p113
        %s1178 = sand.u32 %s95, 1
        %s1179 = scalar_lea.sflag [#allocation6], %s1178
        %s1180 = sand.u32 %s129, 1
        %s1181 = smul.addr %s1180, 8
        %s1182 = scalar_lea.vmem [#allocation5], %s1181
        %p1183 = pneg %p142
        %p1184 = pneg %p139
        %p1185 = pneg %p163
        %p1186 = pneg %p160
        %p1187 = pneg %p184
        %p1188 = pneg %p181
        %p1189 = pneg %p205
        %p1190 = pneg %p202
        %p1191 = pneg %p226
        %p1192 = pneg %p223
        %p1193 = pneg %p247
        %p1194 = pneg %p244
        %p1195 = pneg %p268
        %p1196 = pneg %p265
        %p1197 = pneg %p289
        %p1198 = pneg %p286
        %p1199 = pneg %p310
        %p1200 = pneg %p307
        %p1201 = pneg %p331
        %p1202 = pneg %p328
        %p1203 = pneg %p352
        %p1204 = pneg %p349
        %p1205 = pneg %p373
        %p1206 = pneg %p370
        %p1207 = pneg %p394
        %p1208 = pneg %p391
        %p1209 = pneg %p415
        %p1210 = pneg %p412
        %p1211 = pneg %p436
        %p1212 = pneg %p433
        %p1213 = pneg %p457
        %p1214 = pneg %p454
        %p1215 = pneg %p478
        %p1216 = pneg %p475
        %p1217 = pneg %p499
        %p1218 = pneg %p496
        %p1219 = pneg %p520
        %p1220 = pneg %p517
        %p1221 = pneg %p541
        %p1222 = pneg %p538
        %p1223 = pneg %p562
        %p1224 = pneg %p559
        %p1225 = pneg %p583
        %p1226 = pneg %p580
        %p1227 = pneg %p604
        %p1228 = pneg %p601
        %p1229 = pneg %p625
        %p1230 = pneg %p622
        %p1231 = pneg %p646
        %p1232 = pneg %p643
        %p1233 = pneg %p667
        %p1234 = pneg %p664
        %p1235 = pneg %p688
        %p1236 = pneg %p685
        %p1237 = pneg %p709
        %p1238 = pneg %p706
        %p1239 = pneg %p730
        %p1240 = pneg %p727
        %p1241 = pneg %p756
        %p1242 = pneg %p753
        %s1243 = sand.u32 %s743, 1
        %s1244 = scalar_lea.sflag [#allocation4], %s1243
        %s1245 = sand.u32 %s743, 1
        %s1246 = smul.addr %s1245, 16
        %s1247 = scalar_lea.vmem [#allocation32], %s1246
        %p1248 = pneg %p782
        %p1249 = pneg %p779
        %s1250 = sand.u32 %s769, 1
        %s1251 = scalar_lea.sflag [#allocation34], %s1250
        %s1252 = sand.u32 %s769, 1
        %s1253 = smul.addr %s1252, 8
        %s1254 = scalar_lea.vmem [#allocation33], %s1253
        %v1256 = vld [vmem:[%s1089] sm:$0xff]
        %v1257 = vld [vmem:[%s1089 + $0x8] sm:$0xff]
        %v1258 = vld [vmem:[%s1098] sm:$0xff]
        %v1259 = vpack.c.bf16 %v1258, %v1258
        %v1260 = vld [vmem:[#allocation7] sm:$0xf]
        %v1261 = vld [vmem:[#allocation7 + $0x4] sm:$0xf]
        %v1262 = vld [vmem:[#allocation7 + $0x8] sm:$0xf]
        %v1263 = vld [vmem:[#allocation7 + $0xc] sm:$0xf]
        %v1264 = vld [vmem:[#allocation7 + $0x10] sm:$0xf]
        %v1265 = vld [vmem:[#allocation7 + $0x14] sm:$0xf]
        %v1266 = vld [vmem:[#allocation7 + $0x18] sm:$0xf]
        %v1267 = vld [vmem:[#allocation7 + $0x1c] sm:$0xf]
        %v1268 = vld [vmem:[#allocation7 + $0x20] sm:$0xf]
        %v1269 = vld [vmem:[#allocation7 + $0x24] sm:$0xf]
        %v1270 = vld [vmem:[#allocation7 + $0x28] sm:$0xf]
        %v1271 = vld [vmem:[#allocation7 + $0x2c] sm:$0xf]
        %v1272 = vld [vmem:[#allocation7 + $0x30] sm:$0xf]
        %v1273 = vld [vmem:[#allocation7 + $0x34] sm:$0xf]
        %v1274 = vld [vmem:[#allocation7 + $0x38] sm:$0xf]
        %v1275 = vld [vmem:[#allocation7 + $0x3c] sm:$0xf]
        %v1276 = vld [vmem:[%s7] sm:$0x1]
        %v1278 = vlaneseq
        %v1279 = vshrl.u32 %v1278, 7
        %v1280 = vsub.s32 0, %v1279
        %v1281 = vrot.slane %v1276, %v1280
        %v1299 = vunpack.c.l.b16 %v1260
        %v1300 = vunpack.c.l.b16 %v1261
        %v1301 = vunpack.c.l.b16 %v1262
        %v1302 = vunpack.c.l.b16 %v1263
        %v1303 = vunpack.c.l.b16 %v1264
        %v1304 = vunpack.c.l.b16 %v1265
        %v1305 = vunpack.c.l.b16 %v1266
        %v1306 = vunpack.c.l.b16 %v1267
        %v1307 = vunpack.c.l.b16 %v1268
        %v1308 = vunpack.c.l.b16 %v1269
        %v1309 = vunpack.c.l.b16 %v1270
        %v1310 = vunpack.c.l.b16 %v1271
        %v1311 = vunpack.c.l.b16 %v1272
        %v1312 = vunpack.c.l.b16 %v1273
        %v1313 = vunpack.c.l.b16 %v1274
        %v1314 = vunpack.c.l.b16 %v1275
        %v1315 = vpack.c.b16 %v1300, %v1299
        %v1316 = vpack.c.b16 %v1302, %v1301
        %v1317 = vpack.c.b16 %v1304, %v1303
        %v1318 = vpack.c.b16 %v1306, %v1305
        %v1319 = vpack.c.b16 %v1308, %v1307
        %v1320 = vpack.c.b16 %v1310, %v1309
        %v1321 = vpack.c.b16 %v1312, %v1311
        %v1322 = vpack.c.b16 %v1314, %v1313
        %1331 = vmatprep.subr.bf16.mxu0 0
        %1332 = vmatpush1.bf16.msra.mxu0 %v1315
        %1333 = vmatprep.subr.bf16.mxu0 0
        %1334 = vmatpush1.bf16.msra.mxu0 %v1316
        %1335 = vmatprep.subr.bf16.mxu0 0
        %1336 = vmatpush1.bf16.msra.mxu0 %v1317
        %1337 = vmatprep.subr.bf16.mxu0 0
        %1338 = vmatpush1.bf16.msra.mxu0 %v1318
        %1339 = vmatprep.subr.bf16.mxu0 0
        %1340 = vmatpush1.bf16.msra.mxu0 %v1319
        %1341 = vmatprep.subr.bf16.mxu0 0
        %1342 = vmatpush1.bf16.msra.mxu0 %v1320
        %1343 = vmatprep.subr.bf16.mxu0 0
        %1344 = vmatpush1.bf16.msra.mxu0 %v1321
        %1345 = vmatprep.subr.bf16.mxu0 0
        %1346 = vmatpush1.bf16.msra.mxu0 %v1322
        %1347 = vmatprep.subr.bf16.mxu0 0
        %1348 = vmatpush1.bf16.msra.mxu0 0
        %1349 = vmatprep.subr.bf16.mxu0 0
        %1350 = vmatpush1.bf16.msra.mxu0 0
        %1351 = vmatprep.subr.bf16.mxu0 0
        %1352 = vmatpush1.bf16.msra.mxu0 0
        %1353 = vmatprep.subr.bf16.mxu0 0
        %1354 = vmatpush1.bf16.msra.mxu0 0
        %1355 = vmatprep.subr.bf16.mxu0 0
        %1356 = vmatpush1.bf16.msra.mxu0 0
        %1357 = vmatprep.subr.bf16.mxu0 0
        %1358 = vmatpush1.bf16.msra.mxu0 0
        %1359 = vmatprep.subr.bf16.mxu0 0
        %1360 = vmatpush1.bf16.msra.mxu0 0
        %1361 = vmatprep.subr.bf16.mxu0 0
        %1362 = vmatpush1.bf16.msra.mxu0 0
        %1363 = vmatprep.mubr.bf16.mxu0 0
        %1364 = vmatmul.mubr.bf16.gmra.mrb[0].mxu0 %v1259
        %v1365 = vpop.f32.mrb[0].mxu0
        %v1366 = vadd.f32 %v1281, %v1365
        %v1367 = vpop.f32.mrb[0].mxu0
        %v1368 = vpop.f32.mrb[0].mxu0
        %v1369 = vpop.f32.mrb[0].mxu0
        %1370 = vdwg.mxu0
        %v1371 = vpack.c.bf16 %v1366, %v1366
        %v1372 = vpack.c.bf16 %v1257, %v1256
        %v1373 = vld [vmem:[#allocation8] sm:$0xff]
        %v1374 = vld [vmem:[#allocation8 + $0x8] sm:$0xff]
        %v1375 = vld [vmem:[#allocation8 + $0x10] sm:$0xff]
        %v1376 = vld [vmem:[#allocation8 + $0x18] sm:$0xff]
        %v1377 = vld [vmem:[#allocation8 + $0x20] sm:$0xff]
        %v1378 = vld [vmem:[#allocation8 + $0x28] sm:$0xff]
        %v1379 = vld [vmem:[#allocation8 + $0x30] sm:$0xff]
        %v1380 = vld [vmem:[#allocation8 + $0x38] sm:$0xff]
        %v1381 = vld [vmem:[#allocation8 + $0x40] sm:$0xff]
        %v1382 = vld [vmem:[#allocation8 + $0x48] sm:$0xff]
        %v1383 = vld [vmem:[#allocation8 + $0x50] sm:$0xff]
        %v1384 = vld [vmem:[#allocation8 + $0x58] sm:$0xff]
        %v1385 = vld [vmem:[#allocation8 + $0x60] sm:$0xff]
        %v1386 = vld [vmem:[#allocation8 + $0x68] sm:$0xff]
        %v1387 = vld [vmem:[#allocation8 + $0x70] sm:$0xff]
        %v1388 = vld [vmem:[#allocation8 + $0x78] sm:$0xff]
        %v1389 = vld [vmem:[%s11] sm:$0x3]
        %v1391 = vlaneseq
        %v1392 = vshrl.u32 %v1391, 7
        %v1393 = vsub.s32 0, %v1392
        %v1394 = vrot.slane %v1389, %v1393
        %v1395 = vlaneseq
        %v1396 = vshrl.u32 %v1395, 7
        %v1397 = vsub.s32 1, %v1396
        %v1398 = vrot.slane %v1389, %v1397
        %v1417 = vunpack.c.l.b16 %v1373
        %v1418 = vunpack.c.h.b16 %v1373
        %v1419 = vunpack.c.l.b16 %v1374
        %v1420 = vunpack.c.h.b16 %v1374
        %v1421 = vunpack.c.l.b16 %v1375
        %v1422 = vunpack.c.h.b16 %v1375
        %v1423 = vunpack.c.l.b16 %v1376
        %v1424 = vunpack.c.h.b16 %v1376
        %v1425 = vunpack.c.l.b16 %v1377
        %v1426 = vunpack.c.h.b16 %v1377
        %v1427 = vunpack.c.l.b16 %v1378
        %v1428 = vunpack.c.h.b16 %v1378
        %v1429 = vunpack.c.l.b16 %v1379
        %v1430 = vunpack.c.h.b16 %v1379
        %v1431 = vunpack.c.l.b16 %v1380
        %v1432 = vunpack.c.h.b16 %v1380
        %v1433 = vunpack.c.l.b16 %v1381
        %v1434 = vunpack.c.h.b16 %v1381
        %v1435 = vunpack.c.l.b16 %v1382
        %v1436 = vunpack.c.h.b16 %v1382
        %v1437 = vunpack.c.l.b16 %v1383
        %v1438 = vunpack.c.h.b16 %v1383
        %v1439 = vunpack.c.l.b16 %v1384
        %v1440 = vunpack.c.h.b16 %v1384
        %v1441 = vunpack.c.l.b16 %v1385
        %v1442 = vunpack.c.h.b16 %v1385
        %v1443 = vunpack.c.l.b16 %v1386
        %v1444 = vunpack.c.h.b16 %v1386
        %v1445 = vunpack.c.l.b16 %v1387
        %v1446 = vunpack.c.h.b16 %v1387
        %v1447 = vunpack.c.l.b16 %v1388
        %v1448 = vunpack.c.h.b16 %v1388
        %v1449 = vpack.c.b16 %v1419, %v1417
        %v1450 = vpack.c.b16 %v1420, %v1418
        %v1451 = vpack.c.b16 %v1423, %v1421
        %v1452 = vpack.c.b16 %v1424, %v1422
        %v1453 = vpack.c.b16 %v1427, %v1425
        %v1454 = vpack.c.b16 %v1428, %v1426
        %v1455 = vpack.c.b16 %v1431, %v1429
        %v1456 = vpack.c.b16 %v1432, %v1430
        %v1457 = vpack.c.b16 %v1435, %v1433
        %v1458 = vpack.c.b16 %v1436, %v1434
        %v1459 = vpack.c.b16 %v1439, %v1437
        %v1460 = vpack.c.b16 %v1440, %v1438
        %v1461 = vpack.c.b16 %v1443, %v1441
        %v1462 = vpack.c.b16 %v1444, %v1442
        %v1463 = vpack.c.b16 %v1447, %v1445
        %v1464 = vpack.c.b16 %v1448, %v1446
        %1481 = vmatprep.subr.bf16.mxu0 %v1450
        %1482 = vmatpush1.bf16.msra.mxu0 %v1449
        %1483 = vmatprep.subr.bf16.mxu0 %v1452
        %1484 = vmatpush1.bf16.msra.mxu0 %v1451
        %1485 = vmatprep.subr.bf16.mxu0 %v1454
        %1486 = vmatpush1.bf16.msra.mxu0 %v1453
        %1487 = vmatprep.subr.bf16.mxu0 %v1456
        %1488 = vmatpush1.bf16.msra.mxu0 %v1455
        %1489 = vmatprep.subr.bf16.mxu0 %v1458
        %1490 = vmatpush1.bf16.msra.mxu0 %v1457
        %1491 = vmatprep.subr.bf16.mxu0 %v1460
        %1492 = vmatpush1.bf16.msra.mxu0 %v1459
        %1493 = vmatprep.subr.bf16.mxu0 %v1462
        %1494 = vmatpush1.bf16.msra.mxu0 %v1461
        %1495 = vmatprep.subr.bf16.mxu0 %v1464
        %1496 = vmatpush1.bf16.msra.mxu0 %v1463
        %1497 = vmatprep.subr.bf16.mxu0 0
        %1498 = vmatpush1.bf16.msra.mxu0 0
        %1499 = vmatprep.subr.bf16.mxu0 0
        %1500 = vmatpush1.bf16.msra.mxu0 0
        %1501 = vmatprep.subr.bf16.mxu0 0
        %1502 = vmatpush1.bf16.msra.mxu0 0
        %1503 = vmatprep.subr.bf16.mxu0 0
        %1504 = vmatpush1.bf16.msra.mxu0 0
        %1505 = vmatprep.subr.bf16.mxu0 0
        %1506 = vmatpush1.bf16.msra.mxu0 0
        %1507 = vmatprep.subr.bf16.mxu0 0
        %1508 = vmatpush1.bf16.msra.mxu0 0
        %1509 = vmatprep.subr.bf16.mxu0 0
        %1510 = vmatpush1.bf16.msra.mxu0 0
        %1511 = vmatprep.subr.bf16.mxu0 0
        %1512 = vmatpush1.bf16.msra.mxu0 0
        %1513 = vmatprep.mubr.bf16.mxu0 0
        %1514 = vmatmul.mubr.bf16.gmra.mrb[0].mxu0 %v1372
        %v1515 = vpop.f32.mrb[0].mxu0
        %v1516 = vadd.f32 %v1394, %v1515
        %v1517 = vpop.f32.mrb[0].mxu0
        %v1518 = vadd.f32 %v1398, %v1517
        %v1519 = vpop.f32.mrb[0].mxu0
        %v1520 = vadd.f32 %v1394, %v1519
        %v1521 = vpop.f32.mrb[0].mxu0
        %v1522 = vadd.f32 %v1398, %v1521
        %1523 = vdwg.mxu0
        %v1524 = vpack.c.bf16 %v1520, %v1516
        %v1525 = vpack.c.bf16 %v1522, %v1518
        %vm1526 = vcmask 261120
        %v1528 = vsel %vm1526, %v1371, 0
        %v1531 = vsel %vm1526, %v1524, 0
        %1533 = vmatprep.subr.bf16.mxu0 0
        %1534 = vmatpush1.bf16.xpose.msra.mxu0 %v1531
        %1535 = vmatprep.subr.bf16.mxu0 0
        %1536 = vmatpush1.bf16.xpose.msra.mxu0 0
        %1537 = vmatprep.subr.bf16.mxu0 0
        %1538 = vmatpush1.bf16.xpose.msra.mxu0 0
        %1539 = vmatprep.subr.bf16.mxu0 0
        %1540 = vmatpush1.bf16.xpose.msra.mxu0 0
        %1541 = vmatprep.subr.bf16.mxu0 0
        %1542 = vmatpush1.bf16.xpose.msra.mxu0 0
        %1543 = vmatprep.subr.bf16.mxu0 0
        %1544 = vmatpush1.bf16.xpose.msra.mxu0 0
        %1545 = vmatprep.subr.bf16.mxu0 0
        %1546 = vmatpush1.bf16.xpose.msra.mxu0 0
        %1547 = vmatprep.subr.bf16.mxu0 0
        %1548 = vmatpush1.bf16.xpose.msra.mxu0 0
        %1549 = vmatprep.subr.bf16.mxu0 0
        %1550 = vmatpush1.bf16.xpose.msra.mxu0 0
        %1551 = vmatprep.subr.bf16.mxu0 0
        %1552 = vmatpush1.bf16.xpose.msra.mxu0 0
        %1553 = vmatprep.subr.bf16.mxu0 0
        %1554 = vmatpush1.bf16.xpose.msra.mxu0 0
        %1555 = vmatprep.subr.bf16.mxu0 0
        %1556 = vmatpush1.bf16.xpose.msra.mxu0 0
        %1557 = vmatprep.subr.bf16.mxu0 0
        %1558 = vmatpush1.bf16.xpose.msra.mxu0 0
        %1559 = vmatprep.subr.bf16.mxu0 0
        %1560 = vmatpush1.bf16.xpose.msra.mxu0 0
        %1561 = vmatprep.subr.bf16.mxu0 0
        %1562 = vmatpush1.bf16.xpose.msra.mxu0 0
        %1563 = vmatprep.subr.bf16.mxu0 0
        %1564 = vmatpush1.bf16.xpose.msra.mxu0 0
        %1565 = vmatprep.mubr.bf16.mxu0 0
        %1566 = vmatmul.mubr.bf16.gmra.mrb[0].mxu0 %v1528
        %v1567 = vpop.f32.mrb[0].mxu0
        %v1568 = vadd.f32 0.0, %v1567
        %v1569 = vpop.f32.mrb[0].mxu0
        %v1570 = vpop.f32.mrb[0].mxu0
        %v1571 = vpop.f32.mrb[0].mxu0
        %1572 = vdwg.mxu0
        %v1573 = vmul.f32 %v1568, 0.17677669
        %vm1574 = vcmask 130048
        %v1575 = vsel %vm1574, %v1573, -inf
        %1576 = vmax.xlane.f32.xlu0 %v1575
        %v1577 = vpop.xlane.xlu0 %1576
        %v1578 = vsub.f32 %v1573, %v1577
        %v1579 = vmul.f32 %v1578, 1.442695
        %v1580 = vpow.pop %v1579
        %v1581 = vsel %vm1574, %v1580, 0.0
        %1582 = vadd.xlane.f32.xlu0 %v1581
        %v1583 = vpop.xlane.xlu0 %1582
        %v1584 = vrcp.pop %v1583
        %v1585 = vmul.f32 %v1580, %v1584
        %v1586 = vpack.c.bf16 %v1585, %v1585
        %v1588 = vsel %vm1574, %v1586, 0
        %1590 = vmatprep.subr.bf16.mxu0 0
        %1591 = vmatpush1.bf16.msra.mxu0 %v1525
        %1592 = vmatprep.subr.bf16.mxu0 0
        %1593 = vmatpush1.bf16.msra.mxu0 0
        %1594 = vmatprep.subr.bf16.mxu0 0
        %1595 = vmatpush1.bf16.msra.mxu0 0
        %1596 = vmatprep.subr.bf16.mxu0 0
        %1597 = vmatpush1.bf16.msra.mxu0 0
        %1598 = vmatprep.subr.bf16.mxu0 0
        %1599 = vmatpush1.bf16.msra.mxu0 0
        %1600 = vmatprep.subr.bf16.mxu0 0
        %1601 = vmatpush1.bf16.msra.mxu0 0
        %1602 = vmatprep.subr.bf16.mxu0 0
        %1603 = vmatpush1.bf16.msra.mxu0 0
        %1604 = vmatprep.subr.bf16.mxu0 0
        %1605 = vmatpush1.bf16.msra.mxu0 0
        %1606 = vmatprep.subr.bf16.mxu0 0
        %1607 = vmatpush1.bf16.msra.mxu0 0
        %1608 = vmatprep.subr.bf16.mxu0 0
        %1609 = vmatpush1.bf16.msra.mxu0 0
        %1610 = vmatprep.subr.bf16.mxu0 0
        %1611 = vmatpush1.bf16.msra.mxu0 0
        %1612 = vmatprep.subr.bf16.mxu0 0
        %1613 = vmatpush1.bf16.msra.mxu0 0
        %1614 = vmatprep.subr.bf16.mxu0 0
        %1615 = vmatpush1.bf16.msra.mxu0 0
        %1616 = vmatprep.subr.bf16.mxu0 0
        %1617 = vmatpush1.bf16.msra.mxu0 0
        %1618 = vmatprep.subr.bf16.mxu0 0
        %1619 = vmatpush1.bf16.msra.mxu0 0
        %1620 = vmatprep.subr.bf16.mxu0 0
        %1621 = vmatpush1.bf16.msra.mxu0 0
        %1622 = vmatprep.mubr.bf16.mxu0 0
        %1623 = vmatmul.mubr.bf16.gmra.mrb[0].mxu0 %v1588
        %v1624 = vpop.f32.mrb[0].mxu0
        %v1625 = vadd.f32 0.0, %v1624
        %v1626 = vpop.f32.mrb[0].mxu0
        %v1627 = vpop.f32.mrb[0].mxu0
        %v1628 = vpop.f32.mrb[0].mxu0
        %1629 = vdwg.mxu0
        %1631 = vrot.lane.b32.xlu0 %v1371, 96
        %v1632 = vpop.permute.xlu0 %1631
        %1634 = vrot.lane.b32.xlu0 %v1524, 96
        %v1635 = vpop.permute.xlu0 %1634
        %v1637 = vsel %vm1526, %v1632, 0
        %v1640 = vsel %vm1526, %v1635, 0
        %1642 = vmatprep.subr.bf16.mxu0 0
        %1643 = vmatpush1.bf16.xpose.msra.mxu0 %v1640
        %1644 = vmatprep.subr.bf16.mxu0 0
        %1645 = vmatpush1.bf16.xpose.msra.mxu0 0
        %1646 = vmatprep.subr.bf16.mxu0 0
        %1647 = vmatpush1.bf16.xpose.msra.mxu0 0
        %1648 = vmatprep.subr.bf16.mxu0 0
        %1649 = vmatpush1.bf16.xpose.msra.mxu0 0
        %1650 = vmatprep.subr.bf16.mxu0 0
        %1651 = vmatpush1.bf16.xpose.msra.mxu0 0
        %1652 = vmatprep.subr.bf16.mxu0 0
        %1653 = vmatpush1.bf16.xpose.msra.mxu0 0
        %1654 = vmatprep.subr.bf16.mxu0 0
        %1655 = vmatpush1.bf16.xpose.msra.mxu0 0
        %1656 = vmatprep.subr.bf16.mxu0 0
        %1657 = vmatpush1.bf16.xpose.msra.mxu0 0
        %1658 = vmatprep.subr.bf16.mxu0 0
        %1659 = vmatpush1.bf16.xpose.msra.mxu0 0
        %1660 = vmatprep.subr.bf16.mxu0 0
        %1661 = vmatpush1.bf16.xpose.msra.mxu0 0
        %1662 = vmatprep.subr.bf16.mxu0 0
        %1663 = vmatpush1.bf16.xpose.msra.mxu0 0
        %1664 = vmatprep.subr.bf16.mxu0 0
        %1665 = vmatpush1.bf16.xpose.msra.mxu0 0
        %1666 = vmatprep.subr.bf16.mxu0 0
        %1667 = vmatpush1.bf16.xpose.msra.mxu0 0
        %1668 = vmatprep.subr.bf16.mxu0 0
        %1669 = vmatpush1.bf16.xpose.msra.mxu0 0
        %1670 = vmatprep.subr.bf16.mxu0 0
        %1671 = vmatpush1.bf16.xpose.msra.mxu0 0
        %1672 = vmatprep.subr.bf16.mxu0 0
        %1673 = vmatpush1.bf16.xpose.msra.mxu0 0
        %1674 = vmatprep.mubr.bf16.mxu0 0
        %1675 = vmatmul.mubr.bf16.gmra.mrb[0].mxu0 %v1637
        %v1676 = vpop.f32.mrb[0].mxu0
        %v1677 = vadd.f32 0.0, %v1676
        %v1678 = vpop.f32.mrb[0].mxu0
        %v1679 = vpop.f32.mrb[0].mxu0
        %v1680 = vpop.f32.mrb[0].mxu0
        %1681 = vdwg.mxu0
        %v1682 = vmul.f32 %v1677, 0.17677669
        %v1683 = vsel %vm1574, %v1682, -inf
        %1684 = vmax.xlane.f32.xlu0 %v1683
        %v1685 = vpop.xlane.xlu0 %1684
        %v1686 = vsub.f32 %v1682, %v1685
        %v1687 = vmul.f32 %v1686, 1.442695
        %v1688 = vpow.pop %v1687
        %v1689 = vsel %vm1574, %v1688, 0.0
        %1690 = vadd.xlane.f32.xlu0 %v1689
        %v1691 = vpop.xlane.xlu0 %1690
        %v1692 = vrcp.pop %v1691
        %v1693 = vmul.f32 %v1688, %v1692
        %v1694 = vpack.c.bf16 %v1693, %v1693
        %1696 = vrot.lane.b32.xlu0 %v1525, 96
        %v1697 = vpop.permute.xlu0 %1696
        %v1700 = vsel %vm1574, %v1694, 0
        %1702 = vmatprep.subr.bf16.mxu0 0
        %1703 = vmatpush1.bf16.msra.mxu0 %v1697
        %1704 = vmatprep.subr.bf16.mxu0 0
        %1705 = vmatpush1.bf16.msra.mxu0 0
        %1706 = vmatprep.subr.bf16.mxu0 0
        %1707 = vmatpush1.bf16.msra.mxu0 0
        %1708 = vmatprep.subr.bf16.mxu0 0
        %1709 = vmatpush1.bf16.msra.mxu0 0
        %1710 = vmatprep.subr.bf16.mxu0 0
        %1711 = vmatpush1.bf16.msra.mxu0 0
        %1712 = vmatprep.subr.bf16.mxu0 0
        %1713 = vmatpush1.bf16.msra.mxu0 0
        %1714 = vmatprep.subr.bf16.mxu0 0
        %1715 = vmatpush1.bf16.msra.mxu0 0
        %1716 = vmatprep.subr.bf16.mxu0 0
        %1717 = vmatpush1.bf16.msra.mxu0 0
        %1718 = vmatprep.subr.bf16.mxu0 0
        %1719 = vmatpush1.bf16.msra.mxu0 0
        %1720 = vmatprep.subr.bf16.mxu0 0
        %1721 = vmatpush1.bf16.msra.mxu0 0
        %1722 = vmatprep.subr.bf16.mxu0 0
        %1723 = vmatpush1.bf16.msra.mxu0 0
        %1724 = vmatprep.subr.bf16.mxu0 0
        %1725 = vmatpush1.bf16.msra.mxu0 0
        %1726 = vmatprep.subr.bf16.mxu0 0
        %1727 = vmatpush1.bf16.msra.mxu0 0
        %1728 = vmatprep.subr.bf16.mxu0 0
        %1729 = vmatpush1.bf16.msra.mxu0 0
        %1730 = vmatprep.subr.bf16.mxu0 0
        %1731 = vmatpush1.bf16.msra.mxu0 0
        %1732 = vmatprep.subr.bf16.mxu0 0
        %1733 = vmatpush1.bf16.msra.mxu0 0
        %1734 = vmatprep.mubr.bf16.mxu0 0
        %1735 = vmatmul.mubr.bf16.gmra.mrb[0].mxu0 %v1700
        %v1736 = vpop.f32.mrb[0].mxu0
        %v1737 = vadd.f32 0.0, %v1736
        %v1738 = vpop.f32.mrb[0].mxu0
        %v1739 = vpop.f32.mrb[0].mxu0
        %v1740 = vpop.f32.mrb[0].mxu0
        %1741 = vdwg.mxu0
        %1742 = vrot.lane.b32.xlu0 %v1371, 64
        %v1743 = vpop.permute.xlu0 %1742
        %1744 = vrot.lane.b32.xlu0 %v1524, 64
        %v1745 = vpop.permute.xlu0 %1744
        %v1747 = vsel %vm1526, %v1743, 0
        %v1750 = vsel %vm1526, %v1745, 0
        %1752 = vmatprep.subr.bf16.mxu0 0
        %1753 = vmatpush1.bf16.xpose.msra.mxu0 %v1750
        %1754 = vmatprep.subr.bf16.mxu0 0
        %1755 = vmatpush1.bf16.xpose.msra.mxu0 0
        %1756 = vmatprep.subr.bf16.mxu0 0
        %1757 = vmatpush1.bf16.xpose.msra.mxu0 0
        %1758 = vmatprep.subr.bf16.mxu0 0
        %1759 = vmatpush1.bf16.xpose.msra.mxu0 0
        %1760 = vmatprep.subr.bf16.mxu0 0
        %1761 = vmatpush1.bf16.xpose.msra.mxu0 0
        %1762 = vmatprep.subr.bf16.mxu0 0
        %1763 = vmatpush1.bf16.xpose.msra.mxu0 0
        %1764 = vmatprep.subr.bf16.mxu0 0
        %1765 = vmatpush1.bf16.xpose.msra.mxu0 0
        %1766 = vmatprep.subr.bf16.mxu0 0
        %1767 = vmatpush1.bf16.xpose.msra.mxu0 0
        %1768 = vmatprep.subr.bf16.mxu0 0
        %1769 = vmatpush1.bf16.xpose.msra.mxu0 0
        %1770 = vmatprep.subr.bf16.mxu0 0
        %1771 = vmatpush1.bf16.xpose.msra.mxu0 0
        %1772 = vmatprep.subr.bf16.mxu0 0
        %1773 = vmatpush1.bf16.xpose.msra.mxu0 0
        %1774 = vmatprep.subr.bf16.mxu0 0
        %1775 = vmatpush1.bf16.xpose.msra.mxu0 0
        %1776 = vmatprep.subr.bf16.mxu0 0
        %1777 = vmatpush1.bf16.xpose.msra.mxu0 0
        %1778 = vmatprep.subr.bf16.mxu0 0
        %1779 = vmatpush1.bf16.xpose.msra.mxu0 0
        %1780 = vmatprep.subr.bf16.mxu0 0
        %1781 = vmatpush1.bf16.xpose.msra.mxu0 0
        %1782 = vmatprep.subr.bf16.mxu0 0
        %1783 = vmatpush1.bf16.xpose.msra.mxu0 0
        %1784 = vmatprep.mubr.bf16.mxu0 0
        %1785 = vmatmul.mubr.bf16.gmra.mrb[0].mxu0 %v1747
        %v1786 = vpop.f32.mrb[0].mxu0
        %v1787 = vadd.f32 0.0, %v1786
        %v1788 = vpop.f32.mrb[0].mxu0
        %v1789 = vpop.f32.mrb[0].mxu0
        %v1790 = vpop.f32.mrb[0].mxu0
        %1791 = vdwg.mxu0
        %v1792 = vmul.f32 %v1787, 0.17677669
        %v1793 = vsel %vm1574, %v1792, -inf
        %1794 = vmax.xlane.f32.xlu0 %v1793
        %v1795 = vpop.xlane.xlu0 %1794
        %v1796 = vsub.f32 %v1792, %v1795
        %v1797 = vmul.f32 %v1796, 1.442695
        %v1798 = vpow.pop %v1797
        %v1799 = vsel %vm1574, %v1798, 0.0
        %1800 = vadd.xlane.f32.xlu0 %v1799
        %v1801 = vpop.xlane.xlu0 %1800
        %v1802 = vrcp.pop %v1801
        %v1803 = vmul.f32 %v1798, %v1802
        %v1804 = vpack.c.bf16 %v1803, %v1803
        %1805 = vrot.lane.b32.xlu0 %v1525, 64
        %v1806 = vpop.permute.xlu0 %1805
        %v1809 = vsel %vm1574, %v1804, 0
        %1811 = vmatprep.subr.bf16.mxu0 0
        %1812 = vmatpush1.bf16.msra.mxu0 %v1806
        %1813 = vmatprep.subr.bf16.mxu0 0
        %1814 = vmatpush1.bf16.msra.mxu0 0
        %1815 = vmatprep.subr.bf16.mxu0 0
        %1816 = vmatpush1.bf16.msra.mxu0 0
        %1817 = vmatprep.subr.bf16.mxu0 0
        %1818 = vmatpush1.bf16.msra.mxu0 0
        %1819 = vmatprep.subr.bf16.mxu0 0
        %1820 = vmatpush1.bf16.msra.mxu0 0
        %1821 = vmatprep.subr.bf16.mxu0 0
        %1822 = vmatpush1.bf16.msra.mxu0 0
        %1823 = vmatprep.subr.bf16.mxu0 0
        %1824 = vmatpush1.bf16.msra.mxu0 0
        %1825 = vmatprep.subr.bf16.mxu0 0
        %1826 = vmatpush1.bf16.msra.mxu0 0
        %1827 = vmatprep.subr.bf16.mxu0 0
        %1828 = vmatpush1.bf16.msra.mxu0 0
        %1829 = vmatprep.subr.bf16.mxu0 0
        %1830 = vmatpush1.bf16.msra.mxu0 0
        %1831 = vmatprep.subr.bf16.mxu0 0
        %1832 = vmatpush1.bf16.msra.mxu0 0
        %1833 = vmatprep.subr.bf16.mxu0 0
        %1834 = vmatpush1.bf16.msra.mxu0 0
        %1835 = vmatprep.subr.bf16.mxu0 0
        %1836 = vmatpush1.bf16.msra.mxu0 0
        %1837 = vmatprep.subr.bf16.mxu0 0
        %1838 = vmatpush1.bf16.msra.mxu0 0
        %1839 = vmatprep.subr.bf16.mxu0 0
        %1840 = vmatpush1.bf16.msra.mxu0 0
        %1841 = vmatprep.subr.bf16.mxu0 0
        %1842 = vmatpush1.bf16.msra.mxu0 0
        %1843 = vmatprep.mubr.bf16.mxu0 0
        %1844 = vmatmul.mubr.bf16.gmra.mrb[0].mxu0 %v1809
        %v1845 = vpop.f32.mrb[0].mxu0
        %v1846 = vadd.f32 0.0, %v1845
        %v1847 = vpop.f32.mrb[0].mxu0
        %v1848 = vpop.f32.mrb[0].mxu0
        %v1849 = vpop.f32.mrb[0].mxu0
        %1850 = vdwg.mxu0
        %1851 = vrot.lane.b32.xlu0 %v1371, 32
        %v1852 = vpop.permute.xlu0 %1851
        %1853 = vrot.lane.b32.xlu0 %v1524, 32
        %v1854 = vpop.permute.xlu0 %1853
        %v1856 = vsel %vm1526, %v1852, 0
        %v1859 = vsel %vm1526, %v1854, 0
        %1861 = vmatprep.subr.bf16.mxu0 0
        %1862 = vmatpush1.bf16.xpose.msra.mxu0 %v1859
        %1863 = vmatprep.subr.bf16.mxu0 0
        %1864 = vmatpush1.bf16.xpose.msra.mxu0 0
        %1865 = vmatprep.subr.bf16.mxu0 0
        %1866 = vmatpush1.bf16.xpose.msra.mxu0 0
        %1867 = vmatprep.subr.bf16.mxu0 0
        %1868 = vmatpush1.bf16.xpose.msra.mxu0 0
        %1869 = vmatprep.subr.bf16.mxu0 0
        %1870 = vmatpush1.bf16.xpose.msra.mxu0 0
        %1871 = vmatprep.subr.bf16.mxu0 0
        %1872 = vmatpush1.bf16.xpose.msra.mxu0 0
        %1873 = vmatprep.subr.bf16.mxu0 0
        %1874 = vmatpush1.bf16.xpose.msra.mxu0 0
        %1875 = vmatprep.subr.bf16.mxu0 0
        %1876 = vmatpush1.bf16.xpose.msra.mxu0 0
        %1877 = vmatprep.subr.bf16.mxu0 0
        %1878 = vmatpush1.bf16.xpose.msra.mxu0 0
        %1879 = vmatprep.subr.bf16.mxu0 0
        %1880 = vmatpush1.bf16.xpose.msra.mxu0 0
        %1881 = vmatprep.subr.bf16.mxu0 0
        %1882 = vmatpush1.bf16.xpose.msra.mxu0 0
        %1883 = vmatprep.subr.bf16.mxu0 0
        %1884 = vmatpush1.bf16.xpose.msra.mxu0 0
        %1885 = vmatprep.subr.bf16.mxu0 0
        %1886 = vmatpush1.bf16.xpose.msra.mxu0 0
        %1887 = vmatprep.subr.bf16.mxu0 0
        %1888 = vmatpush1.bf16.xpose.msra.mxu0 0
        %1889 = vmatprep.subr.bf16.mxu0 0
        %1890 = vmatpush1.bf16.xpose.msra.mxu0 0
        %1891 = vmatprep.subr.bf16.mxu0 0
        %1892 = vmatpush1.bf16.xpose.msra.mxu0 0
        %1893 = vmatprep.mubr.bf16.mxu0 0
        %1894 = vmatmul.mubr.bf16.gmra.mrb[0].mxu0 %v1856
        %v1895 = vpop.f32.mrb[0].mxu0
        %v1896 = vadd.f32 0.0, %v1895
        %v1897 = vpop.f32.mrb[0].mxu0
        %v1898 = vpop.f32.mrb[0].mxu0
        %v1899 = vpop.f32.mrb[0].mxu0
        %1900 = vdwg.mxu0
        %v1901 = vmul.f32 %v1896, 0.17677669
        %v1902 = vsel %vm1574, %v1901, -inf
        %1903 = vmax.xlane.f32.xlu0 %v1902
        %v1904 = vpop.xlane.xlu0 %1903
        %v1905 = vsub.f32 %v1901, %v1904
        %v1906 = vmul.f32 %v1905, 1.442695
        %v1907 = vpow.pop %v1906
        %v1908 = vsel %vm1574, %v1907, 0.0
        %1909 = vadd.xlane.f32.xlu0 %v1908
        %v1910 = vpop.xlane.xlu0 %1909
        %v1911 = vrcp.pop %v1910
        %v1912 = vmul.f32 %v1907, %v1911
        %v1913 = vpack.c.bf16 %v1912, %v1912
        %1914 = vrot.lane.b32.xlu0 %v1525, 32
        %v1915 = vpop.permute.xlu0 %1914
        %v1918 = vsel %vm1574, %v1913, 0
        %1920 = vmatprep.subr.bf16.mxu0 0
        %1921 = vmatpush1.bf16.msra.mxu0 %v1915
        %1922 = vmatprep.subr.bf16.mxu0 0
        %1923 = vmatpush1.bf16.msra.mxu0 0
        %1924 = vmatprep.subr.bf16.mxu0 0
        %1925 = vmatpush1.bf16.msra.mxu0 0
        %1926 = vmatprep.subr.bf16.mxu0 0
        %1927 = vmatpush1.bf16.msra.mxu0 0
        %1928 = vmatprep.subr.bf16.mxu0 0
        %1929 = vmatpush1.bf16.msra.mxu0 0
        %1930 = vmatprep.subr.bf16.mxu0 0
        %1931 = vmatpush1.bf16.msra.mxu0 0
        %1932 = vmatprep.subr.bf16.mxu0 0
        %1933 = vmatpush1.bf16.msra.mxu0 0
        %1934 = vmatprep.subr.bf16.mxu0 0
        %1935 = vmatpush1.bf16.msra.mxu0 0
        %1936 = vmatprep.subr.bf16.mxu0 0
        %1937 = vmatpush1.bf16.msra.mxu0 0
        %1938 = vmatprep.subr.bf16.mxu0 0
        %1939 = vmatpush1.bf16.msra.mxu0 0
        %1940 = vmatprep.subr.bf16.mxu0 0
        %1941 = vmatpush1.bf16.msra.mxu0 0
        %1942 = vmatprep.subr.bf16.mxu0 0
        %1943 = vmatpush1.bf16.msra.mxu0 0
        %1944 = vmatprep.subr.bf16.mxu0 0
        %1945 = vmatpush1.bf16.msra.mxu0 0
        %1946 = vmatprep.subr.bf16.mxu0 0
        %1947 = vmatpush1.bf16.msra.mxu0 0
        %1948 = vmatprep.subr.bf16.mxu0 0
        %1949 = vmatpush1.bf16.msra.mxu0 0
        %1950 = vmatprep.subr.bf16.mxu0 0
        %1951 = vmatpush1.bf16.msra.mxu0 0
        %1952 = vmatprep.mubr.bf16.mxu0 0
        %1953 = vmatmul.mubr.bf16.gmra.mrb[0].mxu0 %v1918
        %v1954 = vpop.f32.mrb[0].mxu0
        %v1955 = vadd.f32 0.0, %v1954
        %v1956 = vpop.f32.mrb[0].mxu0
        %v1957 = vpop.f32.mrb[0].mxu0
        %v1958 = vpop.f32.mrb[0].mxu0
        %1959 = vdwg.mxu0
        %1961 = vrot.lane.b32.xlu0 %v1737, 32
        %v1962 = vpop.permute.xlu0 %1961
        %1965 = vrot.lane.b32.xlu0 %v1846, 64
        %v1966 = vpop.permute.xlu0 %1965
        %1969 = vrot.lane.b32.xlu0 %v1955, 96
        %v1970 = vpop.permute.xlu0 %1969
        %v1972 = vsel %vm1526, %v1625, %v1962
        %vm1973 = vcmask 523264
        %v1974 = vsel %vm1973, %v1972, %v1966
        %vm1975 = vcmask 785408
        %v1976 = vsel %vm1975, %v1974, %v1970
        %v1977 = vpack.c.bf16 %v1976, %v1976
        %v1978 = vld [vmem:[#allocation10] sm:$0xf]
        %v1979 = vld [vmem:[#allocation10 + $0x4] sm:$0xf]
        %v1980 = vld [vmem:[#allocation10 + $0x8] sm:$0xf]
        %v1981 = vld [vmem:[#allocation10 + $0xc] sm:$0xf]
        %v1982 = vld [vmem:[#allocation10 + $0x10] sm:$0xf]
        %v1983 = vld [vmem:[#allocation10 + $0x14] sm:$0xf]
        %v1984 = vld [vmem:[#allocation10 + $0x18] sm:$0xf]
        %v1985 = vld [vmem:[#allocation10 + $0x1c] sm:$0xf]
        %v1986 = vld [vmem:[#allocation10 + $0x20] sm:$0xf]
        %v1987 = vld [vmem:[#allocation10 + $0x24] sm:$0xf]
        %v1988 = vld [vmem:[#allocation10 + $0x28] sm:$0xf]
        %v1989 = vld [vmem:[#allocation10 + $0x2c] sm:$0xf]
        %v1990 = vld [vmem:[#allocation10 + $0x30] sm:$0xf]
        %v1991 = vld [vmem:[#allocation10 + $0x34] sm:$0xf]
        %v1992 = vld [vmem:[#allocation10 + $0x38] sm:$0xf]
        %v1993 = vld [vmem:[#allocation10 + $0x3c] sm:$0xf]
        %v1994 = vld [vmem:[#allocation11] sm:$0x1]
        %v1996 = vlaneseq
        %v1997 = vshrl.u32 %v1996, 7
        %v1998 = vsub.s32 0, %v1997
        %v1999 = vrot.slane %v1994, %v1998
        %v2017 = vunpack.c.l.b16 %v1978
        %v2018 = vunpack.c.l.b16 %v1979
        %v2019 = vunpack.c.l.b16 %v1980
        %v2020 = vunpack.c.l.b16 %v1981
        %v2021 = vunpack.c.l.b16 %v1982
        %v2022 = vunpack.c.l.b16 %v1983
        %v2023 = vunpack.c.l.b16 %v1984
        %v2024 = vunpack.c.l.b16 %v1985
        %v2025 = vunpack.c.l.b16 %v1986
        %v2026 = vunpack.c.l.b16 %v1987
        %v2027 = vunpack.c.l.b16 %v1988
        %v2028 = vunpack.c.l.b16 %v1989
        %v2029 = vunpack.c.l.b16 %v1990
        %v2030 = vunpack.c.l.b16 %v1991
        %v2031 = vunpack.c.l.b16 %v1992
        %v2032 = vunpack.c.l.b16 %v1993
        %v2033 = vpack.c.b16 %v2018, %v2017
        %v2034 = vpack.c.b16 %v2020, %v2019
        %v2035 = vpack.c.b16 %v2022, %v2021
        %v2036 = vpack.c.b16 %v2024, %v2023
        %v2037 = vpack.c.b16 %v2026, %v2025
        %v2038 = vpack.c.b16 %v2028, %v2027
        %v2039 = vpack.c.b16 %v2030, %v2029
        %v2040 = vpack.c.b16 %v2032, %v2031
        %2049 = vmatprep.subr.bf16.mxu0 0
        %2050 = vmatpush1.bf16.msra.mxu0 %v2033
        %2051 = vmatprep.subr.bf16.mxu0 0
        %2052 = vmatpush1.bf16.msra.mxu0 %v2034
        %2053 = vmatprep.subr.bf16.mxu0 0
        %2054 = vmatpush1.bf16.msra.mxu0 %v2035
        %2055 = vmatprep.subr.bf16.mxu0 0
        %2056 = vmatpush1.bf16.msra.mxu0 %v2036
        %2057 = vmatprep.subr.bf16.mxu0 0
        %2058 = vmatpush1.bf16.msra.mxu0 %v2037
        %2059 = vmatprep.subr.bf16.mxu0 0
        %2060 = vmatpush1.bf16.msra.mxu0 %v2038
        %2061 = vmatprep.subr.bf16.mxu0 0
        %2062 = vmatpush1.bf16.msra.mxu0 %v2039
        %2063 = vmatprep.subr.bf16.mxu0 0
        %2064 = vmatpush1.bf16.msra.mxu0 %v2040
        %2065 = vmatprep.subr.bf16.mxu0 0
        %2066 = vmatpush1.bf16.msra.mxu0 0
        %2067 = vmatprep.subr.bf16.mxu0 0
        %2068 = vmatpush1.bf16.msra.mxu0 0
        %2069 = vmatprep.subr.bf16.mxu0 0
        %2070 = vmatpush1.bf16.msra.mxu0 0
        %2071 = vmatprep.subr.bf16.mxu0 0
        %2072 = vmatpush1.bf16.msra.mxu0 0
        %2073 = vmatprep.subr.bf16.mxu0 0
        %2074 = vmatpush1.bf16.msra.mxu0 0
        %2075 = vmatprep.subr.bf16.mxu0 0
        %2076 = vmatpush1.bf16.msra.mxu0 0
        %2077 = vmatprep.subr.bf16.mxu0 0
        %2078 = vmatpush1.bf16.msra.mxu0 0
        %2079 = vmatprep.subr.bf16.mxu0 0
        %2080 = vmatpush1.bf16.msra.mxu0 0
        %2081 = vmatprep.mubr.bf16.mxu0 0
        %2082 = vmatmul.mubr.bf16.gmra.mrb[0].mxu0 %v1977
        %v2083 = vpop.f32.mrb[0].mxu0
        %v2084 = vadd.f32 %v1999, %v2083
        %v2085 = vpop.f32.mrb[0].mxu0
        %v2086 = vpop.f32.mrb[0].mxu0
        %v2087 = vpop.f32.mrb[0].mxu0
        %2088 = vdwg.mxu0
        %v2089 = vadd.f32 %v1258, %v2084
        %v2090 = vld [vmem:[#allocation13] sm:$0x1]
        %v2091 = vld [vmem:[#allocation14] sm:$0x1]
        %2092 = vadd.xlane.f32.xlu0 %v2089
        %v2093 = vpop.xlane.xlu0 %2092
        %v2094 = vrcp.pop 128.0
        %v2095 = vmul.f32 %v2093, %v2094
        %v2096 = vsub.f32 %v2089, %v2095
        %v2097 = vmul.f32 %v2096, %v2096
        %2098 = vadd.xlane.f32.xlu0 %v2097
        %v2099 = vpop.xlane.xlu0 %2098
        %v2100 = vmul.f32 %v2099, %v2094
        %v2101 = vadd.f32 %v2100, 1e-05
        %v2102 = vrsqrt.pop %v2101
        %v2103 = vmul.f32 %v2096, %v2102
        %v2105 = vlaneseq
        %v2106 = vshrl.u32 %v2105, 7
        %v2107 = vsub.s32 0, %v2106
        %v2108 = vrot.slane %v2090, %v2107
        %v2110 = vmul.f32 %v2103, %v2108
        %v2112 = vlaneseq
        %v2113 = vshrl.u32 %v2112, 7
        %v2114 = vsub.s32 0, %v2113
        %v2115 = vrot.slane %v2091, %v2114
        %v2117 = vadd.f32 %v2110, %v2115
        %v2118 = vld [vmem:[#allocation23] sm:$0xf]
        %v2119 = vld [vmem:[#allocation23 + $0x4] sm:$0xf]
        %v2120 = vld [vmem:[#allocation23 + $0x8] sm:$0xf]
        %v2121 = vld [vmem:[#allocation23 + $0xc] sm:$0xf]
        %v2122 = vld [vmem:[#allocation23 + $0x10] sm:$0xf]
        %v2123 = vld [vmem:[#allocation23 + $0x14] sm:$0xf]
        %v2124 = vld [vmem:[#allocation23 + $0x18] sm:$0xf]
        %v2125 = vld [vmem:[#allocation23 + $0x1c] sm:$0xf]
        %v2126 = vld [vmem:[#allocation23 + $0x20] sm:$0xf]
        %v2127 = vld [vmem:[#allocation23 + $0x24] sm:$0xf]
        %v2128 = vld [vmem:[#allocation23 + $0x28] sm:$0xf]
        %v2129 = vld [vmem:[#allocation23 + $0x2c] sm:$0xf]
        %v2130 = vld [vmem:[#allocation23 + $0x30] sm:$0xf]
        %v2131 = vld [vmem:[#allocation23 + $0x34] sm:$0xf]
        %v2132 = vld [vmem:[#allocation23 + $0x38] sm:$0xf]
        %v2133 = vld [vmem:[#allocation23 + $0x3c] sm:$0xf]
        %v2134 = vld [vmem:[#allocation25] sm:$0x1]
        %v2136 = vlaneseq
        %v2137 = vshrl.u32 %v2136, 7
        %v2138 = vsub.s32 0, %v2137
        %v2139 = vrot.slane %v2134, %v2138
        %v2157 = vunpack.c.l.b16 %v2118
        %v2158 = vunpack.c.l.b16 %v2119
        %v2159 = vunpack.c.l.b16 %v2120
        %v2160 = vunpack.c.l.b16 %v2121
        %v2161 = vunpack.c.l.b16 %v2122
        %v2162 = vunpack.c.l.b16 %v2123
        %v2163 = vunpack.c.l.b16 %v2124
        %v2164 = vunpack.c.l.b16 %v2125
        %v2165 = vunpack.c.l.b16 %v2126
        %v2166 = vunpack.c.l.b16 %v2127
        %v2167 = vunpack.c.l.b16 %v2128
        %v2168 = vunpack.c.l.b16 %v2129
        %v2169 = vunpack.c.l.b16 %v2130
        %v2170 = vunpack.c.l.b16 %v2131
        %v2171 = vunpack.c.l.b16 %v2132
        %v2172 = vunpack.c.l.b16 %v2133
        %v2173 = vpack.c.b16 %v2158, %v2157
        %v2174 = vpack.c.b16 %v2160, %v2159
        %v2175 = vpack.c.b16 %v2162, %v2161
        %v2176 = vpack.c.b16 %v2164, %v2163
        %v2177 = vpack.c.b16 %v2166, %v2165
        %v2178 = vpack.c.b16 %v2168, %v2167
        %v2179 = vpack.c.b16 %v2170, %v2169
        %v2180 = vpack.c.b16 %v2172, %v2171
        %2189 = vmatprep.subr.bf16.mxu0 0
        %2190 = vmatpush1.bf16.msra.mxu0 %v2173
        %2191 = vmatprep.subr.bf16.mxu0 0
        %2192 = vmatpush1.bf16.msra.mxu0 %v2174
        %2193 = vmatprep.subr.bf16.mxu0 0
        %2194 = vmatpush1.bf16.msra.mxu0 %v2175
        %2195 = vmatprep.subr.bf16.mxu0 0
        %2196 = vmatpush1.bf16.msra.mxu0 %v2176
        %2197 = vmatprep.subr.bf16.mxu0 0
        %2198 = vmatpush1.bf16.msra.mxu0 %v2177
        %2199 = vmatprep.subr.bf16.mxu0 0
        %2200 = vmatpush1.bf16.msra.mxu0 %v2178
        %2201 = vmatprep.subr.bf16.mxu0 0
        %2202 = vmatpush1.bf16.msra.mxu0 %v2179
        %2203 = vmatprep.subr.bf16.mxu0 0
        %2204 = vmatpush1.bf16.msra.mxu0 %v2180
        %2205 = vmatprep.subr.bf16.mxu0 0
        %2206 = vmatpush1.bf16.msra.mxu0 0
        %2207 = vmatprep.subr.bf16.mxu0 0
        %2208 = vmatpush1.bf16.msra.mxu0 0
        %2209 = vmatprep.subr.bf16.mxu0 0
        %2210 = vmatpush1.bf16.msra.mxu0 0
        %2211 = vmatprep.subr.bf16.mxu0 0
        %2212 = vmatpush1.bf16.msra.mxu0 0
        %2213 = vmatprep.subr.bf16.mxu0 0
        %2214 = vmatpush1.bf16.msra.mxu0 0
        %2215 = vmatprep.subr.bf16.mxu0 0
        %2216 = vmatpush1.bf16.msra.mxu0 0
        %2217 = vmatprep.subr.bf16.mxu0 0
        %2218 = vmatpush1.bf16.msra.mxu0 0
        %2219 = vmatprep.subr.bf16.mxu0 0
        %2220 = vmatpush1.bf16.msra.mxu0 0
        %2221 = vmatprep.mubr.bf16.mxu0 0
        %2222 = vmatmul.mubr.bf16.gmra.mrb[0].mxu0 %v1372
        %v2223 = vpop.f32.mrb[0].mxu0
        %v2224 = vadd.f32 %v2139, %v2223
        %v2225 = vpop.f32.mrb[0].mxu0
        %v2226 = vpop.f32.mrb[0].mxu0
        %v2227 = vadd.f32 %v2139, %v2226
        %v2228 = vpop.f32.mrb[0].mxu0
        %2229 = vdwg.mxu0
        %v2230 = vpack.c.bf16 %v2227, %v2224
        %v2231 = vpack.c.bf16 %v2117, %v2117
        %v2232 = vld [vmem:[#allocation26] sm:$0xff]
        %v2233 = vld [vmem:[#allocation26 + $0x8] sm:$0xff]
        %v2234 = vld [vmem:[#allocation26 + $0x10] sm:$0xff]
        %v2235 = vld [vmem:[#allocation26 + $0x18] sm:$0xff]
        %v2236 = vld [vmem:[#allocation26 + $0x20] sm:$0xff]
        %v2237 = vld [vmem:[#allocation26 + $0x28] sm:$0xff]
        %v2238 = vld [vmem:[#allocation26 + $0x30] sm:$0xff]
        %v2239 = vld [vmem:[#allocation26 + $0x38] sm:$0xff]
        %v2240 = vld [vmem:[#allocation26 + $0x40] sm:$0xff]
        %v2241 = vld [vmem:[#allocation26 + $0x48] sm:$0xff]
        %v2242 = vld [vmem:[#allocation26 + $0x50] sm:$0xff]
        %v2243 = vld [vmem:[#allocation26 + $0x58] sm:$0xff]
        %v2244 = vld [vmem:[#allocation26 + $0x60] sm:$0xff]
        %v2245 = vld [vmem:[#allocation26 + $0x68] sm:$0xff]
        %v2246 = vld [vmem:[#allocation26 + $0x70] sm:$0xff]
        %v2247 = vld [vmem:[#allocation26 + $0x78] sm:$0xff]
        %v2248 = vld [vmem:[#allocation28] sm:$0x3]
        %v2250 = vlaneseq
        %v2251 = vshrl.u32 %v2250, 7
        %v2252 = vsub.s32 0, %v2251
        %v2253 = vrot.slane %v2248, %v2252
        %v2254 = vlaneseq
        %v2255 = vshrl.u32 %v2254, 7
        %v2256 = vsub.s32 1, %v2255
        %v2257 = vrot.slane %v2248, %v2256
        %v2276 = vunpack.c.l.b16 %v2232
        %v2277 = vunpack.c.h.b16 %v2232
        %v2278 = vunpack.c.l.b16 %v2233
        %v2279 = vunpack.c.h.b16 %v2233
        %v2280 = vunpack.c.l.b16 %v2234
        %v2281 = vunpack.c.h.b16 %v2234
        %v2282 = vunpack.c.l.b16 %v2235
        %v2283 = vunpack.c.h.b16 %v2235
        %v2284 = vunpack.c.l.b16 %v2236
        %v2285 = vunpack.c.h.b16 %v2236
        %v2286 = vunpack.c.l.b16 %v2237
        %v2287 = vunpack.c.h.b16 %v2237
        %v2288 = vunpack.c.l.b16 %v2238
        %v2289 = vunpack.c.h.b16 %v2238
        %v2290 = vunpack.c.l.b16 %v2239
        %v2291 = vunpack.c.h.b16 %v2239
        %v2292 = vunpack.c.l.b16 %v2240
        %v2293 = vunpack.c.h.b16 %v2240
        %v2294 = vunpack.c.l.b16 %v2241
        %v2295 = vunpack.c.h.b16 %v2241
        %v2296 = vunpack.c.l.b16 %v2242
        %v2297 = vunpack.c.h.b16 %v2242
        %v2298 = vunpack.c.l.b16 %v2243
        %v2299 = vunpack.c.h.b16 %v2243
        %v2300 = vunpack.c.l.b16 %v2244
        %v2301 = vunpack.c.h.b16 %v2244
        %v2302 = vunpack.c.l.b16 %v2245
        %v2303 = vunpack.c.h.b16 %v2245
        %v2304 = vunpack.c.l.b16 %v2246
        %v2305 = vunpack.c.h.b16 %v2246
        %v2306 = vunpack.c.l.b16 %v2247
        %v2307 = vunpack.c.h.b16 %v2247
        %v2308 = vpack.c.b16 %v2278, %v2276
        %v2309 = vpack.c.b16 %v2279, %v2277
        %v2310 = vpack.c.b16 %v2282, %v2280
        %v2311 = vpack.c.b16 %v2283, %v2281
        %v2312 = vpack.c.b16 %v2286, %v2284
        %v2313 = vpack.c.b16 %v2287, %v2285
        %v2314 = vpack.c.b16 %v2290, %v2288
        %v2315 = vpack.c.b16 %v2291, %v2289
        %v2316 = vpack.c.b16 %v2294, %v2292
        %v2317 = vpack.c.b16 %v2295, %v2293
        %v2318 = vpack.c.b16 %v2298, %v2296
        %v2319 = vpack.c.b16 %v2299, %v2297
        %v2320 = vpack.c.b16 %v2302, %v2300
        %v2321 = vpack.c.b16 %v2303, %v2301
        %v2322 = vpack.c.b16 %v2306, %v2304
        %v2323 = vpack.c.b16 %v2307, %v2305
        %2340 = vmatprep.subr.bf16.mxu0 %v2309
        %2341 = vmatpush1.bf16.msra.mxu0 %v2308
        %2342 = vmatprep.subr.bf16.mxu0 %v2311
        %2343 = vmatpush1.bf16.msra.mxu0 %v2310
        %2344 = vmatprep.subr.bf16.mxu0 %v2313
        %2345 = vmatpush1.bf16.msra.mxu0 %v2312
        %2346 = vmatprep.subr.bf16.mxu0 %v2315
        %2347 = vmatpush1.bf16.msra.mxu0 %v2314
        %2348 = vmatprep.subr.bf16.mxu0 %v2317
        %2349 = vmatpush1.bf16.msra.mxu0 %v2316
        %2350 = vmatprep.subr.bf16.mxu0 %v2319
        %2351 = vmatpush1.bf16.msra.mxu0 %v2318
        %2352 = vmatprep.subr.bf16.mxu0 %v2321
        %2353 = vmatpush1.bf16.msra.mxu0 %v2320
        %2354 = vmatprep.subr.bf16.mxu0 %v2323
        %2355 = vmatpush1.bf16.msra.mxu0 %v2322
        %2356 = vmatprep.subr.bf16.mxu0 0
        %2357 = vmatpush1.bf16.msra.mxu0 0
        %2358 = vmatprep.subr.bf16.mxu0 0
        %2359 = vmatpush1.bf16.msra.mxu0 0
        %2360 = vmatprep.subr.bf16.mxu0 0
        %2361 = vmatpush1.bf16.msra.mxu0 0
        %2362 = vmatprep.subr.bf16.mxu0 0
        %2363 = vmatpush1.bf16.msra.mxu0 0
        %2364 = vmatprep.subr.bf16.mxu0 0
        %2365 = vmatpush1.bf16.msra.mxu0 0
        %2366 = vmatprep.subr.bf16.mxu0 0
        %2367 = vmatpush1.bf16.msra.mxu0 0
        %2368 = vmatprep.subr.bf16.mxu0 0
        %2369 = vmatpush1.bf16.msra.mxu0 0
        %2370 = vmatprep.subr.bf16.mxu0 0
        %2371 = vmatpush1.bf16.msra.mxu0 0
        %2372 = vmatprep.mubr.bf16.mxu0 0
        %2373 = vmatmul.mubr.bf16.gmra.mrb[0].mxu0 %v2231
        %v2374 = vpop.f32.mrb[0].mxu0
        %v2375 = vadd.f32 %v2253, %v2374
        %v2376 = vpop.f32.mrb[0].mxu0
        %v2377 = vadd.f32 %v2257, %v2376
        %v2378 = vpop.f32.mrb[0].mxu0
        %v2379 = vpop.f32.mrb[0].mxu0
        %2380 = vdwg.mxu0
        %v2381 = vpack.c.bf16 %v2375, %v2375
        %v2382 = vpack.c.bf16 %v2377, %v2377
        %v2384 = vsel %vm1526, %v2230, 0
        %v2387 = vsel %vm1526, %v2381, 0
        %2389 = vmatprep.subr.bf16.mxu0 0
        %2390 = vmatpush1.bf16.xpose.msra.mxu0 %v2387
        %2391 = vmatprep.subr.bf16.mxu0 0
        %2392 = vmatpush1.bf16.xpose.msra.mxu0 0
        %2393 = vmatprep.subr.bf16.mxu0 0
        %2394 = vmatpush1.bf16.xpose.msra.mxu0 0
        %2395 = vmatprep.subr.bf16.mxu0 0
        %2396 = vmatpush1.bf16.xpose.msra.mxu0 0
        %2397 = vmatprep.subr.bf16.mxu0 0
        %2398 = vmatpush1.bf16.xpose.msra.mxu0 0
        %2399 = vmatprep.subr.bf16.mxu0 0
        %2400 = vmatpush1.bf16.xpose.msra.mxu0 0
        %2401 = vmatprep.subr.bf16.mxu0 0
        %2402 = vmatpush1.bf16.xpose.msra.mxu0 0
        %2403 = vmatprep.subr.bf16.mxu0 0
        %2404 = vmatpush1.bf16.xpose.msra.mxu0 0
        %2405 = vmatprep.subr.bf16.mxu0 0
        %2406 = vmatpush1.bf16.xpose.msra.mxu0 0
        %2407 = vmatprep.subr.bf16.mxu0 0
        %2408 = vmatpush1.bf16.xpose.msra.mxu0 0
        %2409 = vmatprep.subr.bf16.mxu0 0
        %2410 = vmatpush1.bf16.xpose.msra.mxu0 0
        %2411 = vmatprep.subr.bf16.mxu0 0
        %2412 = vmatpush1.bf16.xpose.msra.mxu0 0
        %2413 = vmatprep.subr.bf16.mxu0 0
        %2414 = vmatpush1.bf16.xpose.msra.mxu0 0
        %2415 = vmatprep.subr.bf16.mxu0 0
        %2416 = vmatpush1.bf16.xpose.msra.mxu0 0
        %2417 = vmatprep.subr.bf16.mxu0 0
        %2418 = vmatpush1.bf16.xpose.msra.mxu0 0
        %2419 = vmatprep.subr.bf16.mxu0 0
        %2420 = vmatpush1.bf16.xpose.msra.mxu0 0
        %2421 = vmatprep.mubr.bf16.mxu0 0
        %2422 = vmatmul.mubr.bf16.gmra.mrb[0].mxu0 %v2384
        %v2423 = vpop.f32.mrb[0].mxu0
        %v2424 = vadd.f32 0.0, %v2423
        %v2425 = vpop.f32.mrb[0].mxu0
        %v2426 = vpop.f32.mrb[0].mxu0
        %v2427 = vadd.f32 0.0, %v2426
        %v2428 = vpop.f32.mrb[0].mxu0
        %2429 = vdwg.mxu0
        %v2430 = vmul.f32 %v2424, 0.17677669
        %v2431 = vmul.f32 %v2427, 0.17677669
        %vm2432 = vcmask 64512
        %v2433 = vsel %vm2432, %v2430, -inf
        %2434 = vmax.xlane.f32.xlu0 %v2433
        %v2435 = vpop.xlane.xlu0 %2434
        %v2436 = vsel %vm2432, %v2431, -inf
        %2437 = vmax.xlane.f32.xlu0 %v2436
        %v2438 = vpop.xlane.xlu0 %2437
        %v2439 = vsub.f32 %v2430, %v2435
        %v2440 = vsub.f32 %v2431, %v2438
        %v2441 = vmul.f32 %v2439, 1.442695
        %v2442 = vpow.pop %v2441
        %v2443 = vmul.f32 %v2440, 1.442695
        %v2444 = vpow.pop %v2443
        %v2445 = vsel %vm2432, %v2442, 0.0
        %2446 = vadd.xlane.f32.xlu0 %v2445
        %v2447 = vpop.xlane.xlu0 %2446
        %v2448 = vsel %vm2432, %v2444, 0.0
        %2449 = vadd.xlane.f32.xlu0 %v2448
        %v2450 = vpop.xlane.xlu0 %2449
        %v2451 = vrcp.pop %v2447
        %v2452 = vrcp.pop %v2450
        %v2453 = vmul.f32 %v2442, %v2451
        %v2454 = vmul.f32 %v2444, %v2452
        %v2455 = vpack.c.bf16 %v2454, %v2453
        %v2457 = vsel %vm2432, %v2455, 0
        %vm2459 = vcmask 1043456
        %v2461 = vsel %vm2459, %v2382, 0
        %2463 = vmatprep.subr.bf16.mxu0 0
        %2464 = vmatpush1.bf16.msra.mxu0 %v2461
        %2465 = vmatprep.subr.bf16.mxu0 0
        %2466 = vmatpush1.bf16.msra.mxu0 0
        %2467 = vmatprep.subr.bf16.mxu0 0
        %2468 = vmatpush1.bf16.msra.mxu0 0
        %2469 = vmatprep.subr.bf16.mxu0 0
        %2470 = vmatpush1.bf16.msra.mxu0 0
        %2471 = vmatprep.subr.bf16.mxu0 0
        %2472 = vmatpush1.bf16.msra.mxu0 0
        %2473 = vmatprep.subr.bf16.mxu0 0
        %2474 = vmatpush1.bf16.msra.mxu0 0
        %2475 = vmatprep.subr.bf16.mxu0 0
        %2476 = vmatpush1.bf16.msra.mxu0 0
        %2477 = vmatprep.subr.bf16.mxu0 0
        %2478 = vmatpush1.bf16.msra.mxu0 0
        %2479 = vmatprep.subr.bf16.mxu0 0
        %2480 = vmatpush1.bf16.msra.mxu0 0
        %2481 = vmatprep.subr.bf16.mxu0 0
        %2482 = vmatpush1.bf16.msra.mxu0 0
        %2483 = vmatprep.subr.bf16.mxu0 0
        %2484 = vmatpush1.bf16.msra.mxu0 0
        %2485 = vmatprep.subr.bf16.mxu0 0
        %2486 = vmatpush1.bf16.msra.mxu0 0
        %2487 = vmatprep.subr.bf16.mxu0 0
        %2488 = vmatpush1.bf16.msra.mxu0 0
        %2489 = vmatprep.subr.bf16.mxu0 0
        %2490 = vmatpush1.bf16.msra.mxu0 0
        %2491 = vmatprep.subr.bf16.mxu0 0
        %2492 = vmatpush1.bf16.msra.mxu0 0
        %2493 = vmatprep.subr.bf16.mxu0 0
        %2494 = vmatpush1.bf16.msra.mxu0 0
        %2495 = vmatprep.mubr.bf16.mxu0 0
        %2496 = vmatmul.mubr.bf16.gmra.mrb[0].mxu0 %v2457
        %v2497 = vpop.f32.mrb[0].mxu0
        %v2498 = vadd.f32 0.0, %v2497
        %v2499 = vpop.f32.mrb[0].mxu0
        %v2500 = vpop.f32.mrb[0].mxu0
        %v2501 = vadd.f32 0.0, %v2500
        %v2502 = vpop.f32.mrb[0].mxu0
        %2503 = vdwg.mxu0
        %2505 = vrot.lane.b32.xlu0 %v2230, 96
        %v2506 = vpop.permute.xlu0 %2505
        %2508 = vrot.lane.b32.xlu0 %v2381, 96
        %v2509 = vpop.permute.xlu0 %2508
        %v2511 = vsel %vm1526, %v2506, 0
        %v2514 = vsel %vm1526, %v2509, 0
        %2516 = vmatprep.subr.bf16.mxu0 0
        %2517 = vmatpush1.bf16.xpose.msra.mxu0 %v2514
        %2518 = vmatprep.subr.bf16.mxu0 0
        %2519 = vmatpush1.bf16.xpose.msra.mxu0 0
        %2520 = vmatprep.subr.bf16.mxu0 0
        %2521 = vmatpush1.bf16.xpose.msra.mxu0 0
        %2522 = vmatprep.subr.bf16.mxu0 0
        %2523 = vmatpush1.bf16.xpose.msra.mxu0 0
        %2524 = vmatprep.subr.bf16.mxu0 0
        %2525 = vmatpush1.bf16.xpose.msra.mxu0 0
        %2526 = vmatprep.subr.bf16.mxu0 0
        %2527 = vmatpush1.bf16.xpose.msra.mxu0 0
        %2528 = vmatprep.subr.bf16.mxu0 0
        %2529 = vmatpush1.bf16.xpose.msra.mxu0 0
        %2530 = vmatprep.subr.bf16.mxu0 0
        %2531 = vmatpush1.bf16.xpose.msra.mxu0 0
        %2532 = vmatprep.subr.bf16.mxu0 0
        %2533 = vmatpush1.bf16.xpose.msra.mxu0 0
        %2534 = vmatprep.subr.bf16.mxu0 0
        %2535 = vmatpush1.bf16.xpose.msra.mxu0 0
        %2536 = vmatprep.subr.bf16.mxu0 0
        %2537 = vmatpush1.bf16.xpose.msra.mxu0 0
        %2538 = vmatprep.subr.bf16.mxu0 0
        %2539 = vmatpush1.bf16.xpose.msra.mxu0 0
        %2540 = vmatprep.subr.bf16.mxu0 0
        %2541 = vmatpush1.bf16.xpose.msra.mxu0 0
        %2542 = vmatprep.subr.bf16.mxu0 0
        %2543 = vmatpush1.bf16.xpose.msra.mxu0 0
        %2544 = vmatprep.subr.bf16.mxu0 0
        %2545 = vmatpush1.bf16.xpose.msra.mxu0 0
        %2546 = vmatprep.subr.bf16.mxu0 0
        %2547 = vmatpush1.bf16.xpose.msra.mxu0 0
        %2548 = vmatprep.mubr.bf16.mxu0 0
        %2549 = vmatmul.mubr.bf16.gmra.mrb[0].mxu0 %v2511
        %v2550 = vpop.f32.mrb[0].mxu0
        %v2551 = vadd.f32 0.0, %v2550
        %v2552 = vpop.f32.mrb[0].mxu0
        %v2553 = vpop.f32.mrb[0].mxu0
        %v2554 = vadd.f32 0.0, %v2553
        %v2555 = vpop.f32.mrb[0].mxu0
        %2556 = vdwg.mxu0
        %v2557 = vmul.f32 %v2551, 0.17677669
        %v2558 = vmul.f32 %v2554, 0.17677669
        %v2559 = vsel %vm2432, %v2557, -inf
        %2560 = vmax.xlane.f32.xlu0 %v2559
        %v2561 = vpop.xlane.xlu0 %2560
        %v2562 = vsel %vm2432, %v2558, -inf
        %2563 = vmax.xlane.f32.xlu0 %v2562
        %v2564 = vpop.xlane.xlu0 %2563
        %v2565 = vsub.f32 %v2557, %v2561
        %v2566 = vsub.f32 %v2558, %v2564
        %v2567 = vmul.f32 %v2565, 1.442695
        %v2568 = vpow.pop %v2567
        %v2569 = vmul.f32 %v2566, 1.442695
        %v2570 = vpow.pop %v2569
        %v2571 = vsel %vm2432, %v2568, 0.0
        %2572 = vadd.xlane.f32.xlu0 %v2571
        %v2573 = vpop.xlane.xlu0 %2572
        %v2574 = vsel %vm2432, %v2570, 0.0
        %2575 = vadd.xlane.f32.xlu0 %v2574
        %v2576 = vpop.xlane.xlu0 %2575
        %v2577 = vrcp.pop %v2573
        %v2578 = vrcp.pop %v2576
        %v2579 = vmul.f32 %v2568, %v2577
        %v2580 = vmul.f32 %v2570, %v2578
        %v2581 = vpack.c.bf16 %v2580, %v2579
        %2583 = vrot.lane.b32.xlu0 %v2382, 96
        %v2584 = vpop.permute.xlu0 %2583
        %v2586 = vsel %vm2432, %v2581, 0
        %v2589 = vsel %vm2459, %v2584, 0
        %2591 = vmatprep.subr.bf16.mxu0 0
        %2592 = vmatpush1.bf16.msra.mxu0 %v2589
        %2593 = vmatprep.subr.bf16.mxu0 0
        %2594 = vmatpush1.bf16.msra.mxu0 0
        %2595 = vmatprep.subr.bf16.mxu0 0
        %2596 = vmatpush1.bf16.msra.mxu0 0
        %2597 = vmatprep.subr.bf16.mxu0 0
        %2598 = vmatpush1.bf16.msra.mxu0 0
        %2599 = vmatprep.subr.bf16.mxu0 0
        %2600 = vmatpush1.bf16.msra.mxu0 0
        %2601 = vmatprep.subr.bf16.mxu0 0
        %2602 = vmatpush1.bf16.msra.mxu0 0
        %2603 = vmatprep.subr.bf16.mxu0 0
        %2604 = vmatpush1.bf16.msra.mxu0 0
        %2605 = vmatprep.subr.bf16.mxu0 0
        %2606 = vmatpush1.bf16.msra.mxu0 0
        %2607 = vmatprep.subr.bf16.mxu0 0
        %2608 = vmatpush1.bf16.msra.mxu0 0
        %2609 = vmatprep.subr.bf16.mxu0 0
        %2610 = vmatpush1.bf16.msra.mxu0 0
        %2611 = vmatprep.subr.bf16.mxu0 0
        %2612 = vmatpush1.bf16.msra.mxu0 0
        %2613 = vmatprep.subr.bf16.mxu0 0
        %2614 = vmatpush1.bf16.msra.mxu0 0
        %2615 = vmatprep.subr.bf16.mxu0 0
        %2616 = vmatpush1.bf16.msra.mxu0 0
        %2617 = vmatprep.subr.bf16.mxu0 0
        %2618 = vmatpush1.bf16.msra.mxu0 0
        %2619 = vmatprep.subr.bf16.mxu0 0
        %2620 = vmatpush1.bf16.msra.mxu0 0
        %2621 = vmatprep.subr.bf16.mxu0 0
        %2622 = vmatpush1.bf16.msra.mxu0 0
        %2623 = vmatprep.mubr.bf16.mxu0 0
        %2624 = vmatmul.mubr.bf16.gmra.mrb[0].mxu0 %v2586
        %v2625 = vpop.f32.mrb[0].mxu0
        %v2626 = vadd.f32 0.0, %v2625
        %v2627 = vpop.f32.mrb[0].mxu0
        %v2628 = vpop.f32.mrb[0].mxu0
        %v2629 = vadd.f32 0.0, %v2628
        %v2630 = vpop.f32.mrb[0].mxu0
        %2631 = vdwg.mxu0
        %2632 = vrot.lane.b32.xlu0 %v2230, 64
        %v2633 = vpop.permute.xlu0 %2632
        %2634 = vrot.lane.b32.xlu0 %v2381, 64
        %v2635 = vpop.permute.xlu0 %2634
        %v2637 = vsel %vm1526, %v2633, 0
        %v2640 = vsel %vm1526, %v2635, 0
        %2642 = vmatprep.subr.bf16.mxu0 0
        %2643 = vmatpush1.bf16.xpose.msra.mxu0 %v2640
        %2644 = vmatprep.subr.bf16.mxu0 0
        %2645 = vmatpush1.bf16.xpose.msra.mxu0 0
        %2646 = vmatprep.subr.bf16.mxu0 0
        %2647 = vmatpush1.bf16.xpose.msra.mxu0 0
        %2648 = vmatprep.subr.bf16.mxu0 0
        %2649 = vmatpush1.bf16.xpose.msra.mxu0 0
        %2650 = vmatprep.subr.bf16.mxu0 0
        %2651 = vmatpush1.bf16.xpose.msra.mxu0 0
        %2652 = vmatprep.subr.bf16.mxu0 0
        %2653 = vmatpush1.bf16.xpose.msra.mxu0 0
        %2654 = vmatprep.subr.bf16.mxu0 0
        %2655 = vmatpush1.bf16.xpose.msra.mxu0 0
        %2656 = vmatprep.subr.bf16.mxu0 0
        %2657 = vmatpush1.bf16.xpose.msra.mxu0 0
        %2658 = vmatprep.subr.bf16.mxu0 0
        %2659 = vmatpush1.bf16.xpose.msra.mxu0 0
        %2660 = vmatprep.subr.bf16.mxu0 0
        %2661 = vmatpush1.bf16.xpose.msra.mxu0 0
        %2662 = vmatprep.subr.bf16.mxu0 0
        %2663 = vmatpush1.bf16.xpose.msra.mxu0 0
        %2664 = vmatprep.subr.bf16.mxu0 0
        %2665 = vmatpush1.bf16.xpose.msra.mxu0 0
        %2666 = vmatprep.subr.bf16.mxu0 0
        %2667 = vmatpush1.bf16.xpose.msra.mxu0 0
        %2668 = vmatprep.subr.bf16.mxu0 0
        %2669 = vmatpush1.bf16.xpose.msra.mxu0 0
        %2670 = vmatprep.subr.bf16.mxu0 0
        %2671 = vmatpush1.bf16.xpose.msra.mxu0 0
        %2672 = vmatprep.subr.bf16.mxu0 0
        %2673 = vmatpush1.bf16.xpose.msra.mxu0 0
        %2674 = vmatprep.mubr.bf16.mxu0 0
        %2675 = vmatmul.mubr.bf16.gmra.mrb[0].mxu0 %v2637
        %v2676 = vpop.f32.mrb[0].mxu0
        %v2677 = vadd.f32 0.0, %v2676
        %v2678 = vpop.f32.mrb[0].mxu0
        %v2679 = vpop.f32.mrb[0].mxu0
        %v2680 = vadd.f32 0.0, %v2679
        %v2681 = vpop.f32.mrb[0].mxu0
        %2682 = vdwg.mxu0
        %v2683 = vmul.f32 %v2677, 0.17677669
        %v2684 = vmul.f32 %v2680, 0.17677669
        %v2685 = vsel %vm2432, %v2683, -inf
        %2686 = vmax.xlane.f32.xlu0 %v2685
        %v2687 = vpop.xlane.xlu0 %2686
        %v2688 = vsel %vm2432, %v2684, -inf
        %2689 = vmax.xlane.f32.xlu0 %v2688
        %v2690 = vpop.xlane.xlu0 %2689
        %v2691 = vsub.f32 %v2683, %v2687
        %v2692 = vsub.f32 %v2684, %v2690
        %v2693 = vmul.f32 %v2691, 1.442695
        %v2694 = vpow.pop %v2693
        %v2695 = vmul.f32 %v2692, 1.442695
        %v2696 = vpow.pop %v2695
        %v2697 = vsel %vm2432, %v2694, 0.0
        %2698 = vadd.xlane.f32.xlu0 %v2697
        %v2699 = vpop.xlane.xlu0 %2698
        %v2700 = vsel %vm2432, %v2696, 0.0
        %2701 = vadd.xlane.f32.xlu0 %v2700
        %v2702 = vpop.xlane.xlu0 %2701
        %v2703 = vrcp.pop %v2699
        %v2704 = vrcp.pop %v2702
        %v2705 = vmul.f32 %v2694, %v2703
        %v2706 = vmul.f32 %v2696, %v2704
        %v2707 = vpack.c.bf16 %v2706, %v2705
        %2708 = vrot.lane.b32.xlu0 %v2382, 64
        %v2709 = vpop.permute.xlu0 %2708
        %v2711 = vsel %vm2432, %v2707, 0
        %v2714 = vsel %vm2459, %v2709, 0
        %2716 = vmatprep.subr.bf16.mxu0 0
        %2717 = vmatpush1.bf16.msra.mxu0 %v2714
        %2718 = vmatprep.subr.bf16.mxu0 0
        %2719 = vmatpush1.bf16.msra.mxu0 0
        %2720 = vmatprep.subr.bf16.mxu0 0
        %2721 = vmatpush1.bf16.msra.mxu0 0
        %2722 = vmatprep.subr.bf16.mxu0 0
        %2723 = vmatpush1.bf16.msra.mxu0 0
        %2724 = vmatprep.subr.bf16.mxu0 0
        %2725 = vmatpush1.bf16.msra.mxu0 0
        %2726 = vmatprep.subr.bf16.mxu0 0
        %2727 = vmatpush1.bf16.msra.mxu0 0
        %2728 = vmatprep.subr.bf16.mxu0 0
        %2729 = vmatpush1.bf16.msra.mxu0 0
        %2730 = vmatprep.subr.bf16.mxu0 0
        %2731 = vmatpush1.bf16.msra.mxu0 0
        %2732 = vmatprep.subr.bf16.mxu0 0
        %2733 = vmatpush1.bf16.msra.mxu0 0
        %2734 = vmatprep.subr.bf16.mxu0 0
        %2735 = vmatpush1.bf16.msra.mxu0 0
        %2736 = vmatprep.subr.bf16.mxu0 0
        %2737 = vmatpush1.bf16.msra.mxu0 0
        %2738 = vmatprep.subr.bf16.mxu0 0
        %2739 = vmatpush1.bf16.msra.mxu0 0
        %2740 = vmatprep.subr.bf16.mxu0 0
        %2741 = vmatpush1.bf16.msra.mxu0 0
        %2742 = vmatprep.subr.bf16.mxu0 0
        %2743 = vmatpush1.bf16.msra.mxu0 0
        %2744 = vmatprep.subr.bf16.mxu0 0
        %2745 = vmatpush1.bf16.msra.mxu0 0
        %2746 = vmatprep.subr.bf16.mxu0 0
        %2747 = vmatpush1.bf16.msra.mxu0 0
        %2748 = vmatprep.mubr.bf16.mxu0 0
        %2749 = vmatmul.mubr.bf16.gmra.mrb[0].mxu0 %v2711
        %v2750 = vpop.f32.mrb[0].mxu0
        %v2751 = vadd.f32 0.0, %v2750
        %v2752 = vpop.f32.mrb[0].mxu0
        %v2753 = vpop.f32.mrb[0].mxu0
        %v2754 = vadd.f32 0.0, %v2753
        %v2755 = vpop.f32.mrb[0].mxu0
        %2756 = vdwg.mxu0
        %2757 = vrot.lane.b32.xlu0 %v2230, 32
        %v2758 = vpop.permute.xlu0 %2757
        %2759 = vrot.lane.b32.xlu0 %v2381, 32
        %v2760 = vpop.permute.xlu0 %2759
        %v2762 = vsel %vm1526, %v2758, 0
        %v2765 = vsel %vm1526, %v2760, 0
        %2767 = vmatprep.subr.bf16.mxu0 0
        %2768 = vmatpush1.bf16.xpose.msra.mxu0 %v2765
        %2769 = vmatprep.subr.bf16.mxu0 0
        %2770 = vmatpush1.bf16.xpose.msra.mxu0 0
        %2771 = vmatprep.subr.bf16.mxu0 0
        %2772 = vmatpush1.bf16.xpose.msra.mxu0 0
        %2773 = vmatprep.subr.bf16.mxu0 0
        %2774 = vmatpush1.bf16.xpose.msra.mxu0 0
        %2775 = vmatprep.subr.bf16.mxu0 0
        %2776 = vmatpush1.bf16.xpose.msra.mxu0 0
        %2777 = vmatprep.subr.bf16.mxu0 0
        %2778 = vmatpush1.bf16.xpose.msra.mxu0 0
        %2779 = vmatprep.subr.bf16.mxu0 0
        %2780 = vmatpush1.bf16.xpose.msra.mxu0 0
        %2781 = vmatprep.subr.bf16.mxu0 0
        %2782 = vmatpush1.bf16.xpose.msra.mxu0 0
        %2783 = vmatprep.subr.bf16.mxu0 0
        %2784 = vmatpush1.bf16.xpose.msra.mxu0 0
        %2785 = vmatprep.subr.bf16.mxu0 0
        %2786 = vmatpush1.bf16.xpose.msra.mxu0 0
        %2787 = vmatprep.subr.bf16.mxu0 0
        %2788 = vmatpush1.bf16.xpose.msra.mxu0 0
        %2789 = vmatprep.subr.bf16.mxu0 0
        %2790 = vmatpush1.bf16.xpose.msra.mxu0 0
        %2791 = vmatprep.subr.bf16.mxu0 0
        %2792 = vmatpush1.bf16.xpose.msra.mxu0 0
        %2793 = vmatprep.subr.bf16.mxu0 0
        %2794 = vmatpush1.bf16.xpose.msra.mxu0 0
        %2795 = vmatprep.subr.bf16.mxu0 0
        %2796 = vmatpush1.bf16.xpose.msra.mxu0 0
        %2797 = vmatprep.subr.bf16.mxu0 0
        %2798 = vmatpush1.bf16.xpose.msra.mxu0 0
        %2799 = vmatprep.mubr.bf16.mxu0 0
        %2800 = vmatmul.mubr.bf16.gmra.mrb[0].mxu0 %v2762
        %v2801 = vpop.f32.mrb[0].mxu0
        %v2802 = vadd.f32 0.0, %v2801
        %v2803 = vpop.f32.mrb[0].mxu0
        %v2804 = vpop.f32.mrb[0].mxu0
        %v2805 = vadd.f32 0.0, %v2804
        %v2806 = vpop.f32.mrb[0].mxu0
        %2807 = vdwg.mxu0
        %v2808 = vmul.f32 %v2802, 0.17677669
        %v2809 = vmul.f32 %v2805, 0.17677669
        %v2810 = vsel %vm2432, %v2808, -inf
        %2811 = vmax.xlane.f32.xlu0 %v2810
        %v2812 = vpop.xlane.xlu0 %2811
        %v2813 = vsel %vm2432, %v2809, -inf
        %2814 = vmax.xlane.f32.xlu0 %v2813
        %v2815 = vpop.xlane.xlu0 %2814
        %v2816 = vsub.f32 %v2808, %v2812
        %v2817 = vsub.f32 %v2809, %v2815
        %v2818 = vmul.f32 %v2816, 1.442695
        %v2819 = vpow.pop %v2818
        %v2820 = vmul.f32 %v2817, 1.442695
        %v2821 = vpow.pop %v2820
        %v2822 = vsel %vm2432, %v2819, 0.0
        %2823 = vadd.xlane.f32.xlu0 %v2822
        %v2824 = vpop.xlane.xlu0 %2823
        %v2825 = vsel %vm2432, %v2821, 0.0
        %2826 = vadd.xlane.f32.xlu0 %v2825
        %v2827 = vpop.xlane.xlu0 %2826
        %v2828 = vrcp.pop %v2824
        %v2829 = vrcp.pop %v2827
        %v2830 = vmul.f32 %v2819, %v2828
        %v2831 = vmul.f32 %v2821, %v2829
        %v2832 = vpack.c.bf16 %v2831, %v2830
        %2833 = vrot.lane.b32.xlu0 %v2382, 32
        %v2834 = vpop.permute.xlu0 %2833
        %v2836 = vsel %vm2432, %v2832, 0
        %v2839 = vsel %vm2459, %v2834, 0
        %2841 = vmatprep.subr.bf16.mxu0 0
        %2842 = vmatpush1.bf16.msra.mxu0 %v2839
        %2843 = vmatprep.subr.bf16.mxu0 0
        %2844 = vmatpush1.bf16.msra.mxu0 0
        %2845 = vmatprep.subr.bf16.mxu0 0
        %2846 = vmatpush1.bf16.msra.mxu0 0
        %2847 = vmatprep.subr.bf16.mxu0 0
        %2848 = vmatpush1.bf16.msra.mxu0 0
        %2849 = vmatprep.subr.bf16.mxu0 0
        %2850 = vmatpush1.bf16.msra.mxu0 0
        %2851 = vmatprep.subr.bf16.mxu0 0
        %2852 = vmatpush1.bf16.msra.mxu0 0
        %2853 = vmatprep.subr.bf16.mxu0 0
        %2854 = vmatpush1.bf16.msra.mxu0 0
        %2855 = vmatprep.subr.bf16.mxu0 0
        %2856 = vmatpush1.bf16.msra.mxu0 0
        %2857 = vmatprep.subr.bf16.mxu0 0
        %2858 = vmatpush1.bf16.msra.mxu0 0
        %2859 = vmatprep.subr.bf16.mxu0 0
        %2860 = vmatpush1.bf16.msra.mxu0 0
        %2861 = vmatprep.subr.bf16.mxu0 0
        %2862 = vmatpush1.bf16.msra.mxu0 0
        %2863 = vmatprep.subr.bf16.mxu0 0
        %2864 = vmatpush1.bf16.msra.mxu0 0
        %2865 = vmatprep.subr.bf16.mxu0 0
        %2866 = vmatpush1.bf16.msra.mxu0 0
        %2867 = vmatprep.subr.bf16.mxu0 0
        %2868 = vmatpush1.bf16.msra.mxu0 0
        %2869 = vmatprep.subr.bf16.mxu0 0
        %2870 = vmatpush1.bf16.msra.mxu0 0
        %2871 = vmatprep.subr.bf16.mxu0 0
        %2872 = vmatpush1.bf16.msra.mxu0 0
        %2873 = vmatprep.mubr.bf16.mxu0 0
        %2874 = vmatmul.mubr.bf16.gmra.mrb[0].mxu0 %v2836
        %v2875 = vpop.f32.mrb[0].mxu0
        %v2876 = vadd.f32 0.0, %v2875
        %v2877 = vpop.f32.mrb[0].mxu0
        %v2878 = vpop.f32.mrb[0].mxu0
        %v2879 = vadd.f32 0.0, %v2878
        %v2880 = vpop.f32.mrb[0].mxu0
        %2881 = vdwg.mxu0
        %2884 = vrot.lane.b32.xlu0 %v2626, 32
        %v2885 = vpop.permute.xlu0 %2884
        %2886 = vrot.lane.b32.xlu0 %v2629, 32
        %v2887 = vpop.permute.xlu0 %2886
        %2892 = vrot.lane.b32.xlu0 %v2751, 64
        %v2893 = vpop.permute.xlu0 %2892
        %2894 = vrot.lane.b32.xlu0 %v2754, 64
        %v2895 = vpop.permute.xlu0 %2894
        %2900 = vrot.lane.b32.xlu0 %v2876, 96
        %v2901 = vpop.permute.xlu0 %2900
        %2902 = vrot.lane.b32.xlu0 %v2879, 96
        %v2903 = vpop.permute.xlu0 %2902
        %v2906 = vsel %vm1526, %v2498, %v2885
        %v2907 = vsel %vm1526, %v2501, %v2887
        %v2908 = vsel %vm1973, %v2906, %v2893
        %v2909 = vsel %vm1973, %v2907, %v2895
        %v2910 = vsel %vm1975, %v2908, %v2901
        %v2911 = vsel %vm1975, %v2909, %v2903
        %v2912 = vpack.c.bf16 %v2911, %v2910
        %v2913 = vld [vmem:[%s41] sm:$0xf]
        %v2914 = vld [vmem:[%s41 + $0x4] sm:$0xf]
        %v2915 = vld [vmem:[%s41 + $0x8] sm:$0xf]
        %v2916 = vld [vmem:[%s41 + $0xc] sm:$0xf]
        %v2917 = vld [vmem:[%s41 + $0x10] sm:$0xf]
        %v2918 = vld [vmem:[%s41 + $0x14] sm:$0xf]
        %v2919 = vld [vmem:[%s41 + $0x18] sm:$0xf]
        %v2920 = vld [vmem:[%s41 + $0x1c] sm:$0xf]
        %v2921 = vld [vmem:[%s41 + $0x20] sm:$0xf]
        %v2922 = vld [vmem:[%s41 + $0x24] sm:$0xf]
        %v2923 = vld [vmem:[%s41 + $0x28] sm:$0xf]
        %v2924 = vld [vmem:[%s41 + $0x2c] sm:$0xf]
        %v2925 = vld [vmem:[%s41 + $0x30] sm:$0xf]
        %v2926 = vld [vmem:[%s41 + $0x34] sm:$0xf]
        %v2927 = vld [vmem:[%s41 + $0x38] sm:$0xf]
        %v2928 = vld [vmem:[%s41 + $0x3c] sm:$0xf]
        %v2929 = vld [vmem:[%s43] sm:$0x1]
        %v2931 = vlaneseq
        %v2932 = vshrl.u32 %v2931, 7
        %v2933 = vsub.s32 0, %v2932
        %v2934 = vrot.slane %v2929, %v2933
        %v2952 = vunpack.c.l.b16 %v2913
        %v2953 = vunpack.c.l.b16 %v2914
        %v2954 = vunpack.c.l.b16 %v2915
        %v2955 = vunpack.c.l.b16 %v2916
        %v2956 = vunpack.c.l.b16 %v2917
        %v2957 = vunpack.c.l.b16 %v2918
        %v2958 = vunpack.c.l.b16 %v2919
        %v2959 = vunpack.c.l.b16 %v2920
        %v2960 = vunpack.c.l.b16 %v2921
        %v2961 = vunpack.c.l.b16 %v2922
        %v2962 = vunpack.c.l.b16 %v2923
        %v2963 = vunpack.c.l.b16 %v2924
        %v2964 = vunpack.c.l.b16 %v2925
        %v2965 = vunpack.c.l.b16 %v2926
        %v2966 = vunpack.c.l.b16 %v2927
        %v2967 = vunpack.c.l.b16 %v2928
        %v2968 = vpack.c.b16 %v2953, %v2952
        %v2969 = vpack.c.b16 %v2955, %v2954
        %v2970 = vpack.c.b16 %v2957, %v2956
        %v2971 = vpack.c.b16 %v2959, %v2958
        %v2972 = vpack.c.b16 %v2961, %v2960
        %v2973 = vpack.c.b16 %v2963, %v2962
        %v2974 = vpack.c.b16 %v2965, %v2964
        %v2975 = vpack.c.b16 %v2967, %v2966
        %2984 = vmatprep.subr.bf16.mxu0 0
        %2985 = vmatpush1.bf16.msra.mxu0 %v2968
        %2986 = vmatprep.subr.bf16.mxu0 0
        %2987 = vmatpush1.bf16.msra.mxu0 %v2969
        %2988 = vmatprep.subr.bf16.mxu0 0
        %2989 = vmatpush1.bf16.msra.mxu0 %v2970
        %2990 = vmatprep.subr.bf16.mxu0 0
        %2991 = vmatpush1.bf16.msra.mxu0 %v2971
        %2992 = vmatprep.subr.bf16.mxu0 0
        %2993 = vmatpush1.bf16.msra.mxu0 %v2972
        %2994 = vmatprep.subr.bf16.mxu0 0
        %2995 = vmatpush1.bf16.msra.mxu0 %v2973
        %2996 = vmatprep.subr.bf16.mxu0 0
        %2997 = vmatpush1.bf16.msra.mxu0 %v2974
        %2998 = vmatprep.subr.bf16.mxu0 0
        %2999 = vmatpush1.bf16.msra.mxu0 %v2975
        %3000 = vmatprep.subr.bf16.mxu0 0
        %3001 = vmatpush1.bf16.msra.mxu0 0
        %3002 = vmatprep.subr.bf16.mxu0 0
        %3003 = vmatpush1.bf16.msra.mxu0 0
        %3004 = vmatprep.subr.bf16.mxu0 0
        %3005 = vmatpush1.bf16.msra.mxu0 0
        %3006 = vmatprep.subr.bf16.mxu0 0
        %3007 = vmatpush1.bf16.msra.mxu0 0
        %3008 = vmatprep.subr.bf16.mxu0 0
        %3009 = vmatpush1.bf16.msra.mxu0 0
        %3010 = vmatprep.subr.bf16.mxu0 0
        %3011 = vmatpush1.bf16.msra.mxu0 0
        %3012 = vmatprep.subr.bf16.mxu0 0
        %3013 = vmatpush1.bf16.msra.mxu0 0
        %3014 = vmatprep.subr.bf16.mxu0 0
        %3015 = vmatpush1.bf16.msra.mxu0 0
        %3016 = vmatprep.mubr.bf16.mxu0 0
        %3017 = vmatmul.mubr.bf16.gmra.mrb[0].mxu0 %v2912
        %v3018 = vpop.f32.mrb[0].mxu0
        %v3019 = vadd.f32 %v2934, %v3018
        %v3020 = vpop.f32.mrb[0].mxu0
        %v3021 = vpop.f32.mrb[0].mxu0
        %v3022 = vadd.f32 %v2934, %v3021
        %v3023 = vpop.f32.mrb[0].mxu0
        %3024 = vdwg.mxu0
        %v3025 = vadd.f32 %v1256, %v3019
        %v3026 = vadd.f32 %v1257, %v3022
        %v3027 = vld [vmem:[%s45] sm:$0x1]
        %v3028 = vld [vmem:[%s47] sm:$0x1]
        %3029 = vadd.xlane.f32.xlu0 %v3025
        %v3030 = vpop.xlane.xlu0 %3029
        %3031 = vadd.xlane.f32.xlu0 %v3026
        %v3032 = vpop.xlane.xlu0 %3031
        %v3033 = vmul.f32 %v3030, %v2094
        %v3034 = vmul.f32 %v3032, %v2094
        %v3035 = vsub.f32 %v3025, %v3033
        %v3036 = vsub.f32 %v3026, %v3034
        %v3037 = vmul.f32 %v3035, %v3035
        %v3038 = vmul.f32 %v3036, %v3036
        %3039 = vadd.xlane.f32.xlu0 %v3037
        %v3040 = vpop.xlane.xlu0 %3039
        %3041 = vadd.xlane.f32.xlu0 %v3038
        %v3042 = vpop.xlane.xlu0 %3041
        %v3043 = vmul.f32 %v3040, %v2094
        %v3044 = vmul.f32 %v3042, %v2094
        %v3045 = vadd.f32 %v3043, 1e-05
        %v3046 = vadd.f32 %v3044, 1e-05
        %v3047 = vrsqrt.pop %v3045
        %v3048 = vrsqrt.pop %v3046
        %v3049 = vmul.f32 %v3035, %v3047
        %v3050 = vmul.f32 %v3036, %v3048
        %v3052 = vlaneseq
        %v3053 = vshrl.u32 %v3052, 7
        %v3054 = vsub.s32 0, %v3053
        %v3055 = vrot.slane %v3027, %v3054
        %v3057 = vmul.f32 %v3049, %v3055
        %v3058 = vmul.f32 %v3050, %v3055
        %v3060 = vlaneseq
        %v3061 = vshrl.u32 %v3060, 7
        %v3062 = vsub.s32 0, %v3061
        %v3063 = vrot.slane %v3028, %v3062
        %v3065 = vadd.f32 %v3057, %v3063
        %v3066 = vadd.f32 %v3058, %v3063
        %v3067 = vpack.c.bf16 %v3066, %v3065
        %v3068 = vld [vmem:[#allocation29] sm:$0xff]
        %v3069 = vld [vmem:[#allocation29 + $0x8] sm:$0xff]
        %v3070 = vld [vmem:[#allocation29 + $0x10] sm:$0xff]
        %v3071 = vld [vmem:[#allocation29 + $0x18] sm:$0xff]
        %v3072 = vld [vmem:[#allocation29 + $0x20] sm:$0xff]
        %v3073 = vld [vmem:[#allocation29 + $0x28] sm:$0xff]
        %v3074 = vld [vmem:[#allocation29 + $0x30] sm:$0xff]
        %v3075 = vld [vmem:[#allocation29 + $0x38] sm:$0xff]
        %v3076 = vld [vmem:[#allocation29 + $0x40] sm:$0xff]
        %v3077 = vld [vmem:[#allocation29 + $0x48] sm:$0xff]
        %v3078 = vld [vmem:[#allocation29 + $0x50] sm:$0xff]
        %v3079 = vld [vmem:[#allocation29 + $0x58] sm:$0xff]
        %v3080 = vld [vmem:[#allocation29 + $0x60] sm:$0xff]
        %v3081 = vld [vmem:[#allocation29 + $0x68] sm:$0xff]
        %v3082 = vld [vmem:[#allocation29 + $0x70] sm:$0xff]
        %v3083 = vld [vmem:[#allocation29 + $0x78] sm:$0xff]
        %v3084 = vld [vmem:[#allocation29 + $0x80] sm:$0xff]
        %v3085 = vld [vmem:[#allocation29 + $0x88] sm:$0xff]
        %v3086 = vld [vmem:[#allocation29 + $0x90] sm:$0xff]
        %v3087 = vld [vmem:[#allocation29 + $0x98] sm:$0xff]
        %v3088 = vld [vmem:[#allocation29 + $0xa0] sm:$0xff]
        %v3089 = vld [vmem:[#allocation29 + $0xa8] sm:$0xff]
        %v3090 = vld [vmem:[#allocation29 + $0xb0] sm:$0xff]
        %v3091 = vld [vmem:[#allocation29 + $0xb8] sm:$0xff]
        %v3092 = vld [vmem:[#allocation29 + $0xc0] sm:$0xff]
        %v3093 = vld [vmem:[#allocation29 + $0xc8] sm:$0xff]
        %v3094 = vld [vmem:[#allocation29 + $0xd0] sm:$0xff]
        %v3095 = vld [vmem:[#allocation29 + $0xd8] sm:$0xff]
        %v3096 = vld [vmem:[#allocation29 + $0xe0] sm:$0xff]
        %v3097 = vld [vmem:[#allocation29 + $0xe8] sm:$0xff]
        %v3098 = vld [vmem:[#allocation29 + $0xf0] sm:$0xff]
        %v3099 = vld [vmem:[#allocation29 + $0xf8] sm:$0xff]
        %v3100 = vld [vmem:[%s51] sm:$0xf]
        %v3102 = vlaneseq
        %v3103 = vshrl.u32 %v3102, 7
        %v3104 = vsub.s32 0, %v3103
        %v3105 = vrot.slane %v3100, %v3104
        %v3106 = vlaneseq
        %v3107 = vshrl.u32 %v3106, 7
        %v3108 = vsub.s32 1, %v3107
        %v3109 = vrot.slane %v3100, %v3108
        %v3110 = vlaneseq
        %v3111 = vshrl.u32 %v3110, 7
        %v3112 = vsub.s32 2, %v3111
        %v3113 = vrot.slane %v3100, %v3112
        %v3114 = vlaneseq
        %v3115 = vshrl.u32 %v3114, 7
        %v3116 = vsub.s32 3, %v3115
        %v3117 = vrot.slane %v3100, %v3116
        %v3154 = vunpack.c.l.b16 %v3068
        %v3155 = vunpack.c.h.b16 %v3068
        %v3156 = vunpack.c.l.b16 %v3069
        %v3157 = vunpack.c.h.b16 %v3069
        %v3158 = vunpack.c.l.b16 %v3070
        %v3159 = vunpack.c.h.b16 %v3070
        %v3160 = vunpack.c.l.b16 %v3071
        %v3161 = vunpack.c.h.b16 %v3071
        %v3162 = vunpack.c.l.b16 %v3072
        %v3163 = vunpack.c.h.b16 %v3072
        %v3164 = vunpack.c.l.b16 %v3073
        %v3165 = vunpack.c.h.b16 %v3073
        %v3166 = vunpack.c.l.b16 %v3074
        %v3167 = vunpack.c.h.b16 %v3074
        %v3168 = vunpack.c.l.b16 %v3075
        %v3169 = vunpack.c.h.b16 %v3075
        %v3170 = vunpack.c.l.b16 %v3076
        %v3171 = vunpack.c.h.b16 %v3076
        %v3172 = vunpack.c.l.b16 %v3077
        %v3173 = vunpack.c.h.b16 %v3077
        %v3174 = vunpack.c.l.b16 %v3078
        %v3175 = vunpack.c.h.b16 %v3078
        %v3176 = vunpack.c.l.b16 %v3079
        %v3177 = vunpack.c.h.b16 %v3079
        %v3178 = vunpack.c.l.b16 %v3080
        %v3179 = vunpack.c.h.b16 %v3080
        %v3180 = vunpack.c.l.b16 %v3081
        %v3181 = vunpack.c.h.b16 %v3081
        %v3182 = vunpack.c.l.b16 %v3082
        %v3183 = vunpack.c.h.b16 %v3082
        %v3184 = vunpack.c.l.b16 %v3083
        %v3185 = vunpack.c.h.b16 %v3083
        %v3186 = vunpack.c.l.b16 %v3084
        %v3187 = vunpack.c.h.b16 %v3084
        %v3188 = vunpack.c.l.b16 %v3085
        %v3189 = vunpack.c.h.b16 %v3085
        %v3190 = vunpack.c.l.b16 %v3086
        %v3191 = vunpack.c.h.b16 %v3086
        %v3192 = vunpack.c.l.b16 %v3087
        %v3193 = vunpack.c.h.b16 %v3087
        %v3194 = vunpack.c.l.b16 %v3088
        %v3195 = vunpack.c.h.b16 %v3088
        %v3196 = vunpack.c.l.b16 %v3089
        %v3197 = vunpack.c.h.b16 %v3089
        %v3198 = vunpack.c.l.b16 %v3090
        %v3199 = vunpack.c.h.b16 %v3090
        %v3200 = vunpack.c.l.b16 %v3091
        %v3201 = vunpack.c.h.b16 %v3091
        %v3202 = vunpack.c.l.b16 %v3092
        %v3203 = vunpack.c.h.b16 %v3092
        %v3204 = vunpack.c.l.b16 %v3093
        %v3205 = vunpack.c.h.b16 %v3093
        %v3206 = vunpack.c.l.b16 %v3094
        %v3207 = vunpack.c.h.b16 %v3094
        %v3208 = vunpack.c.l.b16 %v3095
        %v3209 = vunpack.c.h.b16 %v3095
        %v3210 = vunpack.c.l.b16 %v3096
        %v3211 = vunpack.c.h.b16 %v3096
        %v3212 = vunpack.c.l.b16 %v3097
        %v3213 = vunpack.c.h.b16 %v3097
        %v3214 = vunpack.c.l.b16 %v3098
        %v3215 = vunpack.c.h.b16 %v3098
        %v3216 = vunpack.c.l.b16 %v3099
        %v3217 = vunpack.c.h.b16 %v3099
        %v3218 = vpack.c.b16 %v3158, %v3154
        %v3219 = vpack.c.b16 %v3159, %v3155
        %v3220 = vpack.c.b16 %v3160, %v3156
        %v3221 = vpack.c.b16 %v3161, %v3157
        %v3222 = vpack.c.b16 %v3166, %v3162
        %v3223 = vpack.c.b16 %v3167, %v3163
        %v3224 = vpack.c.b16 %v3168, %v3164
        %v3225 = vpack.c.b16 %v3169, %v3165
        %v3226 = vpack.c.b16 %v3174, %v3170
        %v3227 = vpack.c.b16 %v3175, %v3171
        %v3228 = vpack.c.b16 %v3176, %v3172
        %v3229 = vpack.c.b16 %v3177, %v3173
        %v3230 = vpack.c.b16 %v3182, %v3178
        %v3231 = vpack.c.b16 %v3183, %v3179
        %v3232 = vpack.c.b16 %v3184, %v3180
        %v3233 = vpack.c.b16 %v3185, %v3181
        %v3234 = vpack.c.b16 %v3190, %v3186
        %v3235 = vpack.c.b16 %v3191, %v3187
        %v3236 = vpack.c.b16 %v3192, %v3188
        %v3237 = vpack.c.b16 %v3193, %v3189
        %v3238 = vpack.c.b16 %v3198, %v3194
        %v3239 = vpack.c.b16 %v3199, %v3195
        %v3240 = vpack.c.b16 %v3200, %v3196
        %v3241 = vpack.c.b16 %v3201, %v3197
        %v3242 = vpack.c.b16 %v3206, %v3202
        %v3243 = vpack.c.b16 %v3207, %v3203
        %v3244 = vpack.c.b16 %v3208, %v3204
        %v3245 = vpack.c.b16 %v3209, %v3205
        %v3246 = vpack.c.b16 %v3214, %v3210
        %v3247 = vpack.c.b16 %v3215, %v3211
        %v3248 = vpack.c.b16 %v3216, %v3212
        %v3249 = vpack.c.b16 %v3217, %v3213
        %3282 = vmatprep.subr.bf16.mxu0 %v3219
        %3283 = vmatpush1.bf16.msra.mxu0 %v3218
        %3284 = vmatprep.subr.bf16.mxu0 %v3223
        %3285 = vmatpush1.bf16.msra.mxu0 %v3222
        %3286 = vmatprep.subr.bf16.mxu0 %v3227
        %3287 = vmatpush1.bf16.msra.mxu0 %v3226
        %3288 = vmatprep.subr.bf16.mxu0 %v3231
        %3289 = vmatpush1.bf16.msra.mxu0 %v3230
        %3290 = vmatprep.subr.bf16.mxu0 %v3235
        %3291 = vmatpush1.bf16.msra.mxu0 %v3234
        %3292 = vmatprep.subr.bf16.mxu0 %v3239
        %3293 = vmatpush1.bf16.msra.mxu0 %v3238
        %3294 = vmatprep.subr.bf16.mxu0 %v3243
        %3295 = vmatpush1.bf16.msra.mxu0 %v3242
        %3296 = vmatprep.subr.bf16.mxu0 %v3247
        %3297 = vmatpush1.bf16.msra.mxu0 %v3246
        %3298 = vmatprep.subr.bf16.mxu0 0
        %3299 = vmatpush1.bf16.msra.mxu0 0
        %3300 = vmatprep.subr.bf16.mxu0 0
        %3301 = vmatpush1.bf16.msra.mxu0 0
        %3302 = vmatprep.subr.bf16.mxu0 0
        %3303 = vmatpush1.bf16.msra.mxu0 0
        %3304 = vmatprep.subr.bf16.mxu0 0
        %3305 = vmatpush1.bf16.msra.mxu0 0
        %3306 = vmatprep.subr.bf16.mxu0 0
        %3307 = vmatpush1.bf16.msra.mxu0 0
        %3308 = vmatprep.subr.bf16.mxu0 0
        %3309 = vmatpush1.bf16.msra.mxu0 0
        %3310 = vmatprep.subr.bf16.mxu0 0
        %3311 = vmatpush1.bf16.msra.mxu0 0
        %3312 = vmatprep.subr.bf16.mxu0 0
        %3313 = vmatpush1.bf16.msra.mxu0 0
        %3314 = vmatprep.mubr.bf16.mxu0 0
        %3315 = vmatmul.mubr.bf16.gmra.mrb[0].mxu0 %v3067
        %v3316 = vpop.f32.mrb[0].mxu0
        %v3317 = vadd.f32 %v3105, %v3316
        %v3318 = vpop.f32.mrb[0].mxu0
        %v3319 = vadd.f32 %v3109, %v3318
        %v3320 = vpop.f32.mrb[0].mxu0
        %v3321 = vadd.f32 %v3105, %v3320
        %v3322 = vpop.f32.mrb[0].mxu0
        %v3323 = vadd.f32 %v3109, %v3322
        %3324 = vdwg.mxu0
        %3325 = vmatprep.subr.bf16.mxu0 %v3221
        %3326 = vmatpush1.bf16.msra.mxu0 %v3220
        %3327 = vmatprep.subr.bf16.mxu0 %v3225
        %3328 = vmatpush1.bf16.msra.mxu0 %v3224
        %3329 = vmatprep.subr.bf16.mxu0 %v3229
        %3330 = vmatpush1.bf16.msra.mxu0 %v3228
        %3331 = vmatprep.subr.bf16.mxu0 %v3233
        %3332 = vmatpush1.bf16.msra.mxu0 %v3232
        %3333 = vmatprep.subr.bf16.mxu0 %v3237
        %3334 = vmatpush1.bf16.msra.mxu0 %v3236
        %3335 = vmatprep.subr.bf16.mxu0 %v3241
        %3336 = vmatpush1.bf16.msra.mxu0 %v3240
        %3337 = vmatprep.subr.bf16.mxu0 %v3245
        %3338 = vmatpush1.bf16.msra.mxu0 %v3244
        %3339 = vmatprep.subr.bf16.mxu0 %v3249
        %3340 = vmatpush1.bf16.msra.mxu0 %v3248
        %3341 = vmatprep.subr.bf16.mxu0 0
        %3342 = vmatpush1.bf16.msra.mxu0 0
        %3343 = vmatprep.subr.bf16.mxu0 0
        %3344 = vmatpush1.bf16.msra.mxu0 0
        %3345 = vmatprep.subr.bf16.mxu0 0
        %3346 = vmatpush1.bf16.msra.mxu0 0
        %3347 = vmatprep.subr.bf16.mxu0 0
        %3348 = vmatpush1.bf16.msra.mxu0 0
        %3349 = vmatprep.subr.bf16.mxu0 0
        %3350 = vmatpush1.bf16.msra.mxu0 0
        %3351 = vmatprep.subr.bf16.mxu0 0
        %3352 = vmatpush1.bf16.msra.mxu0 0
        %3353 = vmatprep.subr.bf16.mxu0 0
        %3354 = vmatpush1.bf16.msra.mxu0 0
        %3355 = vmatprep.subr.bf16.mxu0 0
        %3356 = vmatpush1.bf16.msra.mxu0 0
        %3357 = vmatprep.mubr.bf16.mxu0 0
        %3358 = vmatmul.mubr.bf16.gmra.mrb[0].mxu0 %v3067
        %v3359 = vpop.f32.mrb[0].mxu0
        %v3360 = vadd.f32 %v3113, %v3359
        %v3361 = vpop.f32.mrb[0].mxu0
        %v3362 = vadd.f32 %v3117, %v3361
        %v3363 = vpop.f32.mrb[0].mxu0
        %v3364 = vadd.f32 %v3113, %v3363
        %v3365 = vpop.f32.mrb[0].mxu0
        %v3366 = vadd.f32 %v3117, %v3365
        %3367 = vdwg.mxu0
        %v3368 = vmax.f32 %v3317, 0.0
        %v3369 = vmax.f32 %v3319, 0.0
        %v3370 = vmax.f32 %v3360, 0.0
        %v3371 = vmax.f32 %v3362, 0.0
        %v3372 = vmax.f32 %v3321, 0.0
        %v3373 = vmax.f32 %v3323, 0.0
        %v3374 = vmax.f32 %v3364, 0.0
        %v3375 = vmax.f32 %v3366, 0.0
        %v3376 = vpack.c.bf16 %v3372, %v3368
        %v3377 = vpack.c.bf16 %v3373, %v3369
        %v3378 = vpack.c.bf16 %v3374, %v3370
        %v3379 = vpack.c.bf16 %v3375, %v3371
        %v3380 = vld [vmem:[#allocation31] sm:$0xf]
        %v3381 = vld [vmem:[#allocation31 + $0x4] sm:$0xf]
        %v3382 = vld [vmem:[#allocation31 + $0x8] sm:$0xf]
        %v3383 = vld [vmem:[#allocation31 + $0xc] sm:$0xf]
        %v3384 = vld [vmem:[#allocation31 + $0x10] sm:$0xf]
        %v3385 = vld [vmem:[#allocation31 + $0x14] sm:$0xf]
        %v3386 = vld [vmem:[#allocation31 + $0x18] sm:$0xf]
        %v3387 = vld [vmem:[#allocation31 + $0x1c] sm:$0xf]
        %v3388 = vld [vmem:[#allocation31 + $0x20] sm:$0xf]
        %v3389 = vld [vmem:[#allocation31 + $0x24] sm:$0xf]
        %v3390 = vld [vmem:[#allocation31 + $0x28] sm:$0xf]
        %v3391 = vld [vmem:[#allocation31 + $0x2c] sm:$0xf]
        %v3392 = vld [vmem:[#allocation31 + $0x30] sm:$0xf]
        %v3393 = vld [vmem:[#allocation31 + $0x34] sm:$0xf]
        %v3394 = vld [vmem:[#allocation31 + $0x38] sm:$0xf]
        %v3395 = vld [vmem:[#allocation31 + $0x3c] sm:$0xf]
        %v3396 = vld [vmem:[#allocation31 + $0x40] sm:$0xf]
        %v3397 = vld [vmem:[#allocation31 + $0x44] sm:$0xf]
        %v3398 = vld [vmem:[#allocation31 + $0x48] sm:$0xf]
        %v3399 = vld [vmem:[#allocation31 + $0x4c] sm:$0xf]
        %v3400 = vld [vmem:[#allocation31 + $0x50] sm:$0xf]
        %v3401 = vld [vmem:[#allocation31 + $0x54] sm:$0xf]
        %v3402 = vld [vmem:[#allocation31 + $0x58] sm:$0xf]
        %v3403 = vld [vmem:[#allocation31 + $0x5c] sm:$0xf]
        %v3404 = vld [vmem:[#allocation31 + $0x60] sm:$0xf]
        %v3405 = vld [vmem:[#allocation31 + $0x64] sm:$0xf]
        %v3406 = vld [vmem:[#allocation31 + $0x68] sm:$0xf]
        %v3407 = vld [vmem:[#allocation31 + $0x6c] sm:$0xf]
        %v3408 = vld [vmem:[#allocation31 + $0x70] sm:$0xf]
        %v3409 = vld [vmem:[#allocation31 + $0x74] sm:$0xf]
        %v3410 = vld [vmem:[#allocation31 + $0x78] sm:$0xf]
        %v3411 = vld [vmem:[#allocation31 + $0x7c] sm:$0xf]
        %v3412 = vld [vmem:[#allocation31 + $0x80] sm:$0xf]
        %v3413 = vld [vmem:[#allocation31 + $0x84] sm:$0xf]
        %v3414 = vld [vmem:[#allocation31 + $0x88] sm:$0xf]
        %v3415 = vld [vmem:[#allocation31 + $0x8c] sm:$0xf]
        %v3416 = vld [vmem:[#allocation31 + $0x90] sm:$0xf]
        %v3417 = vld [vmem:[#allocation31 + $0x94] sm:$0xf]
        %v3418 = vld [vmem:[#allocation31 + $0x98] sm:$0xf]
        %v3419 = vld [vmem:[#allocation31 + $0x9c] sm:$0xf]
        %v3420 = vld [vmem:[#allocation31 + $0xa0] sm:$0xf]
        %v3421 = vld [vmem:[#allocation31 + $0xa4] sm:$0xf]
        %v3422 = vld [vmem:[#allocation31 + $0xa8] sm:$0xf]
        %v3423 = vld [vmem:[#allocation31 + $0xac] sm:$0xf]
        %v3424 = vld [vmem:[#allocation31 + $0xb0] sm:$0xf]
        %v3425 = vld [vmem:[#allocation31 + $0xb4] sm:$0xf]
        %v3426 = vld [vmem:[#allocation31 + $0xb8] sm:$0xf]
        %v3427 = vld [vmem:[#allocation31 + $0xbc] sm:$0xf]
        %v3428 = vld [vmem:[#allocation31 + $0xc0] sm:$0xf]
        %v3429 = vld [vmem:[#allocation31 + $0xc4] sm:$0xf]
        %v3430 = vld [vmem:[#allocation31 + $0xc8] sm:$0xf]
        %v3431 = vld [vmem:[#allocation31 + $0xcc] sm:$0xf]
        %v3432 = vld [vmem:[#allocation31 + $0xd0] sm:$0xf]
        %v3433 = vld [vmem:[#allocation31 + $0xd4] sm:$0xf]
        %v3434 = vld [vmem:[#allocation31 + $0xd8] sm:$0xf]
        %v3435 = vld [vmem:[#allocation31 + $0xdc] sm:$0xf]
        %v3436 = vld [vmem:[#allocation31 + $0xe0] sm:$0xf]
        %v3437 = vld [vmem:[#allocation31 + $0xe4] sm:$0xf]
        %v3438 = vld [vmem:[#allocation31 + $0xe8] sm:$0xf]
        %v3439 = vld [vmem:[#allocation31 + $0xec] sm:$0xf]
        %v3440 = vld [vmem:[#allocation31 + $0xf0] sm:$0xf]
        %v3441 = vld [vmem:[#allocation31 + $0xf4] sm:$0xf]
        %v3442 = vld [vmem:[#allocation31 + $0xf8] sm:$0xf]
        %v3443 = vld [vmem:[#allocation31 + $0xfc] sm:$0xf]
        %v3444 = vld [vmem:[%s55] sm:$0x1]
        %v3446 = vlaneseq
        %v3447 = vshrl.u32 %v3446, 7
        %v3448 = vsub.s32 0, %v3447
        %v3449 = vrot.slane %v3444, %v3448
        %v3515 = vunpack.c.l.b16 %v3380
        %v3516 = vunpack.c.l.b16 %v3381
        %v3517 = vunpack.c.l.b16 %v3382
        %v3518 = vunpack.c.l.b16 %v3383
        %v3519 = vunpack.c.l.b16 %v3384
        %v3520 = vunpack.c.l.b16 %v3385
        %v3521 = vunpack.c.l.b16 %v3386
        %v3522 = vunpack.c.l.b16 %v3387
        %v3523 = vunpack.c.l.b16 %v3388
        %v3524 = vunpack.c.l.b16 %v3389
        %v3525 = vunpack.c.l.b16 %v3390
        %v3526 = vunpack.c.l.b16 %v3391
        %v3527 = vunpack.c.l.b16 %v3392
        %v3528 = vunpack.c.l.b16 %v3393
        %v3529 = vunpack.c.l.b16 %v3394
        %v3530 = vunpack.c.l.b16 %v3395
        %v3531 = vunpack.c.l.b16 %v3396
        %v3532 = vunpack.c.l.b16 %v3397
        %v3533 = vunpack.c.l.b16 %v3398
        %v3534 = vunpack.c.l.b16 %v3399
        %v3535 = vunpack.c.l.b16 %v3400
        %v3536 = vunpack.c.l.b16 %v3401
        %v3537 = vunpack.c.l.b16 %v3402
        %v3538 = vunpack.c.l.b16 %v3403
        %v3539 = vunpack.c.l.b16 %v3404
        %v3540 = vunpack.c.l.b16 %v3405
        %v3541 = vunpack.c.l.b16 %v3406
        %v3542 = vunpack.c.l.b16 %v3407
        %v3543 = vunpack.c.l.b16 %v3408
        %v3544 = vunpack.c.l.b16 %v3409
        %v3545 = vunpack.c.l.b16 %v3410
        %v3546 = vunpack.c.l.b16 %v3411
        %v3547 = vunpack.c.l.b16 %v3412
        %v3548 = vunpack.c.l.b16 %v3413
        %v3549 = vunpack.c.l.b16 %v3414
        %v3550 = vunpack.c.l.b16 %v3415
        %v3551 = vunpack.c.l.b16 %v3416
        %v3552 = vunpack.c.l.b16 %v3417
        %v3553 = vunpack.c.l.b16 %v3418
        %v3554 = vunpack.c.l.b16 %v3419
        %v3555 = vunpack.c.l.b16 %v3420
        %v3556 = vunpack.c.l.b16 %v3421
        %v3557 = vunpack.c.l.b16 %v3422
        %v3558 = vunpack.c.l.b16 %v3423
        %v3559 = vunpack.c.l.b16 %v3424
        %v3560 = vunpack.c.l.b16 %v3425
        %v3561 = vunpack.c.l.b16 %v3426
        %v3562 = vunpack.c.l.b16 %v3427
        %v3563 = vunpack.c.l.b16 %v3428
        %v3564 = vunpack.c.l.b16 %v3429
        %v3565 = vunpack.c.l.b16 %v3430
        %v3566 = vunpack.c.l.b16 %v3431
        %v3567 = vunpack.c.l.b16 %v3432
        %v3568 = vunpack.c.l.b16 %v3433
        %v3569 = vunpack.c.l.b16 %v3434
        %v3570 = vunpack.c.l.b16 %v3435
        %v3571 = vunpack.c.l.b16 %v3436
        %v3572 = vunpack.c.l.b16 %v3437
        %v3573 = vunpack.c.l.b16 %v3438
        %v3574 = vunpack.c.l.b16 %v3439
        %v3575 = vunpack.c.l.b16 %v3440
        %v3576 = vunpack.c.l.b16 %v3441
        %v3577 = vunpack.c.l.b16 %v3442
        %v3578 = vunpack.c.l.b16 %v3443
        %v3579 = vpack.c.b16 %v3516, %v3515
        %v3580 = vpack.c.b16 %v3518, %v3517
        %v3581 = vpack.c.b16 %v3520, %v3519
        %v3582 = vpack.c.b16 %v3522, %v3521
        %v3583 = vpack.c.b16 %v3524, %v3523
        %v3584 = vpack.c.b16 %v3526, %v3525
        %v3585 = vpack.c.b16 %v3528, %v3527
        %v3586 = vpack.c.b16 %v3530, %v3529
        %v3587 = vpack.c.b16 %v3532, %v3531
        %v3588 = vpack.c.b16 %v3534, %v3533
        %v3589 = vpack.c.b16 %v3536, %v3535
        %v3590 = vpack.c.b16 %v3538, %v3537
        %v3591 = vpack.c.b16 %v3540, %v3539
        %v3592 = vpack.c.b16 %v3542, %v3541
        %v3593 = vpack.c.b16 %v3544, %v3543
        %v3594 = vpack.c.b16 %v3546, %v3545
        %v3595 = vpack.c.b16 %v3548, %v3547
        %v3596 = vpack.c.b16 %v3550, %v3549
        %v3597 = vpack.c.b16 %v3552, %v3551
        %v3598 = vpack.c.b16 %v3554, %v3553
        %v3599 = vpack.c.b16 %v3556, %v3555
        %v3600 = vpack.c.b16 %v3558, %v3557
        %v3601 = vpack.c.b16 %v3560, %v3559
        %v3602 = vpack.c.b16 %v3562, %v3561
        %v3603 = vpack.c.b16 %v3564, %v3563
        %v3604 = vpack.c.b16 %v3566, %v3565
        %v3605 = vpack.c.b16 %v3568, %v3567
        %v3606 = vpack.c.b16 %v3570, %v3569
        %v3607 = vpack.c.b16 %v3572, %v3571
        %v3608 = vpack.c.b16 %v3574, %v3573
        %v3609 = vpack.c.b16 %v3576, %v3575
        %v3610 = vpack.c.b16 %v3578, %v3577
        %3643 = vmatprep.subr.bf16.mxu0 0
        %3644 = vmatpush1.bf16.msra.mxu0 %v3579
        %3645 = vmatprep.subr.bf16.mxu0 0
        %3646 = vmatpush1.bf16.msra.mxu0 %v3580
        %3647 = vmatprep.subr.bf16.mxu0 0
        %3648 = vmatpush1.bf16.msra.mxu0 %v3581
        %3649 = vmatprep.subr.bf16.mxu0 0
        %3650 = vmatpush1.bf16.msra.mxu0 %v3582
        %3651 = vmatprep.subr.bf16.mxu0 0
        %3652 = vmatpush1.bf16.msra.mxu0 %v3583
        %3653 = vmatprep.subr.bf16.mxu0 0
        %3654 = vmatpush1.bf16.msra.mxu0 %v3584
        %3655 = vmatprep.subr.bf16.mxu0 0
        %3656 = vmatpush1.bf16.msra.mxu0 %v3585
        %3657 = vmatprep.subr.bf16.mxu0 0
        %3658 = vmatpush1.bf16.msra.mxu0 %v3586
        %3659 = vmatprep.subr.bf16.mxu0 0
        %3660 = vmatpush1.bf16.msra.mxu0 %v3587
        %3661 = vmatprep.subr.bf16.mxu0 0
        %3662 = vmatpush1.bf16.msra.mxu0 %v3588
        %3663 = vmatprep.subr.bf16.mxu0 0
        %3664 = vmatpush1.bf16.msra.mxu0 %v3589
        %3665 = vmatprep.subr.bf16.mxu0 0
        %3666 = vmatpush1.bf16.msra.mxu0 %v3590
        %3667 = vmatprep.subr.bf16.mxu0 0
        %3668 = vmatpush1.bf16.msra.mxu0 %v3591
        %3669 = vmatprep.subr.bf16.mxu0 0
        %3670 = vmatpush1.bf16.msra.mxu0 %v3592
        %3671 = vmatprep.subr.bf16.mxu0 0
        %3672 = vmatpush1.bf16.msra.mxu0 %v3593
        %3673 = vmatprep.subr.bf16.mxu0 0
        %3674 = vmatpush1.bf16.msra.mxu0 %v3594
        %3675 = vmatprep.mubr.bf16.mxu0 %v3377
        %3676 = vmatmul.mubr.bf16.gmra.mrb[0].mxu0 %v3376
        %v3677 = vpop.f32.mrb[0].mxu0
        %v3678 = vadd.f32 %v3449, %v3677
        %v3679 = vpop.f32.mrb[0].mxu0
        %v3680 = vpop.f32.mrb[0].mxu0
        %v3681 = vadd.f32 %v3449, %v3680
        %v3682 = vpop.f32.mrb[0].mxu0
        %3683 = vdwg.mxu0
        %3684 = vmatprep.subr.bf16.mxu0 0
        %3685 = vmatpush1.bf16.msra.mxu0 %v3595
        %3686 = vmatprep.subr.bf16.mxu0 0
        %3687 = vmatpush1.bf16.msra.mxu0 %v3596
        %3688 = vmatprep.subr.bf16.mxu0 0
        %3689 = vmatpush1.bf16.msra.mxu0 %v3597
        %3690 = vmatprep.subr.bf16.mxu0 0
        %3691 = vmatpush1.bf16.msra.mxu0 %v3598
        %3692 = vmatprep.subr.bf16.mxu0 0
        %3693 = vmatpush1.bf16.msra.mxu0 %v3599
        %3694 = vmatprep.subr.bf16.mxu0 0
        %3695 = vmatpush1.bf16.msra.mxu0 %v3600
        %3696 = vmatprep.subr.bf16.mxu0 0
        %3697 = vmatpush1.bf16.msra.mxu0 %v3601
        %3698 = vmatprep.subr.bf16.mxu0 0
        %3699 = vmatpush1.bf16.msra.mxu0 %v3602
        %3700 = vmatprep.subr.bf16.mxu0 0
        %3701 = vmatpush1.bf16.msra.mxu0 %v3603
        %3702 = vmatprep.subr.bf16.mxu0 0
        %3703 = vmatpush1.bf16.msra.mxu0 %v3604
        %3704 = vmatprep.subr.bf16.mxu0 0
        %3705 = vmatpush1.bf16.msra.mxu0 %v3605
        %3706 = vmatprep.subr.bf16.mxu0 0
        %3707 = vmatpush1.bf16.msra.mxu0 %v3606
        %3708 = vmatprep.subr.bf16.mxu0 0
        %3709 = vmatpush1.bf16.msra.mxu0 %v3607
        %3710 = vmatprep.subr.bf16.mxu0 0
        %3711 = vmatpush1.bf16.msra.mxu0 %v3608
        %3712 = vmatprep.subr.bf16.mxu0 0
        %3713 = vmatpush1.bf16.msra.mxu0 %v3609
        %3714 = vmatprep.subr.bf16.mxu0 0
        %3715 = vmatpush1.bf16.msra.mxu0 %v3610
        %3716 = vmatprep.mubr.bf16.mxu0 %v3379
        %3717 = vmatmul.mubr.bf16.gmra.mrb[0].mxu0 %v3378
        %v3718 = vpop.f32.mrb[0].mxu0
        %v3719 = vadd.f32 %v3678, %v3718
        %v3720 = vpop.f32.mrb[0].mxu0
        %v3721 = vpop.f32.mrb[0].mxu0
        %v3722 = vadd.f32 %v3681, %v3721
        %v3723 = vpop.f32.mrb[0].mxu0
        %3724 = vdwg.mxu0
        %v3725 = vadd.f32 %v3065, %v3719
        %v3726 = vadd.f32 %v3066, %v3722
        %v3727 = vld [vmem:[%s57] sm:$0x1]
        %v3728 = vld [vmem:[%s59] sm:$0x1]
        %3729 = vadd.xlane.f32.xlu0 %v3725
        %v3730 = vpop.xlane.xlu0 %3729
        %3731 = vadd.xlane.f32.xlu0 %v3726
        %v3732 = vpop.xlane.xlu0 %3731
        %v3733 = vmul.f32 %v3730, %v2094
        %v3734 = vmul.f32 %v3732, %v2094
        %v3735 = vsub.f32 %v3725, %v3733
        %v3736 = vsub.f32 %v3726, %v3734
        %v3737 = vmul.f32 %v3735, %v3735
        %v3738 = vmul.f32 %v3736, %v3736
        %3739 = vadd.xlane.f32.xlu0 %v3737
        %v3740 = vpop.xlane.xlu0 %3739
        %3741 = vadd.xlane.f32.xlu0 %v3738
        %v3742 = vpop.xlane.xlu0 %3741
        %v3743 = vmul.f32 %v3740, %v2094
        %v3744 = vmul.f32 %v3742, %v2094
        %v3745 = vadd.f32 %v3743, 1e-05
        %v3746 = vadd.f32 %v3744, 1e-05
        %v3747 = vrsqrt.pop %v3745
        %v3748 = vrsqrt.pop %v3746
        %v3749 = vmul.f32 %v3735, %v3747
        %v3750 = vmul.f32 %v3736, %v3748
        %v3752 = vlaneseq
        %v3753 = vshrl.u32 %v3752, 7
        %v3754 = vsub.s32 0, %v3753
        %v3755 = vrot.slane %v3727, %v3754
        %v3757 = vmul.f32 %v3749, %v3755
        %v3758 = vmul.f32 %v3750, %v3755
        %v3760 = vlaneseq
        %v3761 = vshrl.u32 %v3760, 7
        %v3762 = vsub.s32 0, %v3761
        %v3763 = vrot.slane %v3728, %v3762
        %v3765 = vadd.f32 %v3757, %v3763
        %v3766 = vadd.f32 %v3758, %v3763
        %3767 = vst [vmem:[%s1247] sm:$0xff] %v3765
        %3768 = vst [vmem:[%s1247 + $0x8] sm:$0xff] %v3766
        %v3769 = vld [vmem:[#allocation16] sm:$0xff]
        %v3770 = vld [vmem:[#allocation16 + $0x8] sm:$0xff]
        %v3771 = vld [vmem:[#allocation16 + $0x10] sm:$0xff]
        %v3772 = vld [vmem:[#allocation16 + $0x18] sm:$0xff]
        %v3773 = vld [vmem:[#allocation16 + $0x20] sm:$0xff]
        %v3774 = vld [vmem:[#allocation16 + $0x28] sm:$0xff]
        %v3775 = vld [vmem:[#allocation16 + $0x30] sm:$0xff]
        %v3776 = vld [vmem:[#allocation16 + $0x38] sm:$0xff]
        %v3777 = vld [vmem:[#allocation16 + $0x40] sm:$0xff]
        %v3778 = vld [vmem:[#allocation16 + $0x48] sm:$0xff]
        %v3779 = vld [vmem:[#allocation16 + $0x50] sm:$0xff]
        %v3780 = vld [vmem:[#allocation16 + $0x58] sm:$0xff]
        %v3781 = vld [vmem:[#allocation16 + $0x60] sm:$0xff]
        %v3782 = vld [vmem:[#allocation16 + $0x68] sm:$0xff]
        %v3783 = vld [vmem:[#allocation16 + $0x70] sm:$0xff]
        %v3784 = vld [vmem:[#allocation16 + $0x78] sm:$0xff]
        %v3785 = vld [vmem:[#allocation16 + $0x80] sm:$0xff]
        %v3786 = vld [vmem:[#allocation16 + $0x88] sm:$0xff]
        %v3787 = vld [vmem:[#allocation16 + $0x90] sm:$0xff]
        %v3788 = vld [vmem:[#allocation16 + $0x98] sm:$0xff]
        %v3789 = vld [vmem:[#allocation16 + $0xa0] sm:$0xff]
        %v3790 = vld [vmem:[#allocation16 + $0xa8] sm:$0xff]
        %v3791 = vld [vmem:[#allocation16 + $0xb0] sm:$0xff]
        %v3792 = vld [vmem:[#allocation16 + $0xb8] sm:$0xff]
        %v3793 = vld [vmem:[#allocation16 + $0xc0] sm:$0xff]
        %v3794 = vld [vmem:[#allocation16 + $0xc8] sm:$0xff]
        %v3795 = vld [vmem:[#allocation16 + $0xd0] sm:$0xff]
        %v3796 = vld [vmem:[#allocation16 + $0xd8] sm:$0xff]
        %v3797 = vld [vmem:[#allocation16 + $0xe0] sm:$0xff]
        %v3798 = vld [vmem:[#allocation16 + $0xe8] sm:$0xff]
        %v3799 = vld [vmem:[#allocation16 + $0xf0] sm:$0xff]
        %v3800 = vld [vmem:[#allocation16 + $0xf8] sm:$0xff]
        %v3801 = vld [vmem:[%s23] sm:$0xf]
        %v3803 = vlaneseq
        %v3804 = vshrl.u32 %v3803, 7
        %v3805 = vsub.s32 0, %v3804
        %v3806 = vrot.slane %v3801, %v3805
        %v3807 = vlaneseq
        %v3808 = vshrl.u32 %v3807, 7
        %v3809 = vsub.s32 1, %v3808
        %v3810 = vrot.slane %v3801, %v3809
        %v3811 = vlaneseq
        %v3812 = vshrl.u32 %v3811, 7
        %v3813 = vsub.s32 2, %v3812
        %v3814 = vrot.slane %v3801, %v3813
        %v3815 = vlaneseq
        %v3816 = vshrl.u32 %v3815, 7
        %v3817 = vsub.s32 3, %v3816
        %v3818 = vrot.slane %v3801, %v3817
        %v3855 = vunpack.c.l.b16 %v3769
        %v3856 = vunpack.c.h.b16 %v3769
        %v3857 = vunpack.c.l.b16 %v3770
        %v3858 = vunpack.c.h.b16 %v3770
        %v3859 = vunpack.c.l.b16 %v3771
        %v3860 = vunpack.c.h.b16 %v3771
        %v3861 = vunpack.c.l.b16 %v3772
        %v3862 = vunpack.c.h.b16 %v3772
        %v3863 = vunpack.c.l.b16 %v3773
        %v3864 = vunpack.c.h.b16 %v3773
        %v3865 = vunpack.c.l.b16 %v3774
        %v3866 = vunpack.c.h.b16 %v3774
        %v3867 = vunpack.c.l.b16 %v3775
        %v3868 = vunpack.c.h.b16 %v3775
        %v3869 = vunpack.c.l.b16 %v3776
        %v3870 = vunpack.c.h.b16 %v3776
        %v3871 = vunpack.c.l.b16 %v3777
        %v3872 = vunpack.c.h.b16 %v3777
        %v3873 = vunpack.c.l.b16 %v3778
        %v3874 = vunpack.c.h.b16 %v3778
        %v3875 = vunpack.c.l.b16 %v3779
        %v3876 = vunpack.c.h.b16 %v3779
        %v3877 = vunpack.c.l.b16 %v3780
        %v3878 = vunpack.c.h.b16 %v3780
        %v3879 = vunpack.c.l.b16 %v3781
        %v3880 = vunpack.c.h.b16 %v3781
        %v3881 = vunpack.c.l.b16 %v3782
        %v3882 = vunpack.c.h.b16 %v3782
        %v3883 = vunpack.c.l.b16 %v3783
        %v3884 = vunpack.c.h.b16 %v3783
        %v3885 = vunpack.c.l.b16 %v3784
        %v3886 = vunpack.c.h.b16 %v3784
        %v3887 = vunpack.c.l.b16 %v3785
        %v3888 = vunpack.c.h.b16 %v3785
        %v3889 = vunpack.c.l.b16 %v3786
        %v3890 = vunpack.c.h.b16 %v3786
        %v3891 = vunpack.c.l.b16 %v3787
        %v3892 = vunpack.c.h.b16 %v3787
        %v3893 = vunpack.c.l.b16 %v3788
        %v3894 = vunpack.c.h.b16 %v3788
        %v3895 = vunpack.c.l.b16 %v3789
        %v3896 = vunpack.c.h.b16 %v3789
        %v3897 = vunpack.c.l.b16 %v3790
        %v3898 = vunpack.c.h.b16 %v3790
        %v3899 = vunpack.c.l.b16 %v3791
        %v3900 = vunpack.c.h.b16 %v3791
        %v3901 = vunpack.c.l.b16 %v3792
        %v3902 = vunpack.c.h.b16 %v3792
        %v3903 = vunpack.c.l.b16 %v3793
        %v3904 = vunpack.c.h.b16 %v3793
        %v3905 = vunpack.c.l.b16 %v3794
        %v3906 = vunpack.c.h.b16 %v3794
        %v3907 = vunpack.c.l.b16 %v3795
        %v3908 = vunpack.c.h.b16 %v3795
        %v3909 = vunpack.c.l.b16 %v3796
        %v3910 = vunpack.c.h.b16 %v3796
        %v3911 = vunpack.c.l.b16 %v3797
        %v3912 = vunpack.c.h.b16 %v3797
        %v3913 = vunpack.c.l.b16 %v3798
        %v3914 = vunpack.c.h.b16 %v3798
        %v3915 = vunpack.c.l.b16 %v3799
        %v3916 = vunpack.c.h.b16 %v3799
        %v3917 = vunpack.c.l.b16 %v3800
        %v3918 = vunpack.c.h.b16 %v3800
        %v3919 = vpack.c.b16 %v3859, %v3855
        %v3920 = vpack.c.b16 %v3860, %v3856
        %v3921 = vpack.c.b16 %v3861, %v3857
        %v3922 = vpack.c.b16 %v3862, %v3858
        %v3923 = vpack.c.b16 %v3867, %v3863
        %v3924 = vpack.c.b16 %v3868, %v3864
        %v3925 = vpack.c.b16 %v3869, %v3865
        %v3926 = vpack.c.b16 %v3870, %v3866
        %v3927 = vpack.c.b16 %v3875, %v3871
        %v3928 = vpack.c.b16 %v3876, %v3872
        %v3929 = vpack.c.b16 %v3877, %v3873
        %v3930 = vpack.c.b16 %v3878, %v3874
        %v3931 = vpack.c.b16 %v3883, %v3879
        %v3932 = vpack.c.b16 %v3884, %v3880
        %v3933 = vpack.c.b16 %v3885, %v3881
        %v3934 = vpack.c.b16 %v3886, %v3882
        %v3935 = vpack.c.b16 %v3891, %v3887
        %v3936 = vpack.c.b16 %v3892, %v3888
        %v3937 = vpack.c.b16 %v3893, %v3889
        %v3938 = vpack.c.b16 %v3894, %v3890
        %v3939 = vpack.c.b16 %v3899, %v3895
        %v3940 = vpack.c.b16 %v3900, %v3896
        %v3941 = vpack.c.b16 %v3901, %v3897
        %v3942 = vpack.c.b16 %v3902, %v3898
        %v3943 = vpack.c.b16 %v3907, %v3903
        %v3944 = vpack.c.b16 %v3908, %v3904
        %v3945 = vpack.c.b16 %v3909, %v3905
        %v3946 = vpack.c.b16 %v3910, %v3906
        %v3947 = vpack.c.b16 %v3915, %v3911
        %v3948 = vpack.c.b16 %v3916, %v3912
        %v3949 = vpack.c.b16 %v3917, %v3913
        %v3950 = vpack.c.b16 %v3918, %v3914
        %3983 = vmatprep.subr.bf16.mxu0 %v3920
        %3984 = vmatpush1.bf16.msra.mxu0 %v3919
        %3985 = vmatprep.subr.bf16.mxu0 %v3924
        %3986 = vmatpush1.bf16.msra.mxu0 %v3923
        %3987 = vmatprep.subr.bf16.mxu0 %v3928
        %3988 = vmatpush1.bf16.msra.mxu0 %v3927
        %3989 = vmatprep.subr.bf16.mxu0 %v3932
        %3990 = vmatpush1.bf16.msra.mxu0 %v3931
        %3991 = vmatprep.subr.bf16.mxu0 %v3936
        %3992 = vmatpush1.bf16.msra.mxu0 %v3935
        %3993 = vmatprep.subr.bf16.mxu0 %v3940
        %3994 = vmatpush1.bf16.msra.mxu0 %v3939
        %3995 = vmatprep.subr.bf16.mxu0 %v3944
        %3996 = vmatpush1.bf16.msra.mxu0 %v3943
        %3997 = vmatprep.subr.bf16.mxu0 %v3948
        %3998 = vmatpush1.bf16.msra.mxu0 %v3947
        %3999 = vmatprep.subr.bf16.mxu0 0
        %4000 = vmatpush1.bf16.msra.mxu0 0
        %4001 = vmatprep.subr.bf16.mxu0 0
        %4002 = vmatpush1.bf16.msra.mxu0 0
        %4003 = vmatprep.subr.bf16.mxu0 0
        %4004 = vmatpush1.bf16.msra.mxu0 0
        %4005 = vmatprep.subr.bf16.mxu0 0
        %4006 = vmatpush1.bf16.msra.mxu0 0
        %4007 = vmatprep.subr.bf16.mxu0 0
        %4008 = vmatpush1.bf16.msra.mxu0 0
        %4009 = vmatprep.subr.bf16.mxu0 0
        %4010 = vmatpush1.bf16.msra.mxu0 0
        %4011 = vmatprep.subr.bf16.mxu0 0
        %4012 = vmatpush1.bf16.msra.mxu0 0
        %4013 = vmatprep.subr.bf16.mxu0 0
        %4014 = vmatpush1.bf16.msra.mxu0 0
        %4015 = vmatprep.mubr.bf16.mxu0 0
        %4016 = vmatmul.mubr.bf16.gmra.mrb[0].mxu0 %v2231
        %v4017 = vpop.f32.mrb[0].mxu0
        %v4018 = vadd.f32 %v3806, %v4017
        %v4019 = vpop.f32.mrb[0].mxu0
        %v4020 = vadd.f32 %v3810, %v4019
        %v4021 = vpop.f32.mrb[0].mxu0
        %v4022 = vpop.f32.mrb[0].mxu0
        %4023 = vdwg.mxu0
        %4024 = vmatprep.subr.bf16.mxu0 %v3922
        %4025 = vmatpush1.bf16.msra.mxu0 %v3921
        %4026 = vmatprep.subr.bf16.mxu0 %v3926
        %4027 = vmatpush1.bf16.msra.mxu0 %v3925
        %4028 = vmatprep.subr.bf16.mxu0 %v3930
        %4029 = vmatpush1.bf16.msra.mxu0 %v3929
        %4030 = vmatprep.subr.bf16.mxu0 %v3934
        %4031 = vmatpush1.bf16.msra.mxu0 %v3933
        %4032 = vmatprep.subr.bf16.mxu0 %v3938
        %4033 = vmatpush1.bf16.msra.mxu0 %v3937
        %4034 = vmatprep.subr.bf16.mxu0 %v3942
        %4035 = vmatpush1.bf16.msra.mxu0 %v3941
        %4036 = vmatprep.subr.bf16.mxu0 %v3946
        %4037 = vmatpush1.bf16.msra.mxu0 %v3945
        %4038 = vmatprep.subr.bf16.mxu0 %v3950
        %4039 = vmatpush1.bf16.msra.mxu0 %v3949
        %4040 = vmatprep.subr.bf16.mxu0 0
        %4041 = vmatpush1.bf16.msra.mxu0 0
        %4042 = vmatprep.subr.bf16.mxu0 0
        %4043 = vmatpush1.bf16.msra.mxu0 0
        %4044 = vmatprep.subr.bf16.mxu0 0
        %4045 = vmatpush1.bf16.msra.mxu0 0
        %4046 = vmatprep.subr.bf16.mxu0 0
        %4047 = vmatpush1.bf16.msra.mxu0 0
        %4048 = vmatprep.subr.bf16.mxu0 0
        %4049 = vmatpush1.bf16.msra.mxu0 0
        %4050 = vmatprep.subr.bf16.mxu0 0
        %4051 = vmatpush1.bf16.msra.mxu0 0
        %4052 = vmatprep.subr.bf16.mxu0 0
        %4053 = vmatpush1.bf16.msra.mxu0 0
        %4054 = vmatprep.subr.bf16.mxu0 0
        %4055 = vmatpush1.bf16.msra.mxu0 0
        %4056 = vmatprep.mubr.bf16.mxu0 0
        %4057 = vmatmul.mubr.bf16.gmra.mrb[0].mxu0 %v2231
        %v4058 = vpop.f32.mrb[0].mxu0
        %v4059 = vadd.f32 %v3814, %v4058
        %v4060 = vpop.f32.mrb[0].mxu0
        %v4061 = vadd.f32 %v3818, %v4060
        %v4062 = vpop.f32.mrb[0].mxu0
        %v4063 = vpop.f32.mrb[0].mxu0
        %4064 = vdwg.mxu0
        %v4065 = vmax.f32 %v4018, 0.0
        %v4066 = vmax.f32 %v4020, 0.0
        %v4067 = vmax.f32 %v4059, 0.0
        %v4068 = vmax.f32 %v4061, 0.0
        %v4069 = vpack.c.bf16 %v4065, %v4065
        %v4070 = vpack.c.bf16 %v4066, %v4066
        %v4071 = vpack.c.bf16 %v4067, %v4067
        %v4072 = vpack.c.bf16 %v4068, %v4068
        %v4073 = vld [vmem:[#allocation17] sm:$0xf]
        %v4074 = vld [vmem:[#allocation17 + $0x4] sm:$0xf]
        %v4075 = vld [vmem:[#allocation17 + $0x8] sm:$0xf]
        %v4076 = vld [vmem:[#allocation17 + $0xc] sm:$0xf]
        %v4077 = vld [vmem:[#allocation17 + $0x10] sm:$0xf]
        %v4078 = vld [vmem:[#allocation17 + $0x14] sm:$0xf]
        %v4079 = vld [vmem:[#allocation17 + $0x18] sm:$0xf]
        %v4080 = vld [vmem:[#allocation17 + $0x1c] sm:$0xf]
        %v4081 = vld [vmem:[#allocation17 + $0x20] sm:$0xf]
        %v4082 = vld [vmem:[#allocation17 + $0x24] sm:$0xf]
        %v4083 = vld [vmem:[#allocation17 + $0x28] sm:$0xf]
        %v4084 = vld [vmem:[#allocation17 + $0x2c] sm:$0xf]
        %v4085 = vld [vmem:[#allocation17 + $0x30] sm:$0xf]
        %v4086 = vld [vmem:[#allocation17 + $0x34] sm:$0xf]
        %v4087 = vld [vmem:[#allocation17 + $0x38] sm:$0xf]
        %v4088 = vld [vmem:[#allocation17 + $0x3c] sm:$0xf]
        %v4089 = vld [vmem:[#allocation17 + $0x40] sm:$0xf]
        %v4090 = vld [vmem:[#allocation17 + $0x44] sm:$0xf]
        %v4091 = vld [vmem:[#allocation17 + $0x48] sm:$0xf]
        %v4092 = vld [vmem:[#allocation17 + $0x4c] sm:$0xf]
        %v4093 = vld [vmem:[#allocation17 + $0x50] sm:$0xf]
        %v4094 = vld [vmem:[#allocation17 + $0x54] sm:$0xf]
        %v4095 = vld [vmem:[#allocation17 + $0x58] sm:$0xf]
        %v4096 = vld [vmem:[#allocation17 + $0x5c] sm:$0xf]
        %v4097 = vld [vmem:[#allocation17 + $0x60] sm:$0xf]
        %v4098 = vld [vmem:[#allocation17 + $0x64] sm:$0xf]
        %v4099 = vld [vmem:[#allocation17 + $0x68] sm:$0xf]
        %v4100 = vld [vmem:[#allocation17 + $0x6c] sm:$0xf]
        %v4101 = vld [vmem:[#allocation17 + $0x70] sm:$0xf]
        %v4102 = vld [vmem:[#allocation17 + $0x74] sm:$0xf]
        %v4103 = vld [vmem:[#allocation17 + $0x78] sm:$0xf]
        %v4104 = vld [vmem:[#allocation17 + $0x7c] sm:$0xf]
        %v4105 = vld [vmem:[#allocation17 + $0x80] sm:$0xf]
        %v4106 = vld [vmem:[#allocation17 + $0x84] sm:$0xf]
        %v4107 = vld [vmem:[#allocation17 + $0x88] sm:$0xf]
        %v4108 = vld [vmem:[#allocation17 + $0x8c] sm:$0xf]
        %v4109 = vld [vmem:[#allocation17 + $0x90] sm:$0xf]
        %v4110 = vld [vmem:[#allocation17 + $0x94] sm:$0xf]
        %v4111 = vld [vmem:[#allocation17 + $0x98] sm:$0xf]
        %v4112 = vld [vmem:[#allocation17 + $0x9c] sm:$0xf]
        %v4113 = vld [vmem:[#allocation17 + $0xa0] sm:$0xf]
        %v4114 = vld [vmem:[#allocation17 + $0xa4] sm:$0xf]
        %v4115 = vld [vmem:[#allocation17 + $0xa8] sm:$0xf]
        %v4116 = vld [vmem:[#allocation17 + $0xac] sm:$0xf]
        %v4117 = vld [vmem:[#allocation17 + $0xb0] sm:$0xf]
        %v4118 = vld [vmem:[#allocation17 + $0xb4] sm:$0xf]
        %v4119 = vld [vmem:[#allocation17 + $0xb8] sm:$0xf]
        %v4120 = vld [vmem:[#allocation17 + $0xbc] sm:$0xf]
        %v4121 = vld [vmem:[#allocation17 + $0xc0] sm:$0xf]
        %v4122 = vld [vmem:[#allocation17 + $0xc4] sm:$0xf]
        %v4123 = vld [vmem:[#allocation17 + $0xc8] sm:$0xf]
        %v4124 = vld [vmem:[#allocation17 + $0xcc] sm:$0xf]
        %v4125 = vld [vmem:[#allocation17 + $0xd0] sm:$0xf]
        %v4126 = vld [vmem:[#allocation17 + $0xd4] sm:$0xf]
        %v4127 = vld [vmem:[#allocation17 + $0xd8] sm:$0xf]
        %v4128 = vld [vmem:[#allocation17 + $0xdc] sm:$0xf]
        %v4129 = vld [vmem:[#allocation17 + $0xe0] sm:$0xf]
        %v4130 = vld [vmem:[#allocation17 + $0xe4] sm:$0xf]
        %v4131 = vld [vmem:[#allocation17 + $0xe8] sm:$0xf]
        %v4132 = vld [vmem:[#allocation17 + $0xec] sm:$0xf]
        %v4133 = vld [vmem:[#allocation17 + $0xf0] sm:$0xf]
        %v4134 = vld [vmem:[#allocation17 + $0xf4] sm:$0xf]
        %v4135 = vld [vmem:[#allocation17 + $0xf8] sm:$0xf]
        %v4136 = vld [vmem:[#allocation17 + $0xfc] sm:$0xf]
        %v4137 = vld [vmem:[#allocation19] sm:$0x1]
        %v4139 = vlaneseq
        %v4140 = vshrl.u32 %v4139, 7
        %v4141 = vsub.s32 0, %v4140
        %v4142 = vrot.slane %v4137, %v4141
        %v4208 = vunpack.c.l.b16 %v4073
        %v4209 = vunpack.c.l.b16 %v4074
        %v4210 = vunpack.c.l.b16 %v4075
        %v4211 = vunpack.c.l.b16 %v4076
        %v4212 = vunpack.c.l.b16 %v4077
        %v4213 = vunpack.c.l.b16 %v4078
        %v4214 = vunpack.c.l.b16 %v4079
        %v4215 = vunpack.c.l.b16 %v4080
        %v4216 = vunpack.c.l.b16 %v4081
        %v4217 = vunpack.c.l.b16 %v4082
        %v4218 = vunpack.c.l.b16 %v4083
        %v4219 = vunpack.c.l.b16 %v4084
        %v4220 = vunpack.c.l.b16 %v4085
        %v4221 = vunpack.c.l.b16 %v4086
        %v4222 = vunpack.c.l.b16 %v4087
        %v4223 = vunpack.c.l.b16 %v4088
        %v4224 = vunpack.c.l.b16 %v4089
        %v4225 = vunpack.c.l.b16 %v4090
        %v4226 = vunpack.c.l.b16 %v4091
        %v4227 = vunpack.c.l.b16 %v4092
        %v4228 = vunpack.c.l.b16 %v4093
        %v4229 = vunpack.c.l.b16 %v4094
        %v4230 = vunpack.c.l.b16 %v4095
        %v4231 = vunpack.c.l.b16 %v4096
        %v4232 = vunpack.c.l.b16 %v4097
        %v4233 = vunpack.c.l.b16 %v4098
        %v4234 = vunpack.c.l.b16 %v4099
        %v4235 = vunpack.c.l.b16 %v4100
        %v4236 = vunpack.c.l.b16 %v4101
        %v4237 = vunpack.c.l.b16 %v4102
        %v4238 = vunpack.c.l.b16 %v4103
        %v4239 = vunpack.c.l.b16 %v4104
        %v4240 = vunpack.c.l.b16 %v4105
        %v4241 = vunpack.c.l.b16 %v4106
        %v4242 = vunpack.c.l.b16 %v4107
        %v4243 = vunpack.c.l.b16 %v4108
        %v4244 = vunpack.c.l.b16 %v4109
        %v4245 = vunpack.c.l.b16 %v4110
        %v4246 = vunpack.c.l.b16 %v4111
        %v4247 = vunpack.c.l.b16 %v4112
        %v4248 = vunpack.c.l.b16 %v4113
        %v4249 = vunpack.c.l.b16 %v4114
        %v4250 = vunpack.c.l.b16 %v4115
        %v4251 = vunpack.c.l.b16 %v4116
        %v4252 = vunpack.c.l.b16 %v4117
        %v4253 = vunpack.c.l.b16 %v4118
        %v4254 = vunpack.c.l.b16 %v4119
        %v4255 = vunpack.c.l.b16 %v4120
        %v4256 = vunpack.c.l.b16 %v4121
        %v4257 = vunpack.c.l.b16 %v4122
        %v4258 = vunpack.c.l.b16 %v4123
        %v4259 = vunpack.c.l.b16 %v4124
        %v4260 = vunpack.c.l.b16 %v4125
        %v4261 = vunpack.c.l.b16 %v4126
        %v4262 = vunpack.c.l.b16 %v4127
        %v4263 = vunpack.c.l.b16 %v4128
        %v4264 = vunpack.c.l.b16 %v4129
        %v4265 = vunpack.c.l.b16 %v4130
        %v4266 = vunpack.c.l.b16 %v4131
        %v4267 = vunpack.c.l.b16 %v4132
        %v4268 = vunpack.c.l.b16 %v4133
        %v4269 = vunpack.c.l.b16 %v4134
        %v4270 = vunpack.c.l.b16 %v4135
        %v4271 = vunpack.c.l.b16 %v4136
        %v4272 = vpack.c.b16 %v4209, %v4208
        %v4273 = vpack.c.b16 %v4211, %v4210
        %v4274 = vpack.c.b16 %v4213, %v4212
        %v4275 = vpack.c.b16 %v4215, %v4214
        %v4276 = vpack.c.b16 %v4217, %v4216
        %v4277 = vpack.c.b16 %v4219, %v4218
        %v4278 = vpack.c.b16 %v4221, %v4220
        %v4279 = vpack.c.b16 %v4223, %v4222
        %v4280 = vpack.c.b16 %v4225, %v4224
        %v4281 = vpack.c.b16 %v4227, %v4226
        %v4282 = vpack.c.b16 %v4229, %v4228
        %v4283 = vpack.c.b16 %v4231, %v4230
        %v4284 = vpack.c.b16 %v4233, %v4232
        %v4285 = vpack.c.b16 %v4235, %v4234
        %v4286 = vpack.c.b16 %v4237, %v4236
        %v4287 = vpack.c.b16 %v4239, %v4238
        %v4288 = vpack.c.b16 %v4241, %v4240
        %v4289 = vpack.c.b16 %v4243, %v4242
        %v4290 = vpack.c.b16 %v4245, %v4244
        %v4291 = vpack.c.b16 %v4247, %v4246
        %v4292 = vpack.c.b16 %v4249, %v4248
        %v4293 = vpack.c.b16 %v4251, %v4250
        %v4294 = vpack.c.b16 %v4253, %v4252
        %v4295 = vpack.c.b16 %v4255, %v4254
        %v4296 = vpack.c.b16 %v4257, %v4256
        %v4297 = vpack.c.b16 %v4259, %v4258
        %v4298 = vpack.c.b16 %v4261, %v4260
        %v4299 = vpack.c.b16 %v4263, %v4262
        %v4300 = vpack.c.b16 %v4265, %v4264
        %v4301 = vpack.c.b16 %v4267, %v4266
        %v4302 = vpack.c.b16 %v4269, %v4268
        %v4303 = vpack.c.b16 %v4271, %v4270
        %4336 = vmatprep.subr.bf16.mxu0 0
        %4337 = vmatpush1.bf16.msra.mxu0 %v4272
        %4338 = vmatprep.subr.bf16.mxu0 0
        %4339 = vmatpush1.bf16.msra.mxu0 %v4273
        %4340 = vmatprep.subr.bf16.mxu0 0
        %4341 = vmatpush1.bf16.msra.mxu0 %v4274
        %4342 = vmatprep.subr.bf16.mxu0 0
        %4343 = vmatpush1.bf16.msra.mxu0 %v4275
        %4344 = vmatprep.subr.bf16.mxu0 0
        %4345 = vmatpush1.bf16.msra.mxu0 %v4276
        %4346 = vmatprep.subr.bf16.mxu0 0
        %4347 = vmatpush1.bf16.msra.mxu0 %v4277
        %4348 = vmatprep.subr.bf16.mxu0 0
        %4349 = vmatpush1.bf16.msra.mxu0 %v4278
        %4350 = vmatprep.subr.bf16.mxu0 0
        %4351 = vmatpush1.bf16.msra.mxu0 %v4279
        %4352 = vmatprep.subr.bf16.mxu0 0
        %4353 = vmatpush1.bf16.msra.mxu0 %v4280
        %4354 = vmatprep.subr.bf16.mxu0 0
        %4355 = vmatpush1.bf16.msra.mxu0 %v4281
        %4356 = vmatprep.subr.bf16.mxu0 0
        %4357 = vmatpush1.bf16.msra.mxu0 %v4282
        %4358 = vmatprep.subr.bf16.mxu0 0
        %4359 = vmatpush1.bf16.msra.mxu0 %v4283
        %4360 = vmatprep.subr.bf16.mxu0 0
        %4361 = vmatpush1.bf16.msra.mxu0 %v4284
        %4362 = vmatprep.subr.bf16.mxu0 0
        %4363 = vmatpush1.bf16.msra.mxu0 %v4285
        %4364 = vmatprep.subr.bf16.mxu0 0
        %4365 = vmatpush1.bf16.msra.mxu0 %v4286
        %4366 = vmatprep.subr.bf16.mxu0 0
        %4367 = vmatpush1.bf16.msra.mxu0 %v4287
        %4368 = vmatprep.mubr.bf16.mxu0 %v4070
        %4369 = vmatmul.mubr.bf16.gmra.mrb[0].mxu0 %v4069
        %v4370 = vpop.f32.mrb[0].mxu0
        %v4371 = vadd.f32 %v4142, %v4370
        %v4372 = vpop.f32.mrb[0].mxu0
        %v4373 = vpop.f32.mrb[0].mxu0
        %v4374 = vpop.f32.mrb[0].mxu0
        %4375 = vdwg.mxu0
        %4376 = vmatprep.subr.bf16.mxu0 0
        %4377 = vmatpush1.bf16.msra.mxu0 %v4288
        %4378 = vmatprep.subr.bf16.mxu0 0
        %4379 = vmatpush1.bf16.msra.mxu0 %v4289
        %4380 = vmatprep.subr.bf16.mxu0 0
        %4381 = vmatpush1.bf16.msra.mxu0 %v4290
        %4382 = vmatprep.subr.bf16.mxu0 0
        %4383 = vmatpush1.bf16.msra.mxu0 %v4291
        %4384 = vmatprep.subr.bf16.mxu0 0
        %4385 = vmatpush1.bf16.msra.mxu0 %v4292
        %4386 = vmatprep.subr.bf16.mxu0 0
        %4387 = vmatpush1.bf16.msra.mxu0 %v4293
        %4388 = vmatprep.subr.bf16.mxu0 0
        %4389 = vmatpush1.bf16.msra.mxu0 %v4294
        %4390 = vmatprep.subr.bf16.mxu0 0
        %4391 = vmatpush1.bf16.msra.mxu0 %v4295
        %4392 = vmatprep.subr.bf16.mxu0 0
        %4393 = vmatpush1.bf16.msra.mxu0 %v4296
        %4394 = vmatprep.subr.bf16.mxu0 0
        %4395 = vmatpush1.bf16.msra.mxu0 %v4297
        %4396 = vmatprep.subr.bf16.mxu0 0
        %4397 = vmatpush1.bf16.msra.mxu0 %v4298
        %4398 = vmatprep.subr.bf16.mxu0 0
        %4399 = vmatpush1.bf16.msra.mxu0 %v4299
        %4400 = vmatprep.subr.bf16.mxu0 0
        %4401 = vmatpush1.bf16.msra.mxu0 %v4300
        %4402 = vmatprep.subr.bf16.mxu0 0
        %4403 = vmatpush1.bf16.msra.mxu0 %v4301
        %4404 = vmatprep.subr.bf16.mxu0 0
        %4405 = vmatpush1.bf16.msra.mxu0 %v4302
        %4406 = vmatprep.subr.bf16.mxu0 0
        %4407 = vmatpush1.bf16.msra.mxu0 %v4303
        %4408 = vmatprep.mubr.bf16.mxu0 %v4072
        %4409 = vmatmul.mubr.bf16.gmra.mrb[0].mxu0 %v4071
        %v4410 = vpop.f32.mrb[0].mxu0
        %v4411 = vadd.f32 %v4371, %v4410
        %v4412 = vpop.f32.mrb[0].mxu0
        %v4413 = vpop.f32.mrb[0].mxu0
        %v4414 = vpop.f32.mrb[0].mxu0
        %4415 = vdwg.mxu0
        %v4416 = vadd.f32 %v2117, %v4411
        %v4417 = vld [vmem:[#allocation20] sm:$0x1]
        %v4418 = vld [vmem:[#allocation22] sm:$0x1]
        %4419 = vadd.xlane.f32.xlu0 %v4416
        %v4420 = vpop.xlane.xlu0 %4419
        %v4421 = vmul.f32 %v4420, %v2094
        %v4422 = vsub.f32 %v4416, %v4421
        %v4423 = vmul.f32 %v4422, %v4422
        %4424 = vadd.xlane.f32.xlu0 %v4423
        %v4425 = vpop.xlane.xlu0 %4424
        %v4426 = vmul.f32 %v4425, %v2094
        %v4427 = vadd.f32 %v4426, 1e-05
        %v4428 = vrsqrt.pop %v4427
        %v4429 = vmul.f32 %v4422, %v4428
        %v4431 = vlaneseq
        %v4432 = vshrl.u32 %v4431, 7
        %v4433 = vsub.s32 0, %v4432
        %v4434 = vrot.slane %v4417, %v4433
        %v4436 = vmul.f32 %v4429, %v4434
        %v4438 = vlaneseq
        %v4439 = vshrl.u32 %v4438, 7
        %v4440 = vsub.s32 0, %v4439
        %v4441 = vrot.slane %v4418, %v4440
        %v4443 = vadd.f32 %v4436, %v4441
        %4444 = vst [vmem:[%s1254] sm:$0xff] %v4443
        %s4445 = sand.u32 %s743, 1
        %s4446 = scalar_lea.sflag [#allocation4], %s4445
        %s4447 = sand.u32 %s743, 1
        %s4448 = smul.addr %s4447, 16
        %s4449 = scalar_lea.vmem [#allocation32], %s4448
        %s4450 = sand.u32 %s769, 1
        %s4451 = scalar_lea.sflag [#allocation34], %s4450
        %s4452 = sand.u32 %s769, 1
        %s4453 = smul.addr %s4452, 8
        %s4454 = scalar_lea.vmem [#allocation33], %s4453
        // Predicated region
        $region217: #{tpu_custom_call.1} parent=139 // pred_check
          %p4455 = pneg %p753
        $region218: #{tpu_custom_call.1} parent=139 // pred_check_branch
          %4457 = sbr.rel (%p4455) target = $region220
        $region219: #{tpu_custom_call.1} parent=139 // pred_region
          %s4459 = ssub.s32 256, 256
          %4460 = vsyncadd %s4446, %s4459
          %s4461 = smul.addr %s95, 2
          %s4462 = smul.addr %s4461, 128
          %s4463 = scalar_lea.hbm %s61, %s4462
          %s4464 = sshll.u32 %s4449, 4
          %s4465 = int_to_ptr.vmem [resolvable:$true] %s4464
          %4470 = dma.vmem_to_hbm [thread:$0]  %s4465, 256, %s4463, %s4446, 128, 128, 8
        $region220: #{tpu_custom_call.1} parent=139 // pred_fallthru
          _
        // Predicated region
        $region221: #{tpu_custom_call.1} parent=139 // pred_check
          %p4471 = pneg %p779
        $region222: #{tpu_custom_call.1} parent=139 // pred_check_branch
          %4473 = sbr.rel (%p4471) target = $region224
        $region223: #{tpu_custom_call.1} parent=139 // pred_region
          %s4475 = ssub.s32 128, 128
          %4476 = vsyncadd %s4451, %s4475
          %s4477 = smul.addr %s95, 128
          %s4478 = scalar_lea.hbm %s63, %s4477
          %s4480 = sshll.u32 %s4454, 4
          %s4481 = int_to_ptr.vmem [resolvable:$true] %s4480
          %4483 = dma.vmem_to_hbm [thread:$0]  %s4481, 128, %s4478, %s4451
        $region224: #{tpu_custom_call.1} parent=139 // pred_fallthru
          _
      $region140: #{tpu_custom_call.1} parent=5 // pred_fallthru
        _
      %p4484 = scmp.le.s32.totalorder 2, %s90
      // Predicated region
      $region225: #{tpu_custom_call.1} parent=5 // pred_check
        %p4485 = pneg %p4484
      $region226: #{tpu_custom_call.1} parent=5 // pred_check_branch
        %4487 = sbr.rel (%p4485) target = $region228
      $region227: #{tpu_custom_call.1} parent=5 // pred_region
        %s4488 = ssub.s32 %s90, 2
        // Predicated region
        $region229: #{tpu_custom_call.1} parent=227 // pred_check
          %p4489 = pneg %p759
        $region230: #{tpu_custom_call.1} parent=227 // pred_check_branch
          %4491 = sbr.rel (%p4489) target = $region232
        $region231: #{tpu_custom_call.1} parent=227 // pred_region
          %s4492 = sand.u32 %s744, 1
          %s4493 = scalar_lea.sflag [#allocation4], %s4492
          %s4494 = sand.u32 %s744, 1
          %s4495 = smul.addr %s4494, 16
          %s4496 = scalar_lea.vmem [#allocation32], %s4495
          %4497 = dma.done %s4493, 256
        $region232: #{tpu_custom_call.1} parent=227 // pred_fallthru
          _
        // Predicated region
        $region233: #{tpu_custom_call.1} parent=227 // pred_check
          %p4498 = pneg %p785
        $region234: #{tpu_custom_call.1} parent=227 // pred_check_branch
          %4500 = sbr.rel (%p4498) target = $region236
        $region235: #{tpu_custom_call.1} parent=227 // pred_region
          %s4501 = sand.u32 %s770, 1
          %s4502 = scalar_lea.sflag [#allocation34], %s4501
          %s4503 = sand.u32 %s770, 1
          %s4504 = smul.addr %s4503, 8
          %s4505 = scalar_lea.vmem [#allocation33], %s4504
          %4506 = dma.done %s4502, 128
        $region236: #{tpu_custom_call.1} parent=227 // pred_fallthru
          _
      $region228: #{tpu_custom_call.1} parent=5 // pred_fallthru
        _
    $region6: #{tpu_custom_call.1} parent=1 // loop_footer
      %s94 = sadd.s32 1, %s90
    $region7: #{tpu_custom_call.1} parent=1 // loop_footer_branch
      %89 = sbr.rel target = $region3
    $region8: #{tpu_custom_call.1} parent=1 // loop_exit
      _
    %4507 = vsyncpa [#allocation3], 1
    %s4508 = scalar_lea.sflag [#allocation3], 1
    %4509 = vsyncpa %s4508, 1
    %4510 = vsyncpa [#allocation6], 1
    %s4511 = scalar_lea.sflag [#allocation6], 1
    %4512 = vsyncpa %s4511, 1
    %4513 = vsyncpa [#allocation9], 1
    %4514 = vsyncpa [#allocation12], 1
    %4515 = vsyncpa [#allocation15], 1
    %4516 = vsyncpa [#allocation18], 1
    %4517 = vsyncpa [#allocation21], 1
    %4518 = vsyncpa [#allocation24], 1
    %4519 = vsyncpa [#allocation27], 1
    %4520 = vsyncpa [#allocation30], 1
    %4521 = vsyncpa [#allocation4], 1
    %s4522 = scalar_lea.sflag [#allocation4], 1
    %4523 = vsyncpa %s4522, 1
    %4524 = vsyncpa [#allocation34], 1
    %s4525 = scalar_lea.sflag [#allocation34], 1
    %4526 = vsyncpa %s4525, 1

</llo_original>
